<compile_context>
chip_gen: v7x
topology: tpu7x:2x2x1
jax: 0.10.0
libtpu: 0.0.40
codegen_flags: <defaults>
</compile_context>

<pallas_src>
import jax
import jax.numpy as jnp
from jax.experimental import pallas as pl
from jax.experimental.pallas import tpu as pltpu

PAD_IDX, EOS_IDX, SOS_IDX = 0, 1, 2

# module hyper-parameters (globals of the original file)
EMBED_SIZE = 16
HIDDEN_SIZE = 32
NUM_DIRS = 2          # bidirectional
NUM_LAYERS = 1
DROPOUT = 0.0
HD = HIDDEN_SIZE // NUM_DIRS   # per-direction hidden size


def _lstm_crf_kernel(xin_ref, mask_ref, wihc_ref, bihc_ref,
                     whhf_ref, whhb_ref, woutf_ref, woutb_ref, bout_ref,
                     trans_ref, ohn_ref, trg_ref,
                     out_ref, hf_ref, hb_ref):
    T, B, _ = mask_ref.shape
    HDl = whhf_ref.shape[0]
    G = 4 * HDl
    K = trans_ref.shape[0]

    # ---- hoisted parameter / input loads (read once, reused by all unrolled steps) ----
    whhf = whhf_ref[...]                      # (HD, 4*HD)
    whhb = whhb_ref[...]                      # (HD, 4*HD)
    trans = trans_ref[...]                    # (K, K)
    trans_b = trans[None, :, :]               # hoisted broadcast for the CRF loop
    mask_all = mask_ref[...]                  # (T, B, 1)
    ohn_all = ohn_ref[...]                    # (T, B, K)

    # ---- phase A: fused input projection for BOTH directions: one 128-wide MXU op ----
    # (T*B, I) @ (I, 8*HD) + biases; columns [0:G] = forward gates, [G:2G] = backward.
    gates_in = (jnp.dot(xin_ref[...], wihc_ref[...],
                        preferred_element_type=jnp.float32) + bihc_ref[...])

    def cell(gin, h, c, whh_t):
        g = gin + jnp.dot(h, whh_t, preferred_element_type=jnp.float32)
        i = jax.nn.sigmoid(g[:, 0 * HDl:1 * HDl])
        fg = jax.nn.sigmoid(g[:, 1 * HDl:2 * HDl])
        gg = jnp.tanh(g[:, 2 * HDl:3 * HDl])
        o = jax.nn.sigmoid(g[:, 3 * HDl:4 * HDl])
        c2 = fg * c + i * gg
        return o * jnp.tanh(c2), c2

    zeros_h = jnp.zeros((B, HDl), jnp.float32)
    hF, cF = zeros_h, zeros_h
    hB, cB = zeros_h, zeros_h

    # ---- phase B: interleaved forward/backward LSTM, fully unrolled (T static) ----
    # Two independent dependency chains per step -> MXU/EUP latency overlaps.
    for s in range(T):
        tb = T - 1 - s
        gin_f = gates_in[s * B:(s + 1) * B, 0:G]
        gin_b = gates_in[tb * B:(tb + 1) * B, G:2 * G]
        m_b = mask_all[tb]                    # (B, 1)
        hFn, cFn = cell(gin_f, hF, cF, whhf)
        hBn, cBn = cell(gin_b, hB, cB, whhb)
        hF, cF = hFn, cFn
        # backward direction: mask-gated state == pack_padded_sequence semantics
        hB = m_b * hBn + (1.0 - m_b) * hB
        cB = m_b * cBn + (1.0 - m_b) * cB
        hf_ref[s * B:(s + 1) * B, :] = hF
        hb_ref[tb * B:(tb + 1) * B, :] = hB   # emissions are masked later; no double-mask

    # ---- phase C: batched emission projection, off the recurrent critical path ----
    y_all = (jnp.dot(hf_ref[...], woutf_ref[...], preferred_element_type=jnp.float32)
             + jnp.dot(hb_ref[...], woutb_ref[...], preferred_element_type=jnp.float32)
             + bout_ref[...])                 # (T*B, K)

    # ---- phase D: CRF forward recursion + gold emission score (no matmuls) ----
    col = jax.lax.broadcasted_iota(jnp.int32, (B, K), 1)
    alpha = jnp.where(col == SOS_IDX, 0.0, -10000.0).astype(jnp.float32)
    gold = jnp.zeros((B, 1), jnp.float32)
    for t in range(T):
        m = mask_all[t]                       # (B, 1)
        y_t = y_all[t * B:(t + 1) * B, :] * m # (B, K), zero at padded steps
        # alpha'[b,i] = y_t[b,i] + LSE_j(alpha[b,j] + trans[i,j])
        scores = alpha[:, None, :] + trans_b  # (B, K, K)
        mx = jnp.max(scores, axis=-1)
        lse = mx + jnp.log(jnp.sum(jnp.exp(scores - mx[..., None]), axis=-1))
        alpha = (y_t + lse) * m + alpha * (1.0 - m)
        # gold emission score (one-hot contraction; transition part is in the wrapper)
        gold = gold + jnp.sum(y_t * ohn_all[t], axis=-1, keepdims=True)

    mx = jnp.max(alpha, axis=-1, keepdims=True)
    Z = mx + jnp.log(jnp.sum(jnp.exp(alpha - mx), axis=-1, keepdims=True))
    out_ref[...] = Z - gold - trg_ref[...]    # (B, 1) negative log-likelihood


def lstm_crf_forward(params, x, f, y0):
    """Equivalent of lstm_crf.forward(x, f, y0) = crf.forward(y,mask) - crf.score(y,y0,mask)."""
    B, T = x.shape
    K = params["trans"].shape[0]
    I = EMBED_SIZE + 1

    mask = (x > 0).astype(jnp.float32)                          # (B, T)
    emb = params["embed"][x]                                    # (B, T, E) embedding gather (glue)
    f1 = f[:, 0].astype(jnp.float32)[..., None]                 # (B, T, 1)
    xin = jnp.concatenate([emb, f1], axis=-1)                   # (B, T, I)
    xin_flat = jnp.transpose(xin, (1, 0, 2)).reshape(T * B, I).astype(jnp.float32)
    mask_tb = mask.T[..., None]                                 # (T, B, 1)

    y0p = jnp.concatenate([jnp.full((B, 1), SOS_IDX, y0.dtype), y0], axis=1)   # (B, T+1)
    ohn = jnp.transpose(jax.nn.one_hot(y0p[:, 1:], K, dtype=jnp.float32), (1, 0, 2))  # (T,B,K)
    # gold TRANSITION score: pure gather, independent of the LSTM -> computed in the wrapper
    tr_gold = jnp.sum(params["trans"][y0p[:, 1:], y0p[:, :-1]] * mask,
                      axis=1, keepdims=True)                    # (B, 1)

    # fused input-projection weights / biases for both directions
    wih_cat = jnp.concatenate([params["W_ih_f"].T, params["W_ih_b"].T], axis=1)   # (I, 8*HD)
    b_cat = jnp.concatenate([params["b_ih_f"] + params["b_hh_f"],
                             params["b_ih_b"] + params["b_hh_b"]])[None, :]       # (1, 8*HD)
    wout_T = params["W_out"].T                                  # (2*HD, K)
    woutf, woutb = wout_T[:HD], wout_T[HD:]
    bout = params["b_out"][None, :]

    flops = int(2 * T * B * I * 8 * HD          # fused input projection
                + T * 2 * 2 * B * HD * 4 * HD   # recurrent matmuls (2 dirs)
                + 2 * 2 * T * B * HD * K        # emission projection
                + 6 * T * B * K * K)            # CRF adds / max / sum
    transcendentals = int(T * B * (10 * HD + K * K + 2 * K))
    bytes_in = 4 * (T * B * I + T * B + I * 8 * HD + 8 * HD
                    + 2 * HD * 4 * HD + 2 * HD * K + K + K * K + T * B * K + B)
    cost = pl.CostEstimate(flops=flops, transcendentals=transcendentals,
                           bytes_accessed=int(bytes_in + 4 * B))

    # NOTE: at B=2 a batch grid is pure overhead; once B scales, add a batch-tile
    # grid with dimension_semantics=("parallel",) to use both v7x TensorCores.
    out = pl.pallas_call(
        _lstm_crf_kernel,
        out_shape=jax.ShapeDtypeStruct((B, 1), jnp.float32),
        scratch_shapes=[pltpu.VMEM((T * B, HD), jnp.float32),   # forward hidden states
                        pltpu.VMEM((T * B, HD), jnp.float32)],  # backward hidden states
        cost_estimate=cost,
    )(xin_flat, mask_tb, wih_cat, b_cat,
      params["W_hh_f"].T, params["W_hh_b"].T,
      woutf, woutb, bout,
      params["trans"], ohn, tr_gold)
    return out[:, 0]


def reference_forward(params, x, f, y0):
    """Pure-JAX reference mirroring the PyTorch forward pass."""
    B, T = x.shape
    K = params["trans"].shape[0]
    mask = (x > 0).astype(jnp.float32)
    emb = params["embed"][x]
    f1 = f[:, 0].astype(jnp.float32)[..., None]
    xin = jnp.concatenate([emb, f1], axis=-1)

    def cell(xt, h, c, wih, whh, b):
        g = xt @ wih.T + h @ whh.T + b
        i = jax.nn.sigmoid(g[:, :HD]); fg = jax.nn.sigmoid(g[:, HD:2 * HD])
        gg = jnp.tanh(g[:, 2 * HD:3 * HD]); o = jax.nn.sigmoid(g[:, 3 * HD:])
        c = fg * c + i * gg
        return o * jnp.tanh(c), c

    bf = params["b_ih_f"] + params["b_hh_f"]
    bb = params["b_ih_b"] + params["b_hh_b"]
    h = c = jnp.zeros((B, HD)); hf = []
    for t in range(T):
        h, c = cell(xin[:, t], h, c, params["W_ih_f"], params["W_hh_f"], bf)
        hf.append(h)
    h = c = jnp.zeros((B, HD)); hb = [None] * T
    for t in range(T - 1, -1, -1):
        m = mask[:, t][:, None]
        hn, cn = cell(xin[:, t], h, c, params["W_ih_b"], params["W_hh_b"], bb)
        h = m * hn + (1 - m) * h
        c = m * cn + (1 - m) * c
        hb[t] = h * m
    hid = jnp.stack([jnp.concatenate([hf[t], hb[t]], -1) for t in range(T)], axis=1)
    y = hid @ params["W_out"].T + params["b_out"]
    y = y * mask[..., None]

    trans = params["trans"]
    alpha = jnp.full((B, K), -10000.0).at[:, SOS_IDX].set(0.0)
    for t in range(T):
        m = mask[:, t][:, None]
        sc = alpha[:, None, :] + y[:, t][:, :, None] + trans[None]
        mx = sc.max(-1)
        na = mx + jnp.log(jnp.exp(sc - mx[..., None]).sum(-1))
        alpha = na * m + alpha * (1 - m)
    mx = alpha.max(-1)
    Z = mx + jnp.log(jnp.exp(alpha - mx[:, None]).sum(-1))

    y0p = jnp.concatenate([jnp.full((B, 1), SOS_IDX, y0.dtype), y0], 1)
    gold = jnp.zeros((B,))
    for t in range(T):
        m = mask[:, t]
        emit = y[jnp.arange(B), t, y0p[:, t + 1]]
        tr = trans[y0p[:, t + 1], y0p[:, t]] * m
        gold = gold + emit + tr
    return Z - gold


# TODO(synk): crf.decode (Viterbi backtrace producing ragged Python lists) is host-side
# control flow and is not implemented as a Pallas kernel; only the forward NLL is.

if __name__ == "__main__":
    B, T = 2, 8
    vocab, K = 20, 8
    I = EMBED_SIZE + 1

    key = jax.random.PRNGKey(0)
    ks = jax.random.split(key, 16)

    def rn(k, shape, s=0.1):
        return (jax.random.normal(k, shape) * s).astype(jnp.float32)

    params = {
        "embed": rn(ks[0], (vocab, EMBED_SIZE)).at[PAD_IDX].set(0.0),  # padding_idx row = 0
        "W_ih_f": rn(ks[1], (4 * HD, I)), "W_hh_f": rn(ks[2], (4 * HD, HD)),
        "b_ih_f": rn(ks[3], (4 * HD,)), "b_hh_f": rn(ks[4], (4 * HD,)),
        "W_ih_b": rn(ks[5], (4 * HD, I)), "W_hh_b": rn(ks[6], (4 * HD, HD)),
        "b_ih_b": rn(ks[7], (4 * HD,)), "b_hh_b": rn(ks[8], (4 * HD,)),
        "W_out": rn(ks[9], (K, HIDDEN_SIZE)), "b_out": rn(ks[10], (K,)),
    }
    trans = jax.random.normal(ks[11], (K, K)).astype(jnp.float32)
    trans = trans.at[SOS_IDX, :].set(-10000.0)
    trans = trans.at[:, EOS_IDX].set(-10000.0)
    trans = trans.at[:, PAD_IDX].set(-10000.0)
    trans = trans.at[PAD_IDX, :].set(-10000.0)
    trans = trans.at[PAD_IDX, EOS_IDX].set(0.0)
    trans = trans.at[PAD_IDX, PAD_IDX].set(0.0)
    params["trans"] = trans

    # trailing-padded token ids, lengths sorted descending (pack_padded contract)
    lengths = jnp.array([8, 5], dtype=jnp.int32)
    x = jax.random.randint(ks[12], (B, T), 1, vocab, dtype=jnp.int32)
    x = jnp.where(jnp.arange(T)[None, :] < lengths[:, None], x, 0)
    fx = jax.random.normal(ks[13], (B, 1, T)).astype(jnp.float32)
    y0 = jax.random.randint(ks[14], (B, T), 3, K, dtype=jnp.int32)   # gold tags

    out = jax.jit(lstm_crf_forward)(params, x, fx, y0)
    out = jax.block_until_ready(out)

    ref = reference_forward(params, x, fx, y0)
    assert out.shape == (B,)
    assert jnp.allclose(out, ref, rtol=2e-2, atol=2e-1), (out, ref)
    print("KERNEL_OK")
</pallas_src>

<mosaic_0001>
module attributes {stable_mosaic.version = 11 : i64} {
  func.func @_lstm_crf_kernel(%arg0: memref<16x17xf32, #tpu.memory_space<vmem>>, %arg1: memref<8x2x1xf32, #tpu.memory_space<vmem>>, %arg2: memref<17x128xf32, #tpu.memory_space<vmem>>, %arg3: memref<1x128xf32, #tpu.memory_space<vmem>>, %arg4: memref<16x64xf32, #tpu.memory_space<vmem>>, %arg5: memref<16x64xf32, #tpu.memory_space<vmem>>, %arg6: memref<16x8xf32, #tpu.memory_space<vmem>>, %arg7: memref<16x8xf32, #tpu.memory_space<vmem>>, %arg8: memref<1x8xf32, #tpu.memory_space<vmem>>, %arg9: memref<8x8xf32, #tpu.memory_space<vmem>>, %arg10: memref<8x2x8xf32, #tpu.memory_space<vmem>>, %arg11: memref<2x1xf32, #tpu.memory_space<vmem>>, %arg12: memref<2x1xf32, #tpu.memory_space<vmem>>, %arg13: memref<16x16xf32, #tpu.memory_space<vmem>>, %arg14: memref<16x16xf32, #tpu.memory_space<vmem>>) attributes {dimension_semantics = [], scalar_prefetch = 0 : i64, scratch_operands = 2 : i64, tpu.core_type = #tpu.core_type<tc>} {
    %c0 = arith.constant 0 : index
    %c0_0 = arith.constant 0 : index
    %0 = vector.load %arg4[%c0, %c0_0] : memref<16x64xf32, #tpu.memory_space<vmem>>, vector<16x64xf32>
    %c0_1 = arith.constant 0 : index
    %c0_2 = arith.constant 0 : index
    %1 = vector.load %arg5[%c0_1, %c0_2] : memref<16x64xf32, #tpu.memory_space<vmem>>, vector<16x64xf32>
    %c0_3 = arith.constant 0 : index
    %c0_4 = arith.constant 0 : index
    %2 = vector.load %arg9[%c0_3, %c0_4] : memref<8x8xf32, #tpu.memory_space<vmem>>, vector<8x8xf32>
    %3 = vector.shape_cast %2 : vector<8x8xf32> to vector<1x8x8xf32>
    %c0_5 = arith.constant 0 : index
    %c0_6 = arith.constant 0 : index
    %c0_7 = arith.constant 0 : index
    %4 = vector.load %arg1[%c0_5, %c0_6, %c0_7] : memref<8x2x1xf32, #tpu.memory_space<vmem>>, vector<8x2x1xf32>
    %c0_8 = arith.constant 0 : index
    %c0_9 = arith.constant 0 : index
    %c0_10 = arith.constant 0 : index
    %5 = vector.load %arg10[%c0_8, %c0_9, %c0_10] : memref<8x2x8xf32, #tpu.memory_space<vmem>>, vector<8x2x8xf32>
    %c0_11 = arith.constant 0 : index
    %c0_12 = arith.constant 0 : index
    %6 = vector.load %arg0[%c0_11, %c0_12] : memref<16x17xf32, #tpu.memory_space<vmem>>, vector<16x17xf32>
    %c0_13 = arith.constant 0 : index
    %c0_14 = arith.constant 0 : index
    %7 = vector.load %arg2[%c0_13, %c0_14] : memref<17x128xf32, #tpu.memory_space<vmem>>, vector<17x128xf32>
    %cst = arith.constant dense<0.000000e+00> : vector<16x128xf32>
    %8 = tpu.matmul %6, %7, %cst {dimension_numbers = #tpu.dot_dimension_numbers<[1], [0], [0], [1], [0, 0, 1, 1], [], []>} : vector<16x17xf32>, vector<17x128xf32>, vector<16x128xf32> -> vector<16x128xf32>
    %c0_15 = arith.constant 0 : index
    %c0_16 = arith.constant 0 : index
    %9 = vector.load %arg3[%c0_15, %c0_16] : memref<1x128xf32, #tpu.memory_space<vmem>>, vector<1x128xf32>
    %10 = vector.broadcast %9 : vector<1x128xf32> to vector<16x128xf32>
    %11 = arith.addf %8, %10 : vector<16x128xf32>
    %cst_17 = arith.constant 0.000000e+00 : f32
    %12 = vector.broadcast %cst_17 : f32 to vector<2x16xf32>
    %13 = vector.extract_strided_slice %11 {offsets = [0, 0], sizes = [2, 64], strides = [1, 1]} : vector<16x128xf32> to vector<2x64xf32>
    %14 = vector.extract_strided_slice %11 {offsets = [14, 64], sizes = [2, 64], strides = [1, 1]} : vector<16x128xf32> to vector<2x64xf32>
    %15 = vector.extract_strided_slice %4 {offsets = [7, 0, 0], sizes = [1, 2, 1], strides = [1, 1, 1]} : vector<8x2x1xf32> to vector<1x2x1xf32>
    %16 = vector.shape_cast %15 : vector<1x2x1xf32> to vector<2x1xf32>
    %cst_18 = arith.constant dense<0.000000e+00> : vector<2x64xf32>
    %17 = tpu.matmul %12, %0, %cst_18 {dimension_numbers = #tpu.dot_dimension_numbers<[1], [0], [0], [1], [0, 0, 1, 1], [], []>} : vector<2x16xf32>, vector<16x64xf32>, vector<2x64xf32> -> vector<2x64xf32>
    %18 = arith.addf %13, %17 : vector<2x64xf32>
    %19 = vector.extract_strided_slice %18 {offsets = [0, 0], sizes = [2, 16], strides = [1, 1]} : vector<2x64xf32> to vector<2x16xf32>
    %20 = arith.negf %19 : vector<2x16xf32>
    %21 = math.exp %20 : vector<2x16xf32>
    %cst_19 = arith.constant 1.000000e+00 : f32
    %22 = vector.broadcast %cst_19 : f32 to vector<2x16xf32>
    %23 = arith.addf %22, %21 : vector<2x16xf32>
    %24 = arith.divf %22, %23 : vector<2x16xf32>
    %25 = vector.extract_strided_slice %18 {offsets = [0, 16], sizes = [2, 16], strides = [1, 1]} : vector<2x64xf32> to vector<2x16xf32>
    %26 = arith.negf %25 : vector<2x16xf32>
    %27 = math.exp %26 : vector<2x16xf32>
    %cst_20 = arith.constant 1.000000e+00 : f32
    %28 = vector.broadcast %cst_20 : f32 to vector<2x16xf32>
    %29 = arith.addf %28, %27 : vector<2x16xf32>
    %30 = arith.divf %28, %29 : vector<2x16xf32>
    %31 = vector.extract_strided_slice %18 {offsets = [0, 32], sizes = [2, 16], strides = [1, 1]} : vector<2x64xf32> to vector<2x16xf32>
    %32 = math.tanh %31 : vector<2x16xf32>
    %33 = vector.extract_strided_slice %18 {offsets = [0, 48], sizes = [2, 16], strides = [1, 1]} : vector<2x64xf32> to vector<2x16xf32>
    %34 = arith.negf %33 : vector<2x16xf32>
    %35 = math.exp %34 : vector<2x16xf32>
    %cst_21 = arith.constant 1.000000e+00 : f32
    %36 = vector.broadcast %cst_21 : f32 to vector<2x16xf32>
    %37 = arith.addf %36, %35 : vector<2x16xf32>
    %38 = arith.divf %36, %37 : vector<2x16xf32>
    %39 = arith.mulf %30, %12 : vector<2x16xf32>
    %40 = arith.mulf %24, %32 : vector<2x16xf32>
    %41 = arith.addf %39, %40 : vector<2x16xf32>
    %42 = math.tanh %41 : vector<2x16xf32>
    %43 = arith.mulf %38, %42 : vector<2x16xf32>
    %cst_22 = arith.constant dense<0.000000e+00> : vector<2x64xf32>
    %44 = tpu.matmul %12, %1, %cst_22 {dimension_numbers = #tpu.dot_dimension_numbers<[1], [0], [0], [1], [0, 0, 1, 1], [], []>} : vector<2x16xf32>, vector<16x64xf32>, vector<2x64xf32> -> vector<2x64xf32>
    %45 = arith.addf %14, %44 : vector<2x64xf32>
    %46 = vector.extract_strided_slice %45 {offsets = [0, 0], sizes = [2, 16], strides = [1, 1]} : vector<2x64xf32> to vector<2x16xf32>
    %47 = arith.negf %46 : vector<2x16xf32>
    %48 = math.exp %47 : vector<2x16xf32>
    %cst_23 = arith.constant 1.000000e+00 : f32
    %49 = vector.broadcast %cst_23 : f32 to vector<2x16xf32>
    %50 = arith.addf %49, %48 : vector<2x16xf32>
    %51 = arith.divf %49, %50 : vector<2x16xf32>
    %52 = vector.extract_strided_slice %45 {offsets = [0, 16], sizes = [2, 16], strides = [1, 1]} : vector<2x64xf32> to vector<2x16xf32>
    %53 = arith.negf %52 : vector<2x16xf32>
    %54 = math.exp %53 : vector<2x16xf32>
    %cst_24 = arith.constant 1.000000e+00 : f32
    %55 = vector.broadcast %cst_24 : f32 to vector<2x16xf32>
    %56 = arith.addf %55, %54 : vector<2x16xf32>
    %57 = arith.divf %55, %56 : vector<2x16xf32>
    %58 = vector.extract_strided_slice %45 {offsets = [0, 32], sizes = [2, 16], strides = [1, 1]} : vector<2x64xf32> to vector<2x16xf32>
    %59 = math.tanh %58 : vector<2x16xf32>
    %60 = vector.extract_strided_slice %45 {offsets = [0, 48], sizes = [2, 16], strides = [1, 1]} : vector<2x64xf32> to vector<2x16xf32>
    %61 = arith.negf %60 : vector<2x16xf32>
    %62 = math.exp %61 : vector<2x16xf32>
    %cst_25 = arith.constant 1.000000e+00 : f32
    %63 = vector.broadcast %cst_25 : f32 to vector<2x16xf32>
    %64 = arith.addf %63, %62 : vector<2x16xf32>
    %65 = arith.divf %63, %64 : vector<2x16xf32>
    %66 = arith.mulf %57, %12 : vector<2x16xf32>
    %67 = arith.mulf %51, %59 : vector<2x16xf32>
    %68 = arith.addf %66, %67 : vector<2x16xf32>
    %69 = math.tanh %68 : vector<2x16xf32>
    %70 = arith.mulf %65, %69 : vector<2x16xf32>
    %71 = vector.broadcast %16 : vector<2x1xf32> to vector<2x16xf32>
    %72 = arith.mulf %71, %70 : vector<2x16xf32>
    %cst_26 = arith.constant 1.000000e+00 : f32
    %73 = vector.broadcast %cst_26 : f32 to vector<2x1xf32>
    %74 = arith.subf %73, %16 : vector<2x1xf32>
    %75 = vector.broadcast %74 : vector<2x1xf32> to vector<2x16xf32>
    %76 = arith.mulf %75, %12 : vector<2x16xf32>
    %77 = arith.addf %72, %76 : vector<2x16xf32>
    %78 = vector.broadcast %16 : vector<2x1xf32> to vector<2x16xf32>
    %79 = arith.mulf %78, %68 : vector<2x16xf32>
    %cst_27 = arith.constant 1.000000e+00 : f32
    %80 = vector.broadcast %cst_27 : f32 to vector<2x1xf32>
    %81 = arith.subf %80, %16 : vector<2x1xf32>
    %82 = vector.broadcast %81 : vector<2x1xf32> to vector<2x16xf32>
    %83 = arith.mulf %82, %12 : vector<2x16xf32>
    %84 = arith.addf %79, %83 : vector<2x16xf32>
    %c0_28 = arith.constant 0 : index
    %c0_29 = arith.constant 0 : index
    %85 = vector.load %arg13[%c0_28, %c0_29] : memref<16x16xf32, #tpu.memory_space<vmem>>, vector<2x16xf32>
    tpu.vector_store %arg13[%c0_28, %c0_29], %43 {strides = array<i32>} : memref<16x16xf32, #tpu.memory_space<vmem>>, vector<2x16xf32>,
    %c14 = arith.constant 14 : index
    %c0_30 = arith.constant 0 : index
    %86 = vector.load %arg14[%c14, %c0_30] : memref<16x16xf32, #tpu.memory_space<vmem>>, vector<2x16xf32>
    tpu.vector_store %arg14[%c14, %c0_30], %77 {strides = array<i32>} : memref<16x16xf32, #tpu.memory_space<vmem>>, vector<2x16xf32>,
    %87 = vector.extract_strided_slice %11 {offsets = [2, 0], sizes = [2, 64], strides = [1, 1]} : vector<16x128xf32> to vector<2x64xf32>
    %88 = vector.extract_strided_slice %11 {offsets = [12, 64], sizes = [2, 64], strides = [1, 1]} : vector<16x128xf32> to vector<2x64xf32>
    %89 = vector.extract_strided_slice %4 {offsets = [6, 0, 0], sizes = [1, 2, 1], strides = [1, 1, 1]} : vector<8x2x1xf32> to vector<1x2x1xf32>
    %90 = vector.shape_cast %89 : vector<1x2x1xf32> to vector<2x1xf32>
    %cst_31 = arith.constant dense<0.000000e+00> : vector<2x64xf32>
    %91 = tpu.matmul %43, %0, %cst_31 {dimension_numbers = #tpu.dot_dimension_numbers<[1], [0], [0], [1], [0, 0, 1, 1], [], []>} : vector<2x16xf32>, vector<16x64xf32>, vector<2x64xf32> -> vector<2x64xf32>
    %92 = arith.addf %87, %91 : vector<2x64xf32>
    %93 = vector.extract_strided_slice %92 {offsets = [0, 0], sizes = [2, 16], strides = [1, 1]} : vector<2x64xf32> to vector<2x16xf32>
    %94 = arith.negf %93 : vector<2x16xf32>
    %95 = math.exp %94 : vector<2x16xf32>
    %cst_32 = arith.constant 1.000000e+00 : f32
    %96 = vector.broadcast %cst_32 : f32 to vector<2x16xf32>
    %97 = arith.addf %96, %95 : vector<2x16xf32>
    %98 = arith.divf %96, %97 : vector<2x16xf32>
    %99 = vector.extract_strided_slice %92 {offsets = [0, 16], sizes = [2, 16], strides = [1, 1]} : vector<2x64xf32> to vector<2x16xf32>
    %100 = arith.negf %99 : vector<2x16xf32>
    %101 = math.exp %100 : vector<2x16xf32>
    %cst_33 = arith.constant 1.000000e+00 : f32
    %102 = vector.broadcast %cst_33 : f32 to vector<2x16xf32>
    %103 = arith.addf %102, %101 : vector<2x16xf32>
    %104 = arith.divf %102, %103 : vector<2x16xf32>
    %105 = vector.extract_strided_slice %92 {offsets = [0, 32], sizes = [2, 16], strides = [1, 1]} : vector<2x64xf32> to vector<2x16xf32>
    %106 = math.tanh %105 : vector<2x16xf32>
    %107 = vector.extract_strided_slice %92 {offsets = [0, 48], sizes = [2, 16], strides = [1, 1]} : vector<2x64xf32> to vector<2x16xf32>
    %108 = arith.negf %107 : vector<2x16xf32>
    %109 = math.exp %108 : vector<2x16xf32>
    %cst_34 = arith.constant 1.000000e+00 : f32
    %110 = vector.broadcast %cst_34 : f32 to vector<2x16xf32>
    %111 = arith.addf %110, %109 : vector<2x16xf32>
    %112 = arith.divf %110, %111 : vector<2x16xf32>
    %113 = arith.mulf %104, %41 : vector<2x16xf32>
    %114 = arith.mulf %98, %106 : vector<2x16xf32>
    %115 = arith.addf %113, %114 : vector<2x16xf32>
    %116 = math.tanh %115 : vector<2x16xf32>
    %117 = arith.mulf %112, %116 : vector<2x16xf32>
    %cst_35 = arith.constant dense<0.000000e+00> : vector<2x64xf32>
    %118 = tpu.matmul %77, %1, %cst_35 {dimension_numbers = #tpu.dot_dimension_numbers<[1], [0], [0], [1], [0, 0, 1, 1], [], []>} : vector<2x16xf32>, vector<16x64xf32>, vector<2x64xf32> -> vector<2x64xf32>
    %119 = arith.addf %88, %118 : vector<2x64xf32>
    %120 = vector.extract_strided_slice %119 {offsets = [0, 0], sizes = [2, 16], strides = [1, 1]} : vector<2x64xf32> to vector<2x16xf32>
    %121 = arith.negf %120 : vector<2x16xf32>
    %122 = math.exp %121 : vector<2x16xf32>
    %cst_36 = arith.constant 1.000000e+00 : f32
    %123 = vector.broadcast %cst_36 : f32 to vector<2x16xf32>
    %124 = arith.addf %123, %122 : vector<2x16xf32>
    %125 = arith.divf %123, %124 : vector<2x16xf32>
    %126 = vector.extract_strided_slice %119 {offsets = [0, 16], sizes = [2, 16], strides = [1, 1]} : vector<2x64xf32> to vector<2x16xf32>
    %127 = arith.negf %126 : vector<2x16xf32>
    %128 = math.exp %127 : vector<2x16xf32>
    %cst_37 = arith.constant 1.000000e+00 : f32
    %129 = vector.broadcast %cst_37 : f32 to vector<2x16xf32>
    %130 = arith.addf %129, %128 : vector<2x16xf32>
    %131 = arith.divf %129, %130 : vector<2x16xf32>
    %132 = vector.extract_strided_slice %119 {offsets = [0, 32], sizes = [2, 16], strides = [1, 1]} : vector<2x64xf32> to vector<2x16xf32>
    %133 = math.tanh %132 : vector<2x16xf32>
    %134 = vector.extract_strided_slice %119 {offsets = [0, 48], sizes = [2, 16], strides = [1, 1]} : vector<2x64xf32> to vector<2x16xf32>
    %135 = arith.negf %134 : vector<2x16xf32>
    %136 = math.exp %135 : vector<2x16xf32>
    %cst_38 = arith.constant 1.000000e+00 : f32
    %137 = vector.broadcast %cst_38 : f32 to vector<2x16xf32>
    %138 = arith.addf %137, %136 : vector<2x16xf32>
    %139 = arith.divf %137, %138 : vector<2x16xf32>
    %140 = arith.mulf %131, %84 : vector<2x16xf32>
    %141 = arith.mulf %125, %133 : vector<2x16xf32>
    %142 = arith.addf %140, %141 : vector<2x16xf32>
    %143 = math.tanh %142 : vector<2x16xf32>
    %144 = arith.mulf %139, %143 : vector<2x16xf32>
    %145 = vector.broadcast %90 : vector<2x1xf32> to vector<2x16xf32>
    %146 = arith.mulf %145, %144 : vector<2x16xf32>
    %cst_39 = arith.constant 1.000000e+00 : f32
    %147 = vector.broadcast %cst_39 : f32 to vector<2x1xf32>
    %148 = arith.subf %147, %90 : vector<2x1xf32>
    %149 = vector.broadcast %148 : vector<2x1xf32> to vector<2x16xf32>
    %150 = arith.mulf %149, %77 : vector<2x16xf32>
    %151 = arith.addf %146, %150 : vector<2x16xf32>
    %152 = vector.broadcast %90 : vector<2x1xf32> to vector<2x16xf32>
    %153 = arith.mulf %152, %142 : vector<2x16xf32>
    %cst_40 = arith.constant 1.000000e+00 : f32
    %154 = vector.broadcast %cst_40 : f32 to vector<2x1xf32>
    %155 = arith.subf %154, %90 : vector<2x1xf32>
    %156 = vector.broadcast %155 : vector<2x1xf32> to vector<2x16xf32>
    %157 = arith.mulf %156, %84 : vector<2x16xf32>
    %158 = arith.addf %153, %157 : vector<2x16xf32>
    %c2 = arith.constant 2 : index
    %c0_41 = arith.constant 0 : index
    %159 = vector.load %arg13[%c2, %c0_41] : memref<16x16xf32, #tpu.memory_space<vmem>>, vector<2x16xf32>
    tpu.vector_store %arg13[%c2, %c0_41], %117 {strides = array<i32>} : memref<16x16xf32, #tpu.memory_space<vmem>>, vector<2x16xf32>,
    %c12 = arith.constant 12 : index
    %c0_42 = arith.constant 0 : index
    %160 = vector.load %arg14[%c12, %c0_42] : memref<16x16xf32, #tpu.memory_space<vmem>>, vector<2x16xf32>
    tpu.vector_store %arg14[%c12, %c0_42], %151 {strides = array<i32>} : memref<16x16xf32, #tpu.memory_space<vmem>>, vector<2x16xf32>,
    %161 = vector.extract_strided_slice %11 {offsets = [4, 0], sizes = [2, 64], strides = [1, 1]} : vector<16x128xf32> to vector<2x64xf32>
    %162 = vector.extract_strided_slice %11 {offsets = [10, 64], sizes = [2, 64], strides = [1, 1]} : vector<16x128xf32> to vector<2x64xf32>
    %163 = vector.extract_strided_slice %4 {offsets = [5, 0, 0], sizes = [1, 2, 1], strides = [1, 1, 1]} : vector<8x2x1xf32> to vector<1x2x1xf32>
    %164 = vector.shape_cast %163 : vector<1x2x1xf32> to vector<2x1xf32>
    %cst_43 = arith.constant dense<0.000000e+00> : vector<2x64xf32>
    %165 = tpu.matmul %117, %0, %cst_43 {dimension_numbers = #tpu.dot_dimension_numbers<[1], [0], [0], [1], [0, 0, 1, 1], [], []>} : vector<2x16xf32>, vector<16x64xf32>, vector<2x64xf32> -> vector<2x64xf32>
    %166 = arith.addf %161, %165 : vector<2x64xf32>
    %167 = vector.extract_strided_slice %166 {offsets = [0, 0], sizes = [2, 16], strides = [1, 1]} : vector<2x64xf32> to vector<2x16xf32>
    %168 = arith.negf %167 : vector<2x16xf32>
    %169 = math.exp %168 : vector<2x16xf32>
    %cst_44 = arith.constant 1.000000e+00 : f32
    %170 = vector.broadcast %cst_44 : f32 to vector<2x16xf32>
    %171 = arith.addf %170, %169 : vector<2x16xf32>
    %172 = arith.divf %170, %171 : vector<2x16xf32>
    %173 = vector.extract_strided_slice %166 {offsets = [0, 16], sizes = [2, 16], strides = [1, 1]} : vector<2x64xf32> to vector<2x16xf32>
    %174 = arith.negf %173 : vector<2x16xf32>
    %175 = math.exp %174 : vector<2x16xf32>
    %cst_45 = arith.constant 1.000000e+00 : f32
    %176 = vector.broadcast %cst_45 : f32 to vector<2x16xf32>
    %177 = arith.addf %176, %175 : vector<2x16xf32>
    %178 = arith.divf %176, %177 : vector<2x16xf32>
    %179 = vector.extract_strided_slice %166 {offsets = [0, 32], sizes = [2, 16], strides = [1, 1]} : vector<2x64xf32> to vector<2x16xf32>
    %180 = math.tanh %179 : vector<2x16xf32>
    %181 = vector.extract_strided_slice %166 {offsets = [0, 48], sizes = [2, 16], strides = [1, 1]} : vector<2x64xf32> to vector<2x16xf32>
    %182 = arith.negf %181 : vector<2x16xf32>
    %183 = math.exp %182 : vector<2x16xf32>
    %cst_46 = arith.constant 1.000000e+00 : f32
    %184 = vector.broadcast %cst_46 : f32 to vector<2x16xf32>
    %185 = arith.addf %184, %183 : vector<2x16xf32>
    %186 = arith.divf %184, %185 : vector<2x16xf32>
    %187 = arith.mulf %178, %115 : vector<2x16xf32>
    %188 = arith.mulf %172, %180 : vector<2x16xf32>
    %189 = arith.addf %187, %188 : vector<2x16xf32>
    %190 = math.tanh %189 : vector<2x16xf32>
    %191 = arith.mulf %186, %190 : vector<2x16xf32>
    %cst_47 = arith.constant dense<0.000000e+00> : vector<2x64xf32>
    %192 = tpu.matmul %151, %1, %cst_47 {dimension_numbers = #tpu.dot_dimension_numbers<[1], [0], [0], [1], [0, 0, 1, 1], [], []>} : vector<2x16xf32>, vector<16x64xf32>, vector<2x64xf32> -> vector<2x64xf32>
    %193 = arith.addf %162, %192 : vector<2x64xf32>
    %194 = vector.extract_strided_slice %193 {offsets = [0, 0], sizes = [2, 16], strides = [1, 1]} : vector<2x64xf32> to vector<2x16xf32>
    %195 = arith.negf %194 : vector<2x16xf32>
    %196 = math.exp %195 : vector<2x16xf32>
    %cst_48 = arith.constant 1.000000e+00 : f32
    %197 = vector.broadcast %cst_48 : f32 to vector<2x16xf32>
    %198 = arith.addf %197, %196 : vector<2x16xf32>
    %199 = arith.divf %197, %198 : vector<2x16xf32>
    %200 = vector.extract_strided_slice %193 {offsets = [0, 16], sizes = [2, 16], strides = [1, 1]} : vector<2x64xf32> to vector<2x16xf32>
    %201 = arith.negf %200 : vector<2x16xf32>
    %202 = math.exp %201 : vector<2x16xf32>
    %cst_49 = arith.constant 1.000000e+00 : f32
    %203 = vector.broadcast %cst_49 : f32 to vector<2x16xf32>
    %204 = arith.addf %203, %202 : vector<2x16xf32>
    %205 = arith.divf %203, %204 : vector<2x16xf32>
    %206 = vector.extract_strided_slice %193 {offsets = [0, 32], sizes = [2, 16], strides = [1, 1]} : vector<2x64xf32> to vector<2x16xf32>
    %207 = math.tanh %206 : vector<2x16xf32>
    %208 = vector.extract_strided_slice %193 {offsets = [0, 48], sizes = [2, 16], strides = [1, 1]} : vector<2x64xf32> to vector<2x16xf32>
    %209 = arith.negf %208 : vector<2x16xf32>
    %210 = math.exp %209 : vector<2x16xf32>
    %cst_50 = arith.constant 1.000000e+00 : f32
    %211 = vector.broadcast %cst_50 : f32 to vector<2x16xf32>
    %212 = arith.addf %211, %210 : vector<2x16xf32>
    %213 = arith.divf %211, %212 : vector<2x16xf32>
    %214 = arith.mulf %205, %158 : vector<2x16xf32>
    %215 = arith.mulf %199, %207 : vector<2x16xf32>
    %216 = arith.addf %214, %215 : vector<2x16xf32>
    %217 = math.tanh %216 : vector<2x16xf32>
    %218 = arith.mulf %213, %217 : vector<2x16xf32>
    %219 = vector.broadcast %164 : vector<2x1xf32> to vector<2x16xf32>
    %220 = arith.mulf %219, %218 : vector<2x16xf32>
    %cst_51 = arith.constant 1.000000e+00 : f32
    %221 = vector.broadcast %cst_51 : f32 to vector<2x1xf32>
    %222 = arith.subf %221, %164 : vector<2x1xf32>
    %223 = vector.broadcast %222 : vector<2x1xf32> to vector<2x16xf32>
    %224 = arith.mulf %223, %151 : vector<2x16xf32>
    %225 = arith.addf %220, %224 : vector<2x16xf32>
    %226 = vector.broadcast %164 : vector<2x1xf32> to vector<2x16xf32>
    %227 = arith.mulf %226, %216 : vector<2x16xf32>
    %cst_52 = arith.constant 1.000000e+00 : f32
    %228 = vector.broadcast %cst_52 : f32 to vector<2x1xf32>
    %229 = arith.subf %228, %164 : vector<2x1xf32>
    %230 = vector.broadcast %229 : vector<2x1xf32> to vector<2x16xf32>
    %231 = arith.mulf %230, %158 : vector<2x16xf32>
    %232 = arith.addf %227, %231 : vector<2x16xf32>
    %c4 = arith.constant 4 : index
    %c0_53 = arith.constant 0 : index
    %233 = vector.load %arg13[%c4, %c0_53] : memref<16x16xf32, #tpu.memory_space<vmem>>, vector<2x16xf32>
    tpu.vector_store %arg13[%c4, %c0_53], %191 {strides = array<i32>} : memref<16x16xf32, #tpu.memory_space<vmem>>, vector<2x16xf32>,
    %c10 = arith.constant 10 : index
    %c0_54 = arith.constant 0 : index
    %234 = vector.load %arg14[%c10, %c0_54] : memref<16x16xf32, #tpu.memory_space<vmem>>, vector<2x16xf32>
    tpu.vector_store %arg14[%c10, %c0_54], %225 {strides = array<i32>} : memref<16x16xf32, #tpu.memory_space<vmem>>, vector<2x16xf32>,
    %235 = vector.extract_strided_slice %11 {offsets = [6, 0], sizes = [2, 64], strides = [1, 1]} : vector<16x128xf32> to vector<2x64xf32>
    %236 = vector.extract_strided_slice %11 {offsets = [8, 64], sizes = [2, 64], strides = [1, 1]} : vector<16x128xf32> to vector<2x64xf32>
    %237 = vector.extract_strided_slice %4 {offsets = [4, 0, 0], sizes = [1, 2, 1], strides = [1, 1, 1]} : vector<8x2x1xf32> to vector<1x2x1xf32>
    %238 = vector.shape_cast %237 : vector<1x2x1xf32> to vector<2x1xf32>
    %cst_55 = arith.constant dense<0.000000e+00> : vector<2x64xf32>
    %239 = tpu.matmul %191, %0, %cst_55 {dimension_numbers = #tpu.dot_dimension_numbers<[1], [0], [0], [1], [0, 0, 1, 1], [], []>} : vector<2x16xf32>, vector<16x64xf32>, vector<2x64xf32> -> vector<2x64xf32>
    %240 = arith.addf %235, %239 : vector<2x64xf32>
    %241 = vector.extract_strided_slice %240 {offsets = [0, 0], sizes = [2, 16], strides = [1, 1]} : vector<2x64xf32> to vector<2x16xf32>
    %242 = arith.negf %241 : vector<2x16xf32>
    %243 = math.exp %242 : vector<2x16xf32>
    %cst_56 = arith.constant 1.000000e+00 : f32
    %244 = vector.broadcast %cst_56 : f32 to vector<2x16xf32>
    %245 = arith.addf %244, %243 : vector<2x16xf32>
    %246 = arith.divf %244, %245 : vector<2x16xf32>
    %247 = vector.extract_strided_slice %240 {offsets = [0, 16], sizes = [2, 16], strides = [1, 1]} : vector<2x64xf32> to vector<2x16xf32>
    %248 = arith.negf %247 : vector<2x16xf32>
    %249 = math.exp %248 : vector<2x16xf32>
    %cst_57 = arith.constant 1.000000e+00 : f32
    %250 = vector.broadcast %cst_57 : f32 to vector<2x16xf32>
    %251 = arith.addf %250, %249 : vector<2x16xf32>
    %252 = arith.divf %250, %251 : vector<2x16xf32>
    %253 = vector.extract_strided_slice %240 {offsets = [0, 32], sizes = [2, 16], strides = [1, 1]} : vector<2x64xf32> to vector<2x16xf32>
    %254 = math.tanh %253 : vector<2x16xf32>
    %255 = vector.extract_strided_slice %240 {offsets = [0, 48], sizes = [2, 16], strides = [1, 1]} : vector<2x64xf32> to vector<2x16xf32>
    %256 = arith.negf %255 : vector<2x16xf32>
    %257 = math.exp %256 : vector<2x16xf32>
    %cst_58 = arith.constant 1.000000e+00 : f32
    %258 = vector.broadcast %cst_58 : f32 to vector<2x16xf32>
    %259 = arith.addf %258, %257 : vector<2x16xf32>
    %260 = arith.divf %258, %259 : vector<2x16xf32>
    %261 = arith.mulf %252, %189 : vector<2x16xf32>
    %262 = arith.mulf %246, %254 : vector<2x16xf32>
    %263 = arith.addf %261, %262 : vector<2x16xf32>
    %264 = math.tanh %263 : vector<2x16xf32>
    %265 = arith.mulf %260, %264 : vector<2x16xf32>
    %cst_59 = arith.constant dense<0.000000e+00> : vector<2x64xf32>
    %266 = tpu.matmul %225, %1, %cst_59 {dimension_numbers = #tpu.dot_dimension_numbers<[1], [0], [0], [1], [0, 0, 1, 1], [], []>} : vector<2x16xf32>, vector<16x64xf32>, vector<2x64xf32> -> vector<2x64xf32>
    %267 = arith.addf %236, %266 : vector<2x64xf32>
    %268 = vector.extract_strided_slice %267 {offsets = [0, 0], sizes = [2, 16], strides = [1, 1]} : vector<2x64xf32> to vector<2x16xf32>
    %269 = arith.negf %268 : vector<2x16xf32>
    %270 = math.exp %269 : vector<2x16xf32>
    %cst_60 = arith.constant 1.000000e+00 : f32
    %271 = vector.broadcast %cst_60 : f32 to vector<2x16xf32>
    %272 = arith.addf %271, %270 : vector<2x16xf32>
    %273 = arith.divf %271, %272 : vector<2x16xf32>
    %274 = vector.extract_strided_slice %267 {offsets = [0, 16], sizes = [2, 16], strides = [1, 1]} : vector<2x64xf32> to vector<2x16xf32>
    %275 = arith.negf %274 : vector<2x16xf32>
    %276 = math.exp %275 : vector<2x16xf32>
    %cst_61 = arith.constant 1.000000e+00 : f32
    %277 = vector.broadcast %cst_61 : f32 to vector<2x16xf32>
    %278 = arith.addf %277, %276 : vector<2x16xf32>
    %279 = arith.divf %277, %278 : vector<2x16xf32>
    %280 = vector.extract_strided_slice %267 {offsets = [0, 32], sizes = [2, 16], strides = [1, 1]} : vector<2x64xf32> to vector<2x16xf32>
    %281 = math.tanh %280 : vector<2x16xf32>
    %282 = vector.extract_strided_slice %267 {offsets = [0, 48], sizes = [2, 16], strides = [1, 1]} : vector<2x64xf32> to vector<2x16xf32>
    %283 = arith.negf %282 : vector<2x16xf32>
    %284 = math.exp %283 : vector<2x16xf32>
    %cst_62 = arith.constant 1.000000e+00 : f32
    %285 = vector.broadcast %cst_62 : f32 to vector<2x16xf32>
    %286 = arith.addf %285, %284 : vector<2x16xf32>
    %287 = arith.divf %285, %286 : vector<2x16xf32>
    %288 = arith.mulf %279, %232 : vector<2x16xf32>
    %289 = arith.mulf %273, %281 : vector<2x16xf32>
    %290 = arith.addf %288, %289 : vector<2x16xf32>
    %291 = math.tanh %290 : vector<2x16xf32>
    %292 = arith.mulf %287, %291 : vector<2x16xf32>
    %293 = vector.broadcast %238 : vector<2x1xf32> to vector<2x16xf32>
    %294 = arith.mulf %293, %292 : vector<2x16xf32>
    %cst_63 = arith.constant 1.000000e+00 : f32
    %295 = vector.broadcast %cst_63 : f32 to vector<2x1xf32>
    %296 = arith.subf %295, %238 : vector<2x1xf32>
    %297 = vector.broadcast %296 : vector<2x1xf32> to vector<2x16xf32>
    %298 = arith.mulf %297, %225 : vector<2x16xf32>
    %299 = arith.addf %294, %298 : vector<2x16xf32>
    %300 = vector.broadcast %238 : vector<2x1xf32> to vector<2x16xf32>
    %301 = arith.mulf %300, %290 : vector<2x16xf32>
    %cst_64 = arith.constant 1.000000e+00 : f32
    %302 = vector.broadcast %cst_64 : f32 to vector<2x1xf32>
    %303 = arith.subf %302, %238 : vector<2x1xf32>
    %304 = vector.broadcast %303 : vector<2x1xf32> to vector<2x16xf32>
    %305 = arith.mulf %304, %232 : vector<2x16xf32>
    %306 = arith.addf %301, %305 : vector<2x16xf32>
    %c6 = arith.constant 6 : index
    %c0_65 = arith.constant 0 : index
    %307 = vector.load %arg13[%c6, %c0_65] : memref<16x16xf32, #tpu.memory_space<vmem>>, vector<2x16xf32>
    tpu.vector_store %arg13[%c6, %c0_65], %265 {strides = array<i32>} : memref<16x16xf32, #tpu.memory_space<vmem>>, vector<2x16xf32>,
    %c8 = arith.constant 8 : index
    %c0_66 = arith.constant 0 : index
    %308 = vector.load %arg14[%c8, %c0_66] : memref<16x16xf32, #tpu.memory_space<vmem>>, vector<2x16xf32>
    tpu.vector_store %arg14[%c8, %c0_66], %299 {strides = array<i32>} : memref<16x16xf32, #tpu.memory_space<vmem>>, vector<2x16xf32>,
    %309 = vector.extract_strided_slice %11 {offsets = [8, 0], sizes = [2, 64], strides = [1, 1]} : vector<16x128xf32> to vector<2x64xf32>
    %310 = vector.extract_strided_slice %11 {offsets = [6, 64], sizes = [2, 64], strides = [1, 1]} : vector<16x128xf32> to vector<2x64xf32>
    %311 = vector.extract_strided_slice %4 {offsets = [3, 0, 0], sizes = [1, 2, 1], strides = [1, 1, 1]} : vector<8x2x1xf32> to vector<1x2x1xf32>
    %312 = vector.shape_cast %311 : vector<1x2x1xf32> to vector<2x1xf32>
    %cst_67 = arith.constant dense<0.000000e+00> : vector<2x64xf32>
    %313 = tpu.matmul %265, %0, %cst_67 {dimension_numbers = #tpu.dot_dimension_numbers<[1], [0], [0], [1], [0, 0, 1, 1], [], []>} : vector<2x16xf32>, vector<16x64xf32>, vector<2x64xf32> -> vector<2x64xf32>
    %314 = arith.addf %309, %313 : vector<2x64xf32>
    %315 = vector.extract_strided_slice %314 {offsets = [0, 0], sizes = [2, 16], strides = [1, 1]} : vector<2x64xf32> to vector<2x16xf32>
    %316 = arith.negf %315 : vector<2x16xf32>
    %317 = math.exp %316 : vector<2x16xf32>
    %cst_68 = arith.constant 1.000000e+00 : f32
    %318 = vector.broadcast %cst_68 : f32 to vector<2x16xf32>
    %319 = arith.addf %318, %317 : vector<2x16xf32>
    %320 = arith.divf %318, %319 : vector<2x16xf32>
    %321 = vector.extract_strided_slice %314 {offsets = [0, 16], sizes = [2, 16], strides = [1, 1]} : vector<2x64xf32> to vector<2x16xf32>
    %322 = arith.negf %321 : vector<2x16xf32>
    %323 = math.exp %322 : vector<2x16xf32>
    %cst_69 = arith.constant 1.000000e+00 : f32
    %324 = vector.broadcast %cst_69 : f32 to vector<2x16xf32>
    %325 = arith.addf %324, %323 : vector<2x16xf32>
    %326 = arith.divf %324, %325 : vector<2x16xf32>
    %327 = vector.extract_strided_slice %314 {offsets = [0, 32], sizes = [2, 16], strides = [1, 1]} : vector<2x64xf32> to vector<2x16xf32>
    %328 = math.tanh %327 : vector<2x16xf32>
    %329 = vector.extract_strided_slice %314 {offsets = [0, 48], sizes = [2, 16], strides = [1, 1]} : vector<2x64xf32> to vector<2x16xf32>
    %330 = arith.negf %329 : vector<2x16xf32>
    %331 = math.exp %330 : vector<2x16xf32>
    %cst_70 = arith.constant 1.000000e+00 : f32
    %332 = vector.broadcast %cst_70 : f32 to vector<2x16xf32>
    %333 = arith.addf %332, %331 : vector<2x16xf32>
    %334 = arith.divf %332, %333 : vector<2x16xf32>
    %335 = arith.mulf %326, %263 : vector<2x16xf32>
    %336 = arith.mulf %320, %328 : vector<2x16xf32>
    %337 = arith.addf %335, %336 : vector<2x16xf32>
    %338 = math.tanh %337 : vector<2x16xf32>
    %339 = arith.mulf %334, %338 : vector<2x16xf32>
    %cst_71 = arith.constant dense<0.000000e+00> : vector<2x64xf32>
    %340 = tpu.matmul %299, %1, %cst_71 {dimension_numbers = #tpu.dot_dimension_numbers<[1], [0], [0], [1], [0, 0, 1, 1], [], []>} : vector<2x16xf32>, vector<16x64xf32>, vector<2x64xf32> -> vector<2x64xf32>
    %341 = arith.addf %310, %340 : vector<2x64xf32>
    %342 = vector.extract_strided_slice %341 {offsets = [0, 0], sizes = [2, 16], strides = [1, 1]} : vector<2x64xf32> to vector<2x16xf32>
    %343 = arith.negf %342 : vector<2x16xf32>
    %344 = math.exp %343 : vector<2x16xf32>
    %cst_72 = arith.constant 1.000000e+00 : f32
    %345 = vector.broadcast %cst_72 : f32 to vector<2x16xf32>
    %346 = arith.addf %345, %344 : vector<2x16xf32>
    %347 = arith.divf %345, %346 : vector<2x16xf32>
    %348 = vector.extract_strided_slice %341 {offsets = [0, 16], sizes = [2, 16], strides = [1, 1]} : vector<2x64xf32> to vector<2x16xf32>
    %349 = arith.negf %348 : vector<2x16xf32>
    %350 = math.exp %349 : vector<2x16xf32>
    %cst_73 = arith.constant 1.000000e+00 : f32
    %351 = vector.broadcast %cst_73 : f32 to vector<2x16xf32>
    %352 = arith.addf %351, %350 : vector<2x16xf32>
    %353 = arith.divf %351, %352 : vector<2x16xf32>
    %354 = vector.extract_strided_slice %341 {offsets = [0, 32], sizes = [2, 16], strides = [1, 1]} : vector<2x64xf32> to vector<2x16xf32>
    %355 = math.tanh %354 : vector<2x16xf32>
    %356 = vector.extract_strided_slice %341 {offsets = [0, 48], sizes = [2, 16], strides = [1, 1]} : vector<2x64xf32> to vector<2x16xf32>
    %357 = arith.negf %356 : vector<2x16xf32>
    %358 = math.exp %357 : vector<2x16xf32>
    %cst_74 = arith.constant 1.000000e+00 : f32
    %359 = vector.broadcast %cst_74 : f32 to vector<2x16xf32>
    %360 = arith.addf %359, %358 : vector<2x16xf32>
    %361 = arith.divf %359, %360 : vector<2x16xf32>
    %362 = arith.mulf %353, %306 : vector<2x16xf32>
    %363 = arith.mulf %347, %355 : vector<2x16xf32>
    %364 = arith.addf %362, %363 : vector<2x16xf32>
    %365 = math.tanh %364 : vector<2x16xf32>
    %366 = arith.mulf %361, %365 : vector<2x16xf32>
    %367 = vector.broadcast %312 : vector<2x1xf32> to vector<2x16xf32>
    %368 = arith.mulf %367, %366 : vector<2x16xf32>
    %cst_75 = arith.constant 1.000000e+00 : f32
    %369 = vector.broadcast %cst_75 : f32 to vector<2x1xf32>
    %370 = arith.subf %369, %312 : vector<2x1xf32>
    %371 = vector.broadcast %370 : vector<2x1xf32> to vector<2x16xf32>
    %372 = arith.mulf %371, %299 : vector<2x16xf32>
    %373 = arith.addf %368, %372 : vector<2x16xf32>
    %374 = vector.broadcast %312 : vector<2x1xf32> to vector<2x16xf32>
    %375 = arith.mulf %374, %364 : vector<2x16xf32>
    %cst_76 = arith.constant 1.000000e+00 : f32
    %376 = vector.broadcast %cst_76 : f32 to vector<2x1xf32>
    %377 = arith.subf %376, %312 : vector<2x1xf32>
    %378 = vector.broadcast %377 : vector<2x1xf32> to vector<2x16xf32>
    %379 = arith.mulf %378, %306 : vector<2x16xf32>
    %380 = arith.addf %375, %379 : vector<2x16xf32>
    %c8_77 = arith.constant 8 : index
    %c0_78 = arith.constant 0 : index
    %381 = vector.load %arg13[%c8_77, %c0_78] : memref<16x16xf32, #tpu.memory_space<vmem>>, vector<2x16xf32>
    tpu.vector_store %arg13[%c8_77, %c0_78], %339 {strides = array<i32>} : memref<16x16xf32, #tpu.memory_space<vmem>>, vector<2x16xf32>,
    %c6_79 = arith.constant 6 : index
    %c0_80 = arith.constant 0 : index
    %382 = vector.load %arg14[%c6_79, %c0_80] : memref<16x16xf32, #tpu.memory_space<vmem>>, vector<2x16xf32>
    tpu.vector_store %arg14[%c6_79, %c0_80], %373 {strides = array<i32>} : memref<16x16xf32, #tpu.memory_space<vmem>>, vector<2x16xf32>,
    %383 = vector.extract_strided_slice %11 {offsets = [10, 0], sizes = [2, 64], strides = [1, 1]} : vector<16x128xf32> to vector<2x64xf32>
    %384 = vector.extract_strided_slice %11 {offsets = [4, 64], sizes = [2, 64], strides = [1, 1]} : vector<16x128xf32> to vector<2x64xf32>
    %385 = vector.extract_strided_slice %4 {offsets = [2, 0, 0], sizes = [1, 2, 1], strides = [1, 1, 1]} : vector<8x2x1xf32> to vector<1x2x1xf32>
    %386 = vector.shape_cast %385 : vector<1x2x1xf32> to vector<2x1xf32>
    %cst_81 = arith.constant dense<0.000000e+00> : vector<2x64xf32>
    %387 = tpu.matmul %339, %0, %cst_81 {dimension_numbers = #tpu.dot_dimension_numbers<[1], [0], [0], [1], [0, 0, 1, 1], [], []>} : vector<2x16xf32>, vector<16x64xf32>, vector<2x64xf32> -> vector<2x64xf32>
    %388 = arith.addf %383, %387 : vector<2x64xf32>
    %389 = vector.extract_strided_slice %388 {offsets = [0, 0], sizes = [2, 16], strides = [1, 1]} : vector<2x64xf32> to vector<2x16xf32>
    %390 = arith.negf %389 : vector<2x16xf32>
    %391 = math.exp %390 : vector<2x16xf32>
    %cst_82 = arith.constant 1.000000e+00 : f32
    %392 = vector.broadcast %cst_82 : f32 to vector<2x16xf32>
    %393 = arith.addf %392, %391 : vector<2x16xf32>
    %394 = arith.divf %392, %393 : vector<2x16xf32>
    %395 = vector.extract_strided_slice %388 {offsets = [0, 16], sizes = [2, 16], strides = [1, 1]} : vector<2x64xf32> to vector<2x16xf32>
    %396 = arith.negf %395 : vector<2x16xf32>
    %397 = math.exp %396 : vector<2x16xf32>
    %cst_83 = arith.constant 1.000000e+00 : f32
    %398 = vector.broadcast %cst_83 : f32 to vector<2x16xf32>
    %399 = arith.addf %398, %397 : vector<2x16xf32>
    %400 = arith.divf %398, %399 : vector<2x16xf32>
    %401 = vector.extract_strided_slice %388 {offsets = [0, 32], sizes = [2, 16], strides = [1, 1]} : vector<2x64xf32> to vector<2x16xf32>
    %402 = math.tanh %401 : vector<2x16xf32>
    %403 = vector.extract_strided_slice %388 {offsets = [0, 48], sizes = [2, 16], strides = [1, 1]} : vector<2x64xf32> to vector<2x16xf32>
    %404 = arith.negf %403 : vector<2x16xf32>
    %405 = math.exp %404 : vector<2x16xf32>
    %cst_84 = arith.constant 1.000000e+00 : f32
    %406 = vector.broadcast %cst_84 : f32 to vector<2x16xf32>
    %407 = arith.addf %406, %405 : vector<2x16xf32>
    %408 = arith.divf %406, %407 : vector<2x16xf32>
    %409 = arith.mulf %400, %337 : vector<2x16xf32>
    %410 = arith.mulf %394, %402 : vector<2x16xf32>
    %411 = arith.addf %409, %410 : vector<2x16xf32>
    %412 = math.tanh %411 : vector<2x16xf32>
    %413 = arith.mulf %408, %412 : vector<2x16xf32>
    %cst_85 = arith.constant dense<0.000000e+00> : vector<2x64xf32>
    %414 = tpu.matmul %373, %1, %cst_85 {dimension_numbers = #tpu.dot_dimension_numbers<[1], [0], [0], [1], [0, 0, 1, 1], [], []>} : vector<2x16xf32>, vector<16x64xf32>, vector<2x64xf32> -> vector<2x64xf32>
    %415 = arith.addf %384, %414 : vector<2x64xf32>
    %416 = vector.extract_strided_slice %415 {offsets = [0, 0], sizes = [2, 16], strides = [1, 1]} : vector<2x64xf32> to vector<2x16xf32>
    %417 = arith.negf %416 : vector<2x16xf32>
    %418 = math.exp %417 : vector<2x16xf32>
    %cst_86 = arith.constant 1.000000e+00 : f32
    %419 = vector.broadcast %cst_86 : f32 to vector<2x16xf32>
    %420 = arith.addf %419, %418 : vector<2x16xf32>
    %421 = arith.divf %419, %420 : vector<2x16xf32>
    %422 = vector.extract_strided_slice %415 {offsets = [0, 16], sizes = [2, 16], strides = [1, 1]} : vector<2x64xf32> to vector<2x16xf32>
    %423 = arith.negf %422 : vector<2x16xf32>
    %424 = math.exp %423 : vector<2x16xf32>
    %cst_87 = arith.constant 1.000000e+00 : f32
    %425 = vector.broadcast %cst_87 : f32 to vector<2x16xf32>
    %426 = arith.addf %425, %424 : vector<2x16xf32>
    %427 = arith.divf %425, %426 : vector<2x16xf32>
    %428 = vector.extract_strided_slice %415 {offsets = [0, 32], sizes = [2, 16], strides = [1, 1]} : vector<2x64xf32> to vector<2x16xf32>
    %429 = math.tanh %428 : vector<2x16xf32>
    %430 = vector.extract_strided_slice %415 {offsets = [0, 48], sizes = [2, 16], strides = [1, 1]} : vector<2x64xf32> to vector<2x16xf32>
    %431 = arith.negf %430 : vector<2x16xf32>
    %432 = math.exp %431 : vector<2x16xf32>
    %cst_88 = arith.constant 1.000000e+00 : f32
    %433 = vector.broadcast %cst_88 : f32 to vector<2x16xf32>
    %434 = arith.addf %433, %432 : vector<2x16xf32>
    %435 = arith.divf %433, %434 : vector<2x16xf32>
    %436 = arith.mulf %427, %380 : vector<2x16xf32>
    %437 = arith.mulf %421, %429 : vector<2x16xf32>
    %438 = arith.addf %436, %437 : vector<2x16xf32>
    %439 = math.tanh %438 : vector<2x16xf32>
    %440 = arith.mulf %435, %439 : vector<2x16xf32>
    %441 = vector.broadcast %386 : vector<2x1xf32> to vector<2x16xf32>
    %442 = arith.mulf %441, %440 : vector<2x16xf32>
    %cst_89 = arith.constant 1.000000e+00 : f32
    %443 = vector.broadcast %cst_89 : f32 to vector<2x1xf32>
    %444 = arith.subf %443, %386 : vector<2x1xf32>
    %445 = vector.broadcast %444 : vector<2x1xf32> to vector<2x16xf32>
    %446 = arith.mulf %445, %373 : vector<2x16xf32>
    %447 = arith.addf %442, %446 : vector<2x16xf32>
    %448 = vector.broadcast %386 : vector<2x1xf32> to vector<2x16xf32>
    %449 = arith.mulf %448, %438 : vector<2x16xf32>
    %cst_90 = arith.constant 1.000000e+00 : f32
    %450 = vector.broadcast %cst_90 : f32 to vector<2x1xf32>
    %451 = arith.subf %450, %386 : vector<2x1xf32>
    %452 = vector.broadcast %451 : vector<2x1xf32> to vector<2x16xf32>
    %453 = arith.mulf %452, %380 : vector<2x16xf32>
    %454 = arith.addf %449, %453 : vector<2x16xf32>
    %c10_91 = arith.constant 10 : index
    %c0_92 = arith.constant 0 : index
    %455 = vector.load %arg13[%c10_91, %c0_92] : memref<16x16xf32, #tpu.memory_space<vmem>>, vector<2x16xf32>
    tpu.vector_store %arg13[%c10_91, %c0_92], %413 {strides = array<i32>} : memref<16x16xf32, #tpu.memory_space<vmem>>, vector<2x16xf32>,
    %c4_93 = arith.constant 4 : index
    %c0_94 = arith.constant 0 : index
    %456 = vector.load %arg14[%c4_93, %c0_94] : memref<16x16xf32, #tpu.memory_space<vmem>>, vector<2x16xf32>
    tpu.vector_store %arg14[%c4_93, %c0_94], %447 {strides = array<i32>} : memref<16x16xf32, #tpu.memory_space<vmem>>, vector<2x16xf32>,
    %457 = vector.extract_strided_slice %11 {offsets = [12, 0], sizes = [2, 64], strides = [1, 1]} : vector<16x128xf32> to vector<2x64xf32>
    %458 = vector.extract_strided_slice %11 {offsets = [2, 64], sizes = [2, 64], strides = [1, 1]} : vector<16x128xf32> to vector<2x64xf32>
    %459 = vector.extract_strided_slice %4 {offsets = [1, 0, 0], sizes = [1, 2, 1], strides = [1, 1, 1]} : vector<8x2x1xf32> to vector<1x2x1xf32>
    %460 = vector.shape_cast %459 : vector<1x2x1xf32> to vector<2x1xf32>
    %cst_95 = arith.constant dense<0.000000e+00> : vector<2x64xf32>
    %461 = tpu.matmul %413, %0, %cst_95 {dimension_numbers = #tpu.dot_dimension_numbers<[1], [0], [0], [1], [0, 0, 1, 1], [], []>} : vector<2x16xf32>, vector<16x64xf32>, vector<2x64xf32> -> vector<2x64xf32>
    %462 = arith.addf %457, %461 : vector<2x64xf32>
    %463 = vector.extract_strided_slice %462 {offsets = [0, 0], sizes = [2, 16], strides = [1, 1]} : vector<2x64xf32> to vector<2x16xf32>
    %464 = arith.negf %463 : vector<2x16xf32>
    %465 = math.exp %464 : vector<2x16xf32>
    %cst_96 = arith.constant 1.000000e+00 : f32
    %466 = vector.broadcast %cst_96 : f32 to vector<2x16xf32>
    %467 = arith.addf %466, %465 : vector<2x16xf32>
    %468 = arith.divf %466, %467 : vector<2x16xf32>
    %469 = vector.extract_strided_slice %462 {offsets = [0, 16], sizes = [2, 16], strides = [1, 1]} : vector<2x64xf32> to vector<2x16xf32>
    %470 = arith.negf %469 : vector<2x16xf32>
    %471 = math.exp %470 : vector<2x16xf32>
    %cst_97 = arith.constant 1.000000e+00 : f32
    %472 = vector.broadcast %cst_97 : f32 to vector<2x16xf32>
    %473 = arith.addf %472, %471 : vector<2x16xf32>
    %474 = arith.divf %472, %473 : vector<2x16xf32>
    %475 = vector.extract_strided_slice %462 {offsets = [0, 32], sizes = [2, 16], strides = [1, 1]} : vector<2x64xf32> to vector<2x16xf32>
    %476 = math.tanh %475 : vector<2x16xf32>
    %477 = vector.extract_strided_slice %462 {offsets = [0, 48], sizes = [2, 16], strides = [1, 1]} : vector<2x64xf32> to vector<2x16xf32>
    %478 = arith.negf %477 : vector<2x16xf32>
    %479 = math.exp %478 : vector<2x16xf32>
    %cst_98 = arith.constant 1.000000e+00 : f32
    %480 = vector.broadcast %cst_98 : f32 to vector<2x16xf32>
    %481 = arith.addf %480, %479 : vector<2x16xf32>
    %482 = arith.divf %480, %481 : vector<2x16xf32>
    %483 = arith.mulf %474, %411 : vector<2x16xf32>
    %484 = arith.mulf %468, %476 : vector<2x16xf32>
    %485 = arith.addf %483, %484 : vector<2x16xf32>
    %486 = math.tanh %485 : vector<2x16xf32>
    %487 = arith.mulf %482, %486 : vector<2x16xf32>
    %cst_99 = arith.constant dense<0.000000e+00> : vector<2x64xf32>
    %488 = tpu.matmul %447, %1, %cst_99 {dimension_numbers = #tpu.dot_dimension_numbers<[1], [0], [0], [1], [0, 0, 1, 1], [], []>} : vector<2x16xf32>, vector<16x64xf32>, vector<2x64xf32> -> vector<2x64xf32>
    %489 = arith.addf %458, %488 : vector<2x64xf32>
    %490 = vector.extract_strided_slice %489 {offsets = [0, 0], sizes = [2, 16], strides = [1, 1]} : vector<2x64xf32> to vector<2x16xf32>
    %491 = arith.negf %490 : vector<2x16xf32>
    %492 = math.exp %491 : vector<2x16xf32>
    %cst_100 = arith.constant 1.000000e+00 : f32
    %493 = vector.broadcast %cst_100 : f32 to vector<2x16xf32>
    %494 = arith.addf %493, %492 : vector<2x16xf32>
    %495 = arith.divf %493, %494 : vector<2x16xf32>
    %496 = vector.extract_strided_slice %489 {offsets = [0, 16], sizes = [2, 16], strides = [1, 1]} : vector<2x64xf32> to vector<2x16xf32>
    %497 = arith.negf %496 : vector<2x16xf32>
    %498 = math.exp %497 : vector<2x16xf32>
    %cst_101 = arith.constant 1.000000e+00 : f32
    %499 = vector.broadcast %cst_101 : f32 to vector<2x16xf32>
    %500 = arith.addf %499, %498 : vector<2x16xf32>
    %501 = arith.divf %499, %500 : vector<2x16xf32>
    %502 = vector.extract_strided_slice %489 {offsets = [0, 32], sizes = [2, 16], strides = [1, 1]} : vector<2x64xf32> to vector<2x16xf32>
    %503 = math.tanh %502 : vector<2x16xf32>
    %504 = vector.extract_strided_slice %489 {offsets = [0, 48], sizes = [2, 16], strides = [1, 1]} : vector<2x64xf32> to vector<2x16xf32>
    %505 = arith.negf %504 : vector<2x16xf32>
    %506 = math.exp %505 : vector<2x16xf32>
    %cst_102 = arith.constant 1.000000e+00 : f32
    %507 = vector.broadcast %cst_102 : f32 to vector<2x16xf32>
    %508 = arith.addf %507, %506 : vector<2x16xf32>
    %509 = arith.divf %507, %508 : vector<2x16xf32>
    %510 = arith.mulf %501, %454 : vector<2x16xf32>
    %511 = arith.mulf %495, %503 : vector<2x16xf32>
    %512 = arith.addf %510, %511 : vector<2x16xf32>
    %513 = math.tanh %512 : vector<2x16xf32>
    %514 = arith.mulf %509, %513 : vector<2x16xf32>
    %515 = vector.broadcast %460 : vector<2x1xf32> to vector<2x16xf32>
    %516 = arith.mulf %515, %514 : vector<2x16xf32>
    %cst_103 = arith.constant 1.000000e+00 : f32
    %517 = vector.broadcast %cst_103 : f32 to vector<2x1xf32>
    %518 = arith.subf %517, %460 : vector<2x1xf32>
    %519 = vector.broadcast %518 : vector<2x1xf32> to vector<2x16xf32>
    %520 = arith.mulf %519, %447 : vector<2x16xf32>
    %521 = arith.addf %516, %520 : vector<2x16xf32>
    %522 = vector.broadcast %460 : vector<2x1xf32> to vector<2x16xf32>
    %523 = arith.mulf %522, %512 : vector<2x16xf32>
    %cst_104 = arith.constant 1.000000e+00 : f32
    %524 = vector.broadcast %cst_104 : f32 to vector<2x1xf32>
    %525 = arith.subf %524, %460 : vector<2x1xf32>
    %526 = vector.broadcast %525 : vector<2x1xf32> to vector<2x16xf32>
    %527 = arith.mulf %526, %454 : vector<2x16xf32>
    %528 = arith.addf %523, %527 : vector<2x16xf32>
    %c12_105 = arith.constant 12 : index
    %c0_106 = arith.constant 0 : index
    %529 = vector.load %arg13[%c12_105, %c0_106] : memref<16x16xf32, #tpu.memory_space<vmem>>, vector<2x16xf32>
    tpu.vector_store %arg13[%c12_105, %c0_106], %487 {strides = array<i32>} : memref<16x16xf32, #tpu.memory_space<vmem>>, vector<2x16xf32>,
    %c2_107 = arith.constant 2 : index
    %c0_108 = arith.constant 0 : index
    %530 = vector.load %arg14[%c2_107, %c0_108] : memref<16x16xf32, #tpu.memory_space<vmem>>, vector<2x16xf32>
    tpu.vector_store %arg14[%c2_107, %c0_108], %521 {strides = array<i32>} : memref<16x16xf32, #tpu.memory_space<vmem>>, vector<2x16xf32>,
    %531 = vector.extract_strided_slice %11 {offsets = [14, 0], sizes = [2, 64], strides = [1, 1]} : vector<16x128xf32> to vector<2x64xf32>
    %532 = vector.extract_strided_slice %11 {offsets = [0, 64], sizes = [2, 64], strides = [1, 1]} : vector<16x128xf32> to vector<2x64xf32>
    %533 = vector.extract_strided_slice %4 {offsets = [0, 0, 0], sizes = [1, 2, 1], strides = [1, 1, 1]} : vector<8x2x1xf32> to vector<1x2x1xf32>
    %534 = vector.shape_cast %533 : vector<1x2x1xf32> to vector<2x1xf32>
    %cst_109 = arith.constant dense<0.000000e+00> : vector<2x64xf32>
    %535 = tpu.matmul %487, %0, %cst_109 {dimension_numbers = #tpu.dot_dimension_numbers<[1], [0], [0], [1], [0, 0, 1, 1], [], []>} : vector<2x16xf32>, vector<16x64xf32>, vector<2x64xf32> -> vector<2x64xf32>
    %536 = arith.addf %531, %535 : vector<2x64xf32>
    %537 = vector.extract_strided_slice %536 {offsets = [0, 0], sizes = [2, 16], strides = [1, 1]} : vector<2x64xf32> to vector<2x16xf32>
    %538 = arith.negf %537 : vector<2x16xf32>
    %539 = math.exp %538 : vector<2x16xf32>
    %cst_110 = arith.constant 1.000000e+00 : f32
    %540 = vector.broadcast %cst_110 : f32 to vector<2x16xf32>
    %541 = arith.addf %540, %539 : vector<2x16xf32>
    %542 = arith.divf %540, %541 : vector<2x16xf32>
    %543 = vector.extract_strided_slice %536 {offsets = [0, 16], sizes = [2, 16], strides = [1, 1]} : vector<2x64xf32> to vector<2x16xf32>
    %544 = arith.negf %543 : vector<2x16xf32>
    %545 = math.exp %544 : vector<2x16xf32>
    %cst_111 = arith.constant 1.000000e+00 : f32
    %546 = vector.broadcast %cst_111 : f32 to vector<2x16xf32>
    %547 = arith.addf %546, %545 : vector<2x16xf32>
    %548 = arith.divf %546, %547 : vector<2x16xf32>
    %549 = vector.extract_strided_slice %536 {offsets = [0, 32], sizes = [2, 16], strides = [1, 1]} : vector<2x64xf32> to vector<2x16xf32>
    %550 = math.tanh %549 : vector<2x16xf32>
    %551 = vector.extract_strided_slice %536 {offsets = [0, 48], sizes = [2, 16], strides = [1, 1]} : vector<2x64xf32> to vector<2x16xf32>
    %552 = arith.negf %551 : vector<2x16xf32>
    %553 = math.exp %552 : vector<2x16xf32>
    %cst_112 = arith.constant 1.000000e+00 : f32
    %554 = vector.broadcast %cst_112 : f32 to vector<2x16xf32>
    %555 = arith.addf %554, %553 : vector<2x16xf32>
    %556 = arith.divf %554, %555 : vector<2x16xf32>
    %557 = arith.mulf %548, %485 : vector<2x16xf32>
    %558 = arith.mulf %542, %550 : vector<2x16xf32>
    %559 = arith.addf %557, %558 : vector<2x16xf32>
    %560 = math.tanh %559 : vector<2x16xf32>
    %561 = arith.mulf %556, %560 : vector<2x16xf32>
    %cst_113 = arith.constant dense<0.000000e+00> : vector<2x64xf32>
    %562 = tpu.matmul %521, %1, %cst_113 {dimension_numbers = #tpu.dot_dimension_numbers<[1], [0], [0], [1], [0, 0, 1, 1], [], []>} : vector<2x16xf32>, vector<16x64xf32>, vector<2x64xf32> -> vector<2x64xf32>
    %563 = arith.addf %532, %562 : vector<2x64xf32>
    %564 = vector.extract_strided_slice %563 {offsets = [0, 0], sizes = [2, 16], strides = [1, 1]} : vector<2x64xf32> to vector<2x16xf32>
    %565 = arith.negf %564 : vector<2x16xf32>
    %566 = math.exp %565 : vector<2x16xf32>
    %cst_114 = arith.constant 1.000000e+00 : f32
    %567 = vector.broadcast %cst_114 : f32 to vector<2x16xf32>
    %568 = arith.addf %567, %566 : vector<2x16xf32>
    %569 = arith.divf %567, %568 : vector<2x16xf32>
    %570 = vector.extract_strided_slice %563 {offsets = [0, 16], sizes = [2, 16], strides = [1, 1]} : vector<2x64xf32> to vector<2x16xf32>
    %571 = arith.negf %570 : vector<2x16xf32>
    %572 = math.exp %571 : vector<2x16xf32>
    %cst_115 = arith.constant 1.000000e+00 : f32
    %573 = vector.broadcast %cst_115 : f32 to vector<2x16xf32>
    %574 = arith.addf %573, %572 : vector<2x16xf32>
    %575 = arith.divf %573, %574 : vector<2x16xf32>
    %576 = vector.extract_strided_slice %563 {offsets = [0, 32], sizes = [2, 16], strides = [1, 1]} : vector<2x64xf32> to vector<2x16xf32>
    %577 = math.tanh %576 : vector<2x16xf32>
    %578 = vector.extract_strided_slice %563 {offsets = [0, 48], sizes = [2, 16], strides = [1, 1]} : vector<2x64xf32> to vector<2x16xf32>
    %579 = arith.negf %578 : vector<2x16xf32>
    %580 = math.exp %579 : vector<2x16xf32>
    %cst_116 = arith.constant 1.000000e+00 : f32
    %581 = vector.broadcast %cst_116 : f32 to vector<2x16xf32>
    %582 = arith.addf %581, %580 : vector<2x16xf32>
    %583 = arith.divf %581, %582 : vector<2x16xf32>
    %584 = arith.mulf %575, %528 : vector<2x16xf32>
    %585 = arith.mulf %569, %577 : vector<2x16xf32>
    %586 = arith.addf %584, %585 : vector<2x16xf32>
    %587 = math.tanh %586 : vector<2x16xf32>
    %588 = arith.mulf %583, %587 : vector<2x16xf32>
    %589 = vector.broadcast %534 : vector<2x1xf32> to vector<2x16xf32>
    %590 = arith.mulf %589, %588 : vector<2x16xf32>
    %cst_117 = arith.constant 1.000000e+00 : f32
    %591 = vector.broadcast %cst_117 : f32 to vector<2x1xf32>
    %592 = arith.subf %591, %534 : vector<2x1xf32>
    %593 = vector.broadcast %592 : vector<2x1xf32> to vector<2x16xf32>
    %594 = arith.mulf %593, %521 : vector<2x16xf32>
    %595 = arith.addf %590, %594 : vector<2x16xf32>
    %c14_118 = arith.constant 14 : index
    %c0_119 = arith.constant 0 : index
    %596 = vector.load %arg13[%c14_118, %c0_119] : memref<16x16xf32, #tpu.memory_space<vmem>>, vector<2x16xf32>
    tpu.vector_store %arg13[%c14_118, %c0_119], %561 {strides = array<i32>} : memref<16x16xf32, #tpu.memory_space<vmem>>, vector<2x16xf32>,
    %c0_120 = arith.constant 0 : index
    %c0_121 = arith.constant 0 : index
    %597 = vector.load %arg14[%c0_120, %c0_121] : memref<16x16xf32, #tpu.memory_space<vmem>>, vector<2x16xf32>
    tpu.vector_store %arg14[%c0_120, %c0_121], %595 {strides = array<i32>} : memref<16x16xf32, #tpu.memory_space<vmem>>, vector<2x16xf32>,
    %c0_122 = arith.constant 0 : index
    %c0_123 = arith.constant 0 : index
    %598 = vector.load %arg13[%c0_122, %c0_123] : memref<16x16xf32, #tpu.memory_space<vmem>>, vector<16x16xf32>
    %c0_124 = arith.constant 0 : index
    %c0_125 = arith.constant 0 : index
    %599 = vector.load %arg6[%c0_124, %c0_125] : memref<16x8xf32, #tpu.memory_space<vmem>>, vector<16x8xf32>
    %cst_126 = arith.constant dense<0.000000e+00> : vector<16x8xf32>
    %600 = tpu.matmul %598, %599, %cst_126 {dimension_numbers = #tpu.dot_dimension_numbers<[1], [0], [0], [1], [0, 0, 1, 1], [], []>} : vector<16x16xf32>, vector<16x8xf32>, vector<16x8xf32> -> vector<16x8xf32>
    %c0_127 = arith.constant 0 : index
    %c0_128 = arith.constant 0 : index
    %601 = vector.load %arg14[%c0_127, %c0_128] : memref<16x16xf32, #tpu.memory_space<vmem>>, vector<16x16xf32>
    %c0_129 = arith.constant 0 : index
    %c0_130 = arith.constant 0 : index
    %602 = vector.load %arg7[%c0_129, %c0_130] : memref<16x8xf32, #tpu.memory_space<vmem>>, vector<16x8xf32>
    %cst_131 = arith.constant dense<0.000000e+00> : vector<16x8xf32>
    %603 = tpu.matmul %601, %602, %cst_131 {dimension_numbers = #tpu.dot_dimension_numbers<[1], [0], [0], [1], [0, 0, 1, 1], [], []>} : vector<16x16xf32>, vector<16x8xf32>, vector<16x8xf32> -> vector<16x8xf32>
    %604 = arith.addf %600, %603 : vector<16x8xf32>
    %c0_132 = arith.constant 0 : index
    %c0_133 = arith.constant 0 : index
    %605 = vector.load %arg8[%c0_132, %c0_133] : memref<1x8xf32, #tpu.memory_space<vmem>>, vector<1x8xf32>
    %606 = vector.broadcast %605 : vector<1x8xf32> to vector<16x8xf32>
    %607 = arith.addf %604, %606 : vector<16x8xf32>
    %608 = tpu.iota {dimensions = array<i32: 1>} : vector<2x8xi32>
    %c2_i32 = arith.constant 2 : i32
    %609 = vector.broadcast %c2_i32 : i32 to vector<2x8xi32>
    %610 = arith.cmpi eq, %608, %609 : vector<2x8xi32>
    %cst_134 = arith.constant 0.000000e+00 : f32
    %cst_135 = arith.constant -1.000000e+04 : f32
    %611 = vector.broadcast %cst_134 : f32 to vector<2x8xf32>
    %612 = vector.broadcast %cst_135 : f32 to vector<2x8xf32>
    %613 = arith.select %610, %611, %612 : vector<2x8xi1>, vector<2x8xf32>
    %cst_136 = arith.constant 0.000000e+00 : f32
    %614 = vector.broadcast %cst_136 : f32 to vector<2x1xf32>
    %615 = vector.extract_strided_slice %4 {offsets = [0, 0, 0], sizes = [1, 2, 1], strides = [1, 1, 1]} : vector<8x2x1xf32> to vector<1x2x1xf32>
    %616 = vector.shape_cast %615 : vector<1x2x1xf32> to vector<2x1xf32>
    %617 = vector.extract_strided_slice %607 {offsets = [0, 0], sizes = [2, 8], strides = [1, 1]} : vector<16x8xf32> to vector<2x8xf32>
    %618 = vector.broadcast %616 : vector<2x1xf32> to vector<2x8xf32>
    %619 = arith.mulf %617, %618 : vector<2x8xf32>
    %620 = vector.shape_cast %613 : vector<2x8xf32> to vector<2x1x8xf32>
    %621 = vector.broadcast %620 : vector<2x1x8xf32> to vector<2x8x8xf32>
    %622 = vector.broadcast %3 : vector<1x8x8xf32> to vector<2x8x8xf32>
    %623 = arith.addf %621, %622 : vector<2x8x8xf32>
    %cst_137 = arith.constant dense<0xFF800000> : vector<2x8xf32>
    %624 = vector.multi_reduction <maximumf>, %623, %cst_137 [2] : vector<2x8x8xf32> to vector<2x8xf32>
    %625 = vector.shape_cast %624 : vector<2x8xf32> to vector<2x8x1xf32>
    %626 = vector.broadcast %625 : vector<2x8x1xf32> to vector<2x8x8xf32>
    %627 = arith.subf %623, %626 : vector<2x8x8xf32>
    %628 = math.exp %627 : vector<2x8x8xf32>
    %cst_138 = arith.constant dense<0.000000e+00> : vector<2x8xf32>
    %629 = vector.multi_reduction <add>, %628, %cst_138 [2] : vector<2x8x8xf32> to vector<2x8xf32>
    %630 = math.log %629 : vector<2x8xf32>
    %631 = arith.addf %624, %630 : vector<2x8xf32>
    %632 = arith.addf %619, %631 : vector<2x8xf32>
    %633 = vector.broadcast %616 : vector<2x1xf32> to vector<2x8xf32>
    %634 = arith.mulf %632, %633 : vector<2x8xf32>
    %cst_139 = arith.constant 1.000000e+00 : f32
    %635 = vector.broadcast %cst_139 : f32 to vector<2x1xf32>
    %636 = arith.subf %635, %616 : vector<2x1xf32>
    %637 = vector.broadcast %636 : vector<2x1xf32> to vector<2x8xf32>
    %638 = arith.mulf %613, %637 : vector<2x8xf32>
    %639 = arith.addf %634, %638 : vector<2x8xf32>
    %640 = vector.extract_strided_slice %5 {offsets = [0, 0, 0], sizes = [1, 2, 8], strides = [1, 1, 1]} : vector<8x2x8xf32> to vector<1x2x8xf32>
    %641 = vector.shape_cast %640 : vector<1x2x8xf32> to vector<2x8xf32>
    %642 = arith.mulf %619, %641 : vector<2x8xf32>
    %cst_140 = arith.constant dense<0.000000e+00> : vector<2xf32>
    %643 = vector.multi_reduction <add>, %642, %cst_140 [1] : vector<2x8xf32> to vector<2xf32>
    %644 = vector.shape_cast %643 : vector<2xf32> to vector<2x1xf32>
    %645 = arith.addf %614, %644 : vector<2x1xf32>
    %646 = vector.extract_strided_slice %4 {offsets = [1, 0, 0], sizes = [1, 2, 1], strides = [1, 1, 1]} : vector<8x2x1xf32> to vector<1x2x1xf32>
    %647 = vector.shape_cast %646 : vector<1x2x1xf32> to vector<2x1xf32>
    %648 = vector.extract_strided_slice %607 {offsets = [2, 0], sizes = [2, 8], strides = [1, 1]} : vector<16x8xf32> to vector<2x8xf32>
    %649 = vector.broadcast %647 : vector<2x1xf32> to vector<2x8xf32>
    %650 = arith.mulf %648, %649 : vector<2x8xf32>
    %651 = vector.shape_cast %639 : vector<2x8xf32> to vector<2x1x8xf32>
    %652 = vector.broadcast %651 : vector<2x1x8xf32> to vector<2x8x8xf32>
    %653 = vector.broadcast %3 : vector<1x8x8xf32> to vector<2x8x8xf32>
    %654 = arith.addf %652, %653 : vector<2x8x8xf32>
    %cst_141 = arith.constant dense<0xFF800000> : vector<2x8xf32>
    %655 = vector.multi_reduction <maximumf>, %654, %cst_141 [2] : vector<2x8x8xf32> to vector<2x8xf32>
    %656 = vector.shape_cast %655 : vector<2x8xf32> to vector<2x8x1xf32>
    %657 = vector.broadcast %656 : vector<2x8x1xf32> to vector<2x8x8xf32>
    %658 = arith.subf %654, %657 : vector<2x8x8xf32>
    %659 = math.exp %658 : vector<2x8x8xf32>
    %cst_142 = arith.constant dense<0.000000e+00> : vector<2x8xf32>
    %660 = vector.multi_reduction <add>, %659, %cst_142 [2] : vector<2x8x8xf32> to vector<2x8xf32>
    %661 = math.log %660 : vector<2x8xf32>
    %662 = arith.addf %655, %661 : vector<2x8xf32>
    %663 = arith.addf %650, %662 : vector<2x8xf32>
    %664 = vector.broadcast %647 : vector<2x1xf32> to vector<2x8xf32>
    %665 = arith.mulf %663, %664 : vector<2x8xf32>
    %cst_143 = arith.constant 1.000000e+00 : f32
    %666 = vector.broadcast %cst_143 : f32 to vector<2x1xf32>
    %667 = arith.subf %666, %647 : vector<2x1xf32>
    %668 = vector.broadcast %667 : vector<2x1xf32> to vector<2x8xf32>
    %669 = arith.mulf %639, %668 : vector<2x8xf32>
    %670 = arith.addf %665, %669 : vector<2x8xf32>
    %671 = vector.extract_strided_slice %5 {offsets = [1, 0, 0], sizes = [1, 2, 8], strides = [1, 1, 1]} : vector<8x2x8xf32> to vector<1x2x8xf32>
    %672 = vector.shape_cast %671 : vector<1x2x8xf32> to vector<2x8xf32>
    %673 = arith.mulf %650, %672 : vector<2x8xf32>
    %cst_144 = arith.constant dense<0.000000e+00> : vector<2xf32>
    %674 = vector.multi_reduction <add>, %673, %cst_144 [1] : vector<2x8xf32> to vector<2xf32>
    %675 = vector.shape_cast %674 : vector<2xf32> to vector<2x1xf32>
    %676 = arith.addf %645, %675 : vector<2x1xf32>
    %677 = vector.extract_strided_slice %4 {offsets = [2, 0, 0], sizes = [1, 2, 1], strides = [1, 1, 1]} : vector<8x2x1xf32> to vector<1x2x1xf32>
    %678 = vector.shape_cast %677 : vector<1x2x1xf32> to vector<2x1xf32>
    %679 = vector.extract_strided_slice %607 {offsets = [4, 0], sizes = [2, 8], strides = [1, 1]} : vector<16x8xf32> to vector<2x8xf32>
    %680 = vector.broadcast %678 : vector<2x1xf32> to vector<2x8xf32>
    %681 = arith.mulf %679, %680 : vector<2x8xf32>
    %682 = vector.shape_cast %670 : vector<2x8xf32> to vector<2x1x8xf32>
    %683 = vector.broadcast %682 : vector<2x1x8xf32> to vector<2x8x8xf32>
    %684 = vector.broadcast %3 : vector<1x8x8xf32> to vector<2x8x8xf32>
    %685 = arith.addf %683, %684 : vector<2x8x8xf32>
    %cst_145 = arith.constant dense<0xFF800000> : vector<2x8xf32>
    %686 = vector.multi_reduction <maximumf>, %685, %cst_145 [2] : vector<2x8x8xf32> to vector<2x8xf32>
    %687 = vector.shape_cast %686 : vector<2x8xf32> to vector<2x8x1xf32>
    %688 = vector.broadcast %687 : vector<2x8x1xf32> to vector<2x8x8xf32>
    %689 = arith.subf %685, %688 : vector<2x8x8xf32>
    %690 = math.exp %689 : vector<2x8x8xf32>
    %cst_146 = arith.constant dense<0.000000e+00> : vector<2x8xf32>
    %691 = vector.multi_reduction <add>, %690, %cst_146 [2] : vector<2x8x8xf32> to vector<2x8xf32>
    %692 = math.log %691 : vector<2x8xf32>
    %693 = arith.addf %686, %692 : vector<2x8xf32>
    %694 = arith.addf %681, %693 : vector<2x8xf32>
    %695 = vector.broadcast %678 : vector<2x1xf32> to vector<2x8xf32>
    %696 = arith.mulf %694, %695 : vector<2x8xf32>
    %cst_147 = arith.constant 1.000000e+00 : f32
    %697 = vector.broadcast %cst_147 : f32 to vector<2x1xf32>
    %698 = arith.subf %697, %678 : vector<2x1xf32>
    %699 = vector.broadcast %698 : vector<2x1xf32> to vector<2x8xf32>
    %700 = arith.mulf %670, %699 : vector<2x8xf32>
    %701 = arith.addf %696, %700 : vector<2x8xf32>
    %702 = vector.extract_strided_slice %5 {offsets = [2, 0, 0], sizes = [1, 2, 8], strides = [1, 1, 1]} : vector<8x2x8xf32> to vector<1x2x8xf32>
    %703 = vector.shape_cast %702 : vector<1x2x8xf32> to vector<2x8xf32>
    %704 = arith.mulf %681, %703 : vector<2x8xf32>
    %cst_148 = arith.constant dense<0.000000e+00> : vector<2xf32>
    %705 = vector.multi_reduction <add>, %704, %cst_148 [1] : vector<2x8xf32> to vector<2xf32>
    %706 = vector.shape_cast %705 : vector<2xf32> to vector<2x1xf32>
    %707 = arith.addf %676, %706 : vector<2x1xf32>
    %708 = vector.extract_strided_slice %4 {offsets = [3, 0, 0], sizes = [1, 2, 1], strides = [1, 1, 1]} : vector<8x2x1xf32> to vector<1x2x1xf32>
    %709 = vector.shape_cast %708 : vector<1x2x1xf32> to vector<2x1xf32>
    %710 = vector.extract_strided_slice %607 {offsets = [6, 0], sizes = [2, 8], strides = [1, 1]} : vector<16x8xf32> to vector<2x8xf32>
    %711 = vector.broadcast %709 : vector<2x1xf32> to vector<2x8xf32>
    %712 = arith.mulf %710, %711 : vector<2x8xf32>
    %713 = vector.shape_cast %701 : vector<2x8xf32> to vector<2x1x8xf32>
    %714 = vector.broadcast %713 : vector<2x1x8xf32> to vector<2x8x8xf32>
    %715 = vector.broadcast %3 : vector<1x8x8xf32> to vector<2x8x8xf32>
    %716 = arith.addf %714, %715 : vector<2x8x8xf32>
    %cst_149 = arith.constant dense<0xFF800000> : vector<2x8xf32>
    %717 = vector.multi_reduction <maximumf>, %716, %cst_149 [2] : vector<2x8x8xf32> to vector<2x8xf32>
    %718 = vector.shape_cast %717 : vector<2x8xf32> to vector<2x8x1xf32>
    %719 = vector.broadcast %718 : vector<2x8x1xf32> to vector<2x8x8xf32>
    %720 = arith.subf %716, %719 : vector<2x8x8xf32>
    %721 = math.exp %720 : vector<2x8x8xf32>
    %cst_150 = arith.constant dense<0.000000e+00> : vector<2x8xf32>
    %722 = vector.multi_reduction <add>, %721, %cst_150 [2] : vector<2x8x8xf32> to vector<2x8xf32>
    %723 = math.log %722 : vector<2x8xf32>
    %724 = arith.addf %717, %723 : vector<2x8xf32>
    %725 = arith.addf %712, %724 : vector<2x8xf32>
    %726 = vector.broadcast %709 : vector<2x1xf32> to vector<2x8xf32>
    %727 = arith.mulf %725, %726 : vector<2x8xf32>
    %cst_151 = arith.constant 1.000000e+00 : f32
    %728 = vector.broadcast %cst_151 : f32 to vector<2x1xf32>
    %729 = arith.subf %728, %709 : vector<2x1xf32>
    %730 = vector.broadcast %729 : vector<2x1xf32> to vector<2x8xf32>
    %731 = arith.mulf %701, %730 : vector<2x8xf32>
    %732 = arith.addf %727, %731 : vector<2x8xf32>
    %733 = vector.extract_strided_slice %5 {offsets = [3, 0, 0], sizes = [1, 2, 8], strides = [1, 1, 1]} : vector<8x2x8xf32> to vector<1x2x8xf32>
    %734 = vector.shape_cast %733 : vector<1x2x8xf32> to vector<2x8xf32>
    %735 = arith.mulf %712, %734 : vector<2x8xf32>
    %cst_152 = arith.constant dense<0.000000e+00> : vector<2xf32>
    %736 = vector.multi_reduction <add>, %735, %cst_152 [1] : vector<2x8xf32> to vector<2xf32>
    %737 = vector.shape_cast %736 : vector<2xf32> to vector<2x1xf32>
    %738 = arith.addf %707, %737 : vector<2x1xf32>
    %739 = vector.extract_strided_slice %4 {offsets = [4, 0, 0], sizes = [1, 2, 1], strides = [1, 1, 1]} : vector<8x2x1xf32> to vector<1x2x1xf32>
    %740 = vector.shape_cast %739 : vector<1x2x1xf32> to vector<2x1xf32>
    %741 = vector.extract_strided_slice %607 {offsets = [8, 0], sizes = [2, 8], strides = [1, 1]} : vector<16x8xf32> to vector<2x8xf32>
    %742 = vector.broadcast %740 : vector<2x1xf32> to vector<2x8xf32>
    %743 = arith.mulf %741, %742 : vector<2x8xf32>
    %744 = vector.shape_cast %732 : vector<2x8xf32> to vector<2x1x8xf32>
    %745 = vector.broadcast %744 : vector<2x1x8xf32> to vector<2x8x8xf32>
    %746 = vector.broadcast %3 : vector<1x8x8xf32> to vector<2x8x8xf32>
    %747 = arith.addf %745, %746 : vector<2x8x8xf32>
    %cst_153 = arith.constant dense<0xFF800000> : vector<2x8xf32>
    %748 = vector.multi_reduction <maximumf>, %747, %cst_153 [2] : vector<2x8x8xf32> to vector<2x8xf32>
    %749 = vector.shape_cast %748 : vector<2x8xf32> to vector<2x8x1xf32>
    %750 = vector.broadcast %749 : vector<2x8x1xf32> to vector<2x8x8xf32>
    %751 = arith.subf %747, %750 : vector<2x8x8xf32>
    %752 = math.exp %751 : vector<2x8x8xf32>
    %cst_154 = arith.constant dense<0.000000e+00> : vector<2x8xf32>
    %753 = vector.multi_reduction <add>, %752, %cst_154 [2] : vector<2x8x8xf32> to vector<2x8xf32>
    %754 = math.log %753 : vector<2x8xf32>
    %755 = arith.addf %748, %754 : vector<2x8xf32>
    %756 = arith.addf %743, %755 : vector<2x8xf32>
    %757 = vector.broadcast %740 : vector<2x1xf32> to vector<2x8xf32>
    %758 = arith.mulf %756, %757 : vector<2x8xf32>
    %cst_155 = arith.constant 1.000000e+00 : f32
    %759 = vector.broadcast %cst_155 : f32 to vector<2x1xf32>
    %760 = arith.subf %759, %740 : vector<2x1xf32>
    %761 = vector.broadcast %760 : vector<2x1xf32> to vector<2x8xf32>
    %762 = arith.mulf %732, %761 : vector<2x8xf32>
    %763 = arith.addf %758, %762 : vector<2x8xf32>
    %764 = vector.extract_strided_slice %5 {offsets = [4, 0, 0], sizes = [1, 2, 8], strides = [1, 1, 1]} : vector<8x2x8xf32> to vector<1x2x8xf32>
    %765 = vector.shape_cast %764 : vector<1x2x8xf32> to vector<2x8xf32>
    %766 = arith.mulf %743, %765 : vector<2x8xf32>
    %cst_156 = arith.constant dense<0.000000e+00> : vector<2xf32>
    %767 = vector.multi_reduction <add>, %766, %cst_156 [1] : vector<2x8xf32> to vector<2xf32>
    %768 = vector.shape_cast %767 : vector<2xf32> to vector<2x1xf32>
    %769 = arith.addf %738, %768 : vector<2x1xf32>
    %770 = vector.extract_strided_slice %4 {offsets = [5, 0, 0], sizes = [1, 2, 1], strides = [1, 1, 1]} : vector<8x2x1xf32> to vector<1x2x1xf32>
    %771 = vector.shape_cast %770 : vector<1x2x1xf32> to vector<2x1xf32>
    %772 = vector.extract_strided_slice %607 {offsets = [10, 0], sizes = [2, 8], strides = [1, 1]} : vector<16x8xf32> to vector<2x8xf32>
    %773 = vector.broadcast %771 : vector<2x1xf32> to vector<2x8xf32>
    %774 = arith.mulf %772, %773 : vector<2x8xf32>
    %775 = vector.shape_cast %763 : vector<2x8xf32> to vector<2x1x8xf32>
    %776 = vector.broadcast %775 : vector<2x1x8xf32> to vector<2x8x8xf32>
    %777 = vector.broadcast %3 : vector<1x8x8xf32> to vector<2x8x8xf32>
    %778 = arith.addf %776, %777 : vector<2x8x8xf32>
    %cst_157 = arith.constant dense<0xFF800000> : vector<2x8xf32>
    %779 = vector.multi_reduction <maximumf>, %778, %cst_157 [2] : vector<2x8x8xf32> to vector<2x8xf32>
    %780 = vector.shape_cast %779 : vector<2x8xf32> to vector<2x8x1xf32>
    %781 = vector.broadcast %780 : vector<2x8x1xf32> to vector<2x8x8xf32>
    %782 = arith.subf %778, %781 : vector<2x8x8xf32>
    %783 = math.exp %782 : vector<2x8x8xf32>
    %cst_158 = arith.constant dense<0.000000e+00> : vector<2x8xf32>
    %784 = vector.multi_reduction <add>, %783, %cst_158 [2] : vector<2x8x8xf32> to vector<2x8xf32>
    %785 = math.log %784 : vector<2x8xf32>
    %786 = arith.addf %779, %785 : vector<2x8xf32>
    %787 = arith.addf %774, %786 : vector<2x8xf32>
    %788 = vector.broadcast %771 : vector<2x1xf32> to vector<2x8xf32>
    %789 = arith.mulf %787, %788 : vector<2x8xf32>
    %cst_159 = arith.constant 1.000000e+00 : f32
    %790 = vector.broadcast %cst_159 : f32 to vector<2x1xf32>
    %791 = arith.subf %790, %771 : vector<2x1xf32>
    %792 = vector.broadcast %791 : vector<2x1xf32> to vector<2x8xf32>
    %793 = arith.mulf %763, %792 : vector<2x8xf32>
    %794 = arith.addf %789, %793 : vector<2x8xf32>
    %795 = vector.extract_strided_slice %5 {offsets = [5, 0, 0], sizes = [1, 2, 8], strides = [1, 1, 1]} : vector<8x2x8xf32> to vector<1x2x8xf32>
    %796 = vector.shape_cast %795 : vector<1x2x8xf32> to vector<2x8xf32>
    %797 = arith.mulf %774, %796 : vector<2x8xf32>
    %cst_160 = arith.constant dense<0.000000e+00> : vector<2xf32>
    %798 = vector.multi_reduction <add>, %797, %cst_160 [1] : vector<2x8xf32> to vector<2xf32>
    %799 = vector.shape_cast %798 : vector<2xf32> to vector<2x1xf32>
    %800 = arith.addf %769, %799 : vector<2x1xf32>
    %801 = vector.extract_strided_slice %4 {offsets = [6, 0, 0], sizes = [1, 2, 1], strides = [1, 1, 1]} : vector<8x2x1xf32> to vector<1x2x1xf32>
    %802 = vector.shape_cast %801 : vector<1x2x1xf32> to vector<2x1xf32>
    %803 = vector.extract_strided_slice %607 {offsets = [12, 0], sizes = [2, 8], strides = [1, 1]} : vector<16x8xf32> to vector<2x8xf32>
    %804 = vector.broadcast %802 : vector<2x1xf32> to vector<2x8xf32>
    %805 = arith.mulf %803, %804 : vector<2x8xf32>
    %806 = vector.shape_cast %794 : vector<2x8xf32> to vector<2x1x8xf32>
    %807 = vector.broadcast %806 : vector<2x1x8xf32> to vector<2x8x8xf32>
    %808 = vector.broadcast %3 : vector<1x8x8xf32> to vector<2x8x8xf32>
    %809 = arith.addf %807, %808 : vector<2x8x8xf32>
    %cst_161 = arith.constant dense<0xFF800000> : vector<2x8xf32>
    %810 = vector.multi_reduction <maximumf>, %809, %cst_161 [2] : vector<2x8x8xf32> to vector<2x8xf32>
    %811 = vector.shape_cast %810 : vector<2x8xf32> to vector<2x8x1xf32>
    %812 = vector.broadcast %811 : vector<2x8x1xf32> to vector<2x8x8xf32>
    %813 = arith.subf %809, %812 : vector<2x8x8xf32>
    %814 = math.exp %813 : vector<2x8x8xf32>
    %cst_162 = arith.constant dense<0.000000e+00> : vector<2x8xf32>
    %815 = vector.multi_reduction <add>, %814, %cst_162 [2] : vector<2x8x8xf32> to vector<2x8xf32>
    %816 = math.log %815 : vector<2x8xf32>
    %817 = arith.addf %810, %816 : vector<2x8xf32>
    %818 = arith.addf %805, %817 : vector<2x8xf32>
    %819 = vector.broadcast %802 : vector<2x1xf32> to vector<2x8xf32>
    %820 = arith.mulf %818, %819 : vector<2x8xf32>
    %cst_163 = arith.constant 1.000000e+00 : f32
    %821 = vector.broadcast %cst_163 : f32 to vector<2x1xf32>
    %822 = arith.subf %821, %802 : vector<2x1xf32>
    %823 = vector.broadcast %822 : vector<2x1xf32> to vector<2x8xf32>
    %824 = arith.mulf %794, %823 : vector<2x8xf32>
    %825 = arith.addf %820, %824 : vector<2x8xf32>
    %826 = vector.extract_strided_slice %5 {offsets = [6, 0, 0], sizes = [1, 2, 8], strides = [1, 1, 1]} : vector<8x2x8xf32> to vector<1x2x8xf32>
    %827 = vector.shape_cast %826 : vector<1x2x8xf32> to vector<2x8xf32>
    %828 = arith.mulf %805, %827 : vector<2x8xf32>
    %cst_164 = arith.constant dense<0.000000e+00> : vector<2xf32>
    %829 = vector.multi_reduction <add>, %828, %cst_164 [1] : vector<2x8xf32> to vector<2xf32>
    %830 = vector.shape_cast %829 : vector<2xf32> to vector<2x1xf32>
    %831 = arith.addf %800, %830 : vector<2x1xf32>
    %832 = vector.extract_strided_slice %4 {offsets = [7, 0, 0], sizes = [1, 2, 1], strides = [1, 1, 1]} : vector<8x2x1xf32> to vector<1x2x1xf32>
    %833 = vector.shape_cast %832 : vector<1x2x1xf32> to vector<2x1xf32>
    %834 = vector.extract_strided_slice %607 {offsets = [14, 0], sizes = [2, 8], strides = [1, 1]} : vector<16x8xf32> to vector<2x8xf32>
    %835 = vector.broadcast %833 : vector<2x1xf32> to vector<2x8xf32>
    %836 = arith.mulf %834, %835 : vector<2x8xf32>
    %837 = vector.shape_cast %825 : vector<2x8xf32> to vector<2x1x8xf32>
    %838 = vector.broadcast %837 : vector<2x1x8xf32> to vector<2x8x8xf32>
    %839 = vector.broadcast %3 : vector<1x8x8xf32> to vector<2x8x8xf32>
    %840 = arith.addf %838, %839 : vector<2x8x8xf32>
    %cst_165 = arith.constant dense<0xFF800000> : vector<2x8xf32>
    %841 = vector.multi_reduction <maximumf>, %840, %cst_165 [2] : vector<2x8x8xf32> to vector<2x8xf32>
    %842 = vector.shape_cast %841 : vector<2x8xf32> to vector<2x8x1xf32>
    %843 = vector.broadcast %842 : vector<2x8x1xf32> to vector<2x8x8xf32>
    %844 = arith.subf %840, %843 : vector<2x8x8xf32>
    %845 = math.exp %844 : vector<2x8x8xf32>
    %cst_166 = arith.constant dense<0.000000e+00> : vector<2x8xf32>
    %846 = vector.multi_reduction <add>, %845, %cst_166 [2] : vector<2x8x8xf32> to vector<2x8xf32>
    %847 = math.log %846 : vector<2x8xf32>
    %848 = arith.addf %841, %847 : vector<2x8xf32>
    %849 = arith.addf %836, %848 : vector<2x8xf32>
    %850 = vector.broadcast %833 : vector<2x1xf32> to vector<2x8xf32>
    %851 = arith.mulf %849, %850 : vector<2x8xf32>
    %cst_167 = arith.constant 1.000000e+00 : f32
    %852 = vector.broadcast %cst_167 : f32 to vector<2x1xf32>
    %853 = arith.subf %852, %833 : vector<2x1xf32>
    %854 = vector.broadcast %853 : vector<2x1xf32> to vector<2x8xf32>
    %855 = arith.mulf %825, %854 : vector<2x8xf32>
    %856 = arith.addf %851, %855 : vector<2x8xf32>
    %857 = vector.extract_strided_slice %5 {offsets = [7, 0, 0], sizes = [1, 2, 8], strides = [1, 1, 1]} : vector<8x2x8xf32> to vector<1x2x8xf32>
    %858 = vector.shape_cast %857 : vector<1x2x8xf32> to vector<2x8xf32>
    %859 = arith.mulf %836, %858 : vector<2x8xf32>
    %cst_168 = arith.constant dense<0.000000e+00> : vector<2xf32>
    %860 = vector.multi_reduction <add>, %859, %cst_168 [1] : vector<2x8xf32> to vector<2xf32>
    %861 = vector.shape_cast %860 : vector<2xf32> to vector<2x1xf32>
    %862 = arith.addf %831, %861 : vector<2x1xf32>
    %cst_169 = arith.constant dense<0xFF800000> : vector<2xf32>
    %863 = vector.multi_reduction <maximumf>, %856, %cst_169 [1] : vector<2x8xf32> to vector<2xf32>
    %864 = vector.shape_cast %863 : vector<2xf32> to vector<2x1xf32>
    %865 = vector.broadcast %864 : vector<2x1xf32> to vector<2x8xf32>
    %866 = arith.subf %856, %865 : vector<2x8xf32>
    %867 = math.exp %866 : vector<2x8xf32>
    %cst_170 = arith.constant dense<0.000000e+00> : vector<2xf32>
    %868 = vector.multi_reduction <add>, %867, %cst_170 [1] : vector<2x8xf32> to vector<2xf32>
    %869 = vector.shape_cast %868 : vector<2xf32> to vector<2x1xf32>
    %870 = math.log %869 : vector<2x1xf32>
    %871 = arith.addf %864, %870 : vector<2x1xf32>
    %872 = arith.subf %871, %862 : vector<2x1xf32>
    %c0_171 = arith.constant 0 : index
    %c0_172 = arith.constant 0 : index
    %873 = vector.load %arg11[%c0_171, %c0_172] : memref<2x1xf32, #tpu.memory_space<vmem>>, vector<2x1xf32>
    %874 = arith.subf %872, %873 : vector<2x1xf32>
    %c0_173 = arith.constant 0 : index
    %c0_174 = arith.constant 0 : index
    %875 = vector.load %arg12[%c0_173, %c0_174] : memref<2x1xf32, #tpu.memory_space<vmem>>, vector<2x1xf32>
    tpu.vector_store %arg12[%c0_173, %c0_174], %874 {strides = array<i32>} : memref<2x1xf32, #tpu.memory_space<vmem>>, vector<2x1xf32>,
    return
  }
}

</mosaic_0001>

<llo_original>
// kernel: lstm_crf_forward.1
$region0: #{lstm_crf_forward.1}
  #allocation0 [shape = 'u32[]', space=smem, size = 0x4, offset = 0x4, fixed_abs, tag = 'smem constant byte address 0x4 - core index']
  #allocation1 [shape = 'u32[144,128]{1,0:T(1,128)}', space=vmem, size = 0x12000, scoped, tag = 'internal scratch']
  #allocation2 [shape = 'f32[16,16]{1,0:T(8,128)}', space=vmem, size = 0x2000, scoped, tag = 'scratch operand']
  #allocation3 [shape = 'f32[16,16]{1,0:T(8,128)}', space=vmem, size = 0x2000, scoped, tag = 'scratch operand']
  %s0 = inlined_call_operand.vmem [shape: f32[16,17], index: 0, kind: input, shape index: {}]
  %s1 = inlined_call_operand.vmem [shape: f32[8,2,1], index: 1, kind: input, shape index: {}]
  %s2 = inlined_call_operand.vmem [shape: f32[17,128], index: 2, kind: input, shape index: {}]
  %s3 = inlined_call_operand.vmem [shape: f32[1,128], index: 3, kind: input, shape index: {}]
  %s4 = inlined_call_operand.vmem [shape: f32[16,64], index: 4, kind: input, shape index: {}]
  %s5 = inlined_call_operand.vmem [shape: f32[16,64], index: 5, kind: input, shape index: {}]
  %s6 = inlined_call_operand.vmem [shape: f32[16,8], index: 6, kind: input, shape index: {}]
  %s7 = inlined_call_operand.vmem [shape: f32[16,8], index: 7, kind: input, shape index: {}]
  %s8 = inlined_call_operand.vmem [shape: f32[1,8], index: 8, kind: input, shape index: {}]
  %s9 = inlined_call_operand.vmem [shape: f32[8,8], index: 9, kind: input, shape index: {}]
  %s10 = inlined_call_operand.vmem [shape: f32[8,2,8], index: 10, kind: input, shape index: {}]
  %s11 = inlined_call_operand.vmem [shape: f32[2,1], index: 11, kind: input, shape index: {}]
  %s12 = inlined_call_operand.vmem [shape: f32[2,1], index: 12, kind: output, shape index: {}]
  %s13 = sld [smem:[#allocation0]]
  $region58: #{lstm_crf_forward.1} parent=0
    _
  %s15 = ssub.s32 1, %s13
  %s16 = scalar_select 0, %s15, %s13
  // Predicated region
  $region2: #{lstm_crf_forward.1} parent=0 // pred_check
    _
  $region3: #{lstm_crf_forward.1} parent=0 // pred_check_branch
    %18 = sbr.rel (0) target = $region5
  $region4: #{lstm_crf_forward.1} parent=0 // pred_region
    _
  $region5: #{lstm_crf_forward.1} parent=0 // pred_fallthru
    _
  // Predicated region
  $region6: #{lstm_crf_forward.1} parent=0 // pred_check
    _
  $region7: #{lstm_crf_forward.1} parent=0 // pred_check_branch
    %20 = sbr.rel (0) target = $region9
  $region8: #{lstm_crf_forward.1} parent=0 // pred_region
    _
  $region9: #{lstm_crf_forward.1} parent=0 // pred_fallthru
    _
  // Predicated region
  $region10: #{lstm_crf_forward.1} parent=0 // pred_check
    _
  $region11: #{lstm_crf_forward.1} parent=0 // pred_check_branch
    %22 = sbr.rel (0) target = $region13
  $region12: #{lstm_crf_forward.1} parent=0 // pred_region
    _
  $region13: #{lstm_crf_forward.1} parent=0 // pred_fallthru
    _
  // Predicated region
  $region14: #{lstm_crf_forward.1} parent=0 // pred_check
    _
  $region15: #{lstm_crf_forward.1} parent=0 // pred_check_branch
    %24 = sbr.rel (0) target = $region17
  $region16: #{lstm_crf_forward.1} parent=0 // pred_region
    _
  $region17: #{lstm_crf_forward.1} parent=0 // pred_fallthru
    _
  // Predicated region
  $region18: #{lstm_crf_forward.1} parent=0 // pred_check
    _
  $region19: #{lstm_crf_forward.1} parent=0 // pred_check_branch
    %26 = sbr.rel (0) target = $region21
  $region20: #{lstm_crf_forward.1} parent=0 // pred_region
    _
  $region21: #{lstm_crf_forward.1} parent=0 // pred_fallthru
    _
  // Predicated region
  $region22: #{lstm_crf_forward.1} parent=0 // pred_check
    _
  $region23: #{lstm_crf_forward.1} parent=0 // pred_check_branch
    %28 = sbr.rel (0) target = $region25
  $region24: #{lstm_crf_forward.1} parent=0 // pred_region
    _
  $region25: #{lstm_crf_forward.1} parent=0 // pred_fallthru
    _
  // Predicated region
  $region26: #{lstm_crf_forward.1} parent=0 // pred_check
    _
  $region27: #{lstm_crf_forward.1} parent=0 // pred_check_branch
    %30 = sbr.rel (0) target = $region29
  $region28: #{lstm_crf_forward.1} parent=0 // pred_region
    _
  $region29: #{lstm_crf_forward.1} parent=0 // pred_fallthru
    _
  // Predicated region
  $region30: #{lstm_crf_forward.1} parent=0 // pred_check
    _
  $region31: #{lstm_crf_forward.1} parent=0 // pred_check_branch
    %32 = sbr.rel (0) target = $region33
  $region32: #{lstm_crf_forward.1} parent=0 // pred_region
    _
  $region33: #{lstm_crf_forward.1} parent=0 // pred_fallthru
    _
  // Predicated region
  $region34: #{lstm_crf_forward.1} parent=0 // pred_check
    _
  $region35: #{lstm_crf_forward.1} parent=0 // pred_check_branch
    %34 = sbr.rel (0) target = $region37
  $region36: #{lstm_crf_forward.1} parent=0 // pred_region
    _
  $region37: #{lstm_crf_forward.1} parent=0 // pred_fallthru
    _
  // Predicated region
  $region38: #{lstm_crf_forward.1} parent=0 // pred_check
    _
  $region39: #{lstm_crf_forward.1} parent=0 // pred_check_branch
    %36 = sbr.rel (0) target = $region41
  $region40: #{lstm_crf_forward.1} parent=0 // pred_region
    _
  $region41: #{lstm_crf_forward.1} parent=0 // pred_fallthru
    _
  // Predicated region
  $region42: #{lstm_crf_forward.1} parent=0 // pred_check
    _
  $region43: #{lstm_crf_forward.1} parent=0 // pred_check_branch
    %38 = sbr.rel (0) target = $region45
  $region44: #{lstm_crf_forward.1} parent=0 // pred_region
    _
  $region45: #{lstm_crf_forward.1} parent=0 // pred_fallthru
    _
  // Predicated region
  $region46: #{lstm_crf_forward.1} parent=0 // pred_check
    _
  $region47: #{lstm_crf_forward.1} parent=0 // pred_check_branch
    %40 = sbr.rel (0) target = $region49
  $region48: #{lstm_crf_forward.1} parent=0 // pred_region
    _
  $region49: #{lstm_crf_forward.1} parent=0 // pred_fallthru
    _
  %v41 = vld [vmem:[%s4] sm:$0xff]
  %v42 = vld [vmem:[%s4 + $0x8] sm:$0xff]
  %v43 = vld [vmem:[%s5] sm:$0xff]
  %v44 = vld [vmem:[%s5 + $0x8] sm:$0xff]
  %v45 = vld [vmem:[%s9] sm:$0xff]
  %v46 = vld [vmem:[%s1] sm:$0x3]
  %v47 = vld [vmem:[%s1 + $0x2] sm:$0x3]
  %v48 = vld [vmem:[%s1 + $0x4] sm:$0x3]
  %v49 = vld [vmem:[%s1 + $0x6] sm:$0x3]
  %v50 = vld [vmem:[%s1 + $0x8] sm:$0x3]
  %v51 = vld [vmem:[%s1 + $0xa] sm:$0x3]
  %v52 = vld [vmem:[%s1 + $0xc] sm:$0x3]
  %v53 = vld [vmem:[%s1 + $0xe] sm:$0x3]
  %v54 = vld [vmem:[%s10] sm:$0x3]
  %v55 = vld [vmem:[%s10 + $0x2] sm:$0x3]
  %v56 = vld [vmem:[%s10 + $0x4] sm:$0x3]
  %v57 = vld [vmem:[%s10 + $0x6] sm:$0x3]
  %v58 = vld [vmem:[%s10 + $0x8] sm:$0x3]
  %v59 = vld [vmem:[%s10 + $0xa] sm:$0x3]
  %v60 = vld [vmem:[%s10 + $0xc] sm:$0x3]
  %v61 = vld [vmem:[%s10 + $0xe] sm:$0x3]
  %v62 = vld [vmem:[%s0] sm:$0xff]
  %v63 = vld [vmem:[%s0 + $0x8] sm:$0xff]
  %v64 = vld [vmem:[%s2] sm:$0xff]
  %v65 = vld [vmem:[%s2 + $0x8] sm:$0xff]
  %v66 = vld [vmem:[%s2 + $0x10] sm:$0x1]
  %v67 = vld [vmem:[%s3] sm:$0x1]
  %v69 = vlaneseq
  %v70 = vshrl.u32 %v69, 7
  %v71 = vsub.s32 0, %v70
  %v72 = vrot.slane %v67, %v71
  %vm74 = vcmask 138240
  %v76 = vsel %vm74, %v62, 0
  %v79 = vsel %vm74, %v63, 0
  %vm81 = vcmask 1040384
  %v83 = vsel %vm81, %v66, 0
  %85 = vmatprep.subr.mxu0 0.0
  %86 = vmatpush1.msra.mxu0 %v64
  %87 = vmatprep.subr.mxu0 0.0
  %88 = vmatpush1.msra.mxu0 %v65
  %89 = vmatprep.subr.mxu0 0.0
  %90 = vmatpush1.msra.mxu0 %v83
  %91 = vmatprep.subr.mxu0 0.0
  %92 = vmatpush1.msra.mxu0 0.0
  %93 = vmatprep.subr.mxu0 0.0
  %94 = vmatpush1.msra.mxu0 0.0
  %95 = vmatprep.subr.mxu0 0.0
  %96 = vmatpush1.msra.mxu0 0.0
  %97 = vmatprep.subr.mxu0 0.0
  %98 = vmatpush1.msra.mxu0 0.0
  %99 = vmatprep.subr.mxu0 0.0
  %100 = vmatpush1.msra.mxu0 0.0
  %101 = vmatprep.subr.mxu0 0.0
  %102 = vmatpush1.msra.mxu0 0.0
  %103 = vmatprep.subr.mxu0 0.0
  %104 = vmatpush1.msra.mxu0 0.0
  %105 = vmatprep.subr.mxu0 0.0
  %106 = vmatpush1.msra.mxu0 0.0
  %107 = vmatprep.subr.mxu0 0.0
  %108 = vmatpush1.msra.mxu0 0.0
  %109 = vmatprep.subr.mxu0 0.0
  %110 = vmatpush1.msra.mxu0 0.0
  %111 = vmatprep.subr.mxu0 0.0
  %112 = vmatpush1.msra.mxu0 0.0
  %113 = vmatprep.subr.mxu0 0.0
  %114 = vmatpush1.msra.mxu0 0.0
  %115 = vmatprep.subr.mxu0 0.0
  %116 = vmatpush1.msra.mxu0 0.0
  %117 = vmatprep.subr.mxu0 0.0
  %118 = vmatpush1.msra.mxu0 0.0
  %119 = vmatprep.subr.mxu0 0.0
  %120 = vmatpush1.msra.mxu0 0.0
  %121 = vmatprep.subr.mxu0 0.0
  %122 = vmatpush1.msra.mxu0 0.0
  %123 = vmatprep.subr.mxu0 0.0
  %124 = vmatpush1.msra.mxu0 0.0
  %125 = vmatprep.subr.mxu0 0.0
  %126 = vmatpush1.msra.mxu0 0.0
  %127 = vmatprep.subr.mxu0 0.0
  %128 = vmatpush1.msra.mxu0 0.0
  %129 = vmatprep.subr.mxu0 0.0
  %130 = vmatpush1.msra.mxu0 0.0
  %131 = vmatprep.subr.mxu0 0.0
  %132 = vmatpush1.msra.mxu0 0.0
  %133 = vmatprep.subr.mxu0 0.0
  %134 = vmatpush1.msra.mxu0 0.0
  %135 = vmatprep.subr.mxu0 0.0
  %136 = vmatpush1.msra.mxu0 0.0
  %137 = vmatprep.subr.mxu0 0.0
  %138 = vmatpush1.msra.mxu0 0.0
  %139 = vmatprep.subr.mxu0 0.0
  %140 = vmatpush1.msra.mxu0 0.0
  %141 = vmatprep.subr.mxu0 0.0
  %142 = vmatpush1.msra.mxu0 0.0
  %143 = vmatprep.subr.mxu0 0.0
  %144 = vmatpush1.msra.mxu0 0.0
  %145 = vmatprep.subr.mxu0 0.0
  %146 = vmatpush1.msra.mxu0 0.0
  %147 = vmatprep.subr.mxu0 0.0
  %148 = vmatpush1.msra.mxu0 0.0
  %149 = vmatprep.mubr.f32.mxu0 0.0
  %150 = vmatmul.mubr.f32.gmra.mrb[0].mxu0 %v76
  %v151 = vpop.f32.mrb[0].mxu0
  %v152 = vadd.f32 %v72, %v151
  %v153 = vpop.f32.mrb[0].mxu0
  %154 = vmatprep.mubr.f32.mxu0 0.0
  %155 = vmatmul.mubr.f32.gmra.mrb[0].mxu0 %v79
  %v156 = vpop.f32.mrb[0].mxu0
  %v157 = vadd.f32 %v72, %v156
  %v158 = vpop.f32.mrb[0].mxu0
  %159 = vdwg.mxu0
  %vm160 = vcmask 130048
  %v162 = vsel %vm160, 0.0, 0
  %164 = vmatprep.subr.mxu0 0.0
  %165 = vmatpush1.msra.mxu0 %v41
  %166 = vmatprep.subr.mxu0 0.0
  %167 = vmatpush1.msra.mxu0 %v42
  %168 = vmatprep.subr.mxu0 0.0
  %169 = vmatpush1.msra.mxu0 0.0
  %170 = vmatprep.subr.mxu0 0.0
  %171 = vmatpush1.msra.mxu0 0.0
  %172 = vmatprep.subr.mxu0 0.0
  %173 = vmatpush1.msra.mxu0 0.0
  %174 = vmatprep.subr.mxu0 0.0
  %175 = vmatpush1.msra.mxu0 0.0
  %176 = vmatprep.subr.mxu0 0.0
  %177 = vmatpush1.msra.mxu0 0.0
  %178 = vmatprep.subr.mxu0 0.0
  %179 = vmatpush1.msra.mxu0 0.0
  %180 = vmatprep.subr.mxu0 0.0
  %181 = vmatpush1.msra.mxu0 0.0
  %182 = vmatprep.subr.mxu0 0.0
  %183 = vmatpush1.msra.mxu0 0.0
  %184 = vmatprep.subr.mxu0 0.0
  %185 = vmatpush1.msra.mxu0 0.0
  %186 = vmatprep.subr.mxu0 0.0
  %187 = vmatpush1.msra.mxu0 0.0
  %188 = vmatprep.subr.mxu0 0.0
  %189 = vmatpush1.msra.mxu0 0.0
  %190 = vmatprep.subr.mxu0 0.0
  %191 = vmatpush1.msra.mxu0 0.0
  %192 = vmatprep.subr.mxu0 0.0
  %193 = vmatpush1.msra.mxu0 0.0
  %194 = vmatprep.subr.mxu0 0.0
  %195 = vmatpush1.msra.mxu0 0.0
  %196 = vmatprep.subr.mxu0 0.0
  %197 = vmatpush1.msra.mxu0 0.0
  %198 = vmatprep.subr.mxu0 0.0
  %199 = vmatpush1.msra.mxu0 0.0
  %200 = vmatprep.subr.mxu0 0.0
  %201 = vmatpush1.msra.mxu0 0.0
  %202 = vmatprep.subr.mxu0 0.0
  %203 = vmatpush1.msra.mxu0 0.0
  %204 = vmatprep.subr.mxu0 0.0
  %205 = vmatpush1.msra.mxu0 0.0
  %206 = vmatprep.subr.mxu0 0.0
  %207 = vmatpush1.msra.mxu0 0.0
  %208 = vmatprep.subr.mxu0 0.0
  %209 = vmatpush1.msra.mxu0 0.0
  %210 = vmatprep.subr.mxu0 0.0
  %211 = vmatpush1.msra.mxu0 0.0
  %212 = vmatprep.subr.mxu0 0.0
  %213 = vmatpush1.msra.mxu0 0.0
  %214 = vmatprep.subr.mxu0 0.0
  %215 = vmatpush1.msra.mxu0 0.0
  %216 = vmatprep.subr.mxu0 0.0
  %217 = vmatpush1.msra.mxu0 0.0
  %218 = vmatprep.subr.mxu0 0.0
  %219 = vmatpush1.msra.mxu0 0.0
  %220 = vmatprep.subr.mxu0 0.0
  %221 = vmatpush1.msra.mxu0 0.0
  %222 = vmatprep.subr.mxu0 0.0
  %223 = vmatpush1.msra.mxu0 0.0
  %224 = vmatprep.subr.mxu0 0.0
  %225 = vmatpush1.msra.mxu0 0.0
  %226 = vmatprep.subr.mxu0 0.0
  %227 = vmatpush1.msra.mxu0 0.0
  %228 = vmatprep.mubr.f32.mxu0 0.0
  %229 = vmatmul.mubr.f32.gmra.mrb[0].mxu0 %v162
  %v230 = vpop.f32.mrb[0].mxu0
  %v231 = vadd.f32 0.0, %v230
  %v232 = vpop.f32.mrb[0].mxu0
  %233 = vdwg.mxu0
  %v234 = vadd.f32 %v152, %v231
  %v235 = vxor.u32 %v234, 2147483648
  %v236 = vmul.f32 %v235, 1.442695
  %v237 = vpow.pop %v236
  %v238 = vadd.f32 %v237, 1.0
  %v239 = vrcp.pop %v238
  %v240 = vmul.f32 1.0, %v239
  %v241 = vtanh.pop %v234
  %v242 = vmul.f32 %v240, 0.0
  %244 = vrot.lane.b32.xlu0 %v241, 96
  %v245 = vpop.permute.xlu0 %244
  %v247 = vmul.f32 %v240, %v245
  %249 = vrot.lane.b32.xlu0 %v247, 16
  %v250 = vpop.permute.xlu0 %249
  %v252 = vadd.f32 %v242, %v250
  %v253 = vtanh.pop %v252
  %255 = vrot.lane.b32.xlu0 %v253, 32
  %v256 = vpop.permute.xlu0 %255
  %v258 = vmul.f32 %v240, %v256
  %259 = vmatprep.subr.mxu0 0.0
  %260 = vmatpush1.msra.mxu0 %v43
  %261 = vmatprep.subr.mxu0 0.0
  %262 = vmatpush1.msra.mxu0 %v44
  %263 = vmatprep.subr.mxu0 0.0
  %264 = vmatpush1.msra.mxu0 0.0
  %265 = vmatprep.subr.mxu0 0.0
  %266 = vmatpush1.msra.mxu0 0.0
  %267 = vmatprep.subr.mxu0 0.0
  %268 = vmatpush1.msra.mxu0 0.0
  %269 = vmatprep.subr.mxu0 0.0
  %270 = vmatpush1.msra.mxu0 0.0
  %271 = vmatprep.subr.mxu0 0.0
  %272 = vmatpush1.msra.mxu0 0.0
  %273 = vmatprep.subr.mxu0 0.0
  %274 = vmatpush1.msra.mxu0 0.0
  %275 = vmatprep.subr.mxu0 0.0
  %276 = vmatpush1.msra.mxu0 0.0
  %277 = vmatprep.subr.mxu0 0.0
  %278 = vmatpush1.msra.mxu0 0.0
  %279 = vmatprep.subr.mxu0 0.0
  %280 = vmatpush1.msra.mxu0 0.0
  %281 = vmatprep.subr.mxu0 0.0
  %282 = vmatpush1.msra.mxu0 0.0
  %283 = vmatprep.subr.mxu0 0.0
  %284 = vmatpush1.msra.mxu0 0.0
  %285 = vmatprep.subr.mxu0 0.0
  %286 = vmatpush1.msra.mxu0 0.0
  %287 = vmatprep.subr.mxu0 0.0
  %288 = vmatpush1.msra.mxu0 0.0
  %289 = vmatprep.subr.mxu0 0.0
  %290 = vmatpush1.msra.mxu0 0.0
  %291 = vmatprep.subr.mxu0 0.0
  %292 = vmatpush1.msra.mxu0 0.0
  %293 = vmatprep.subr.mxu0 0.0
  %294 = vmatpush1.msra.mxu0 0.0
  %295 = vmatprep.subr.mxu0 0.0
  %296 = vmatpush1.msra.mxu0 0.0
  %297 = vmatprep.subr.mxu0 0.0
  %298 = vmatpush1.msra.mxu0 0.0
  %299 = vmatprep.subr.mxu0 0.0
  %300 = vmatpush1.msra.mxu0 0.0
  %301 = vmatprep.subr.mxu0 0.0
  %302 = vmatpush1.msra.mxu0 0.0
  %303 = vmatprep.subr.mxu0 0.0
  %304 = vmatpush1.msra.mxu0 0.0
  %305 = vmatprep.subr.mxu0 0.0
  %306 = vmatpush1.msra.mxu0 0.0
  %307 = vmatprep.subr.mxu0 0.0
  %308 = vmatpush1.msra.mxu0 0.0
  %309 = vmatprep.subr.mxu0 0.0
  %310 = vmatpush1.msra.mxu0 0.0
  %311 = vmatprep.subr.mxu0 0.0
  %312 = vmatpush1.msra.mxu0 0.0
  %313 = vmatprep.subr.mxu0 0.0
  %314 = vmatpush1.msra.mxu0 0.0
  %315 = vmatprep.subr.mxu0 0.0
  %316 = vmatpush1.msra.mxu0 0.0
  %317 = vmatprep.subr.mxu0 0.0
  %318 = vmatpush1.msra.mxu0 0.0
  %319 = vmatprep.subr.mxu0 0.0
  %320 = vmatpush1.msra.mxu0 0.0
  %321 = vmatprep.subr.mxu0 0.0
  %322 = vmatpush1.msra.mxu0 0.0
  %323 = vmatprep.mubr.f32.mxu0 0.0
  %324 = vmatmul.mubr.f32.gmra.mrb[0].mxu0 %v162
  %v325 = vpop.f32.mrb[0].mxu0
  %v326 = vadd.f32 0.0, %v325
  %v327 = vpop.f32.mrb[0].mxu0
  %328 = vdwg.mxu0
  %v330 = vrot.slane %v326, 2
  %331 = vrot.lane.b32.xlu0 %v330, 64
  %v332 = vpop.permute.xlu0 %331
  %v334 = vadd.f32 %v157, %v332
  %v335 = vxor.u32 %v334, 2147483648
  %v336 = vmul.f32 %v335, 1.442695
  %v337 = vpow.pop %v336
  %v338 = vadd.f32 %v337, 1.0
  %v339 = vrcp.pop %v338
  %v340 = vmul.f32 1.0, %v339
  %v341 = vtanh.pop %v334
  %v342 = vmul.f32 %v340, 0.0
  %344 = vrot.lane.b32.xlu0 %v341, 96
  %v345 = vpop.permute.xlu0 %344
  %v347 = vmul.f32 %v340, %v345
  %349 = vrot.lane.b32.xlu0 %v347, 16
  %v350 = vpop.permute.xlu0 %349
  %v352 = vadd.f32 %v342, %v350
  %v353 = vtanh.pop %v352
  %355 = vrot.lane.b32.xlu0 %v353, 32
  %v356 = vpop.permute.xlu0 %355
  %v358 = vmul.f32 %v340, %v356
  %360 = vset.pattern.permute.xlu0 0
  %361 = vperm.xlu0 %360, %v53
  %v362 = vpop.permute.xlu0 %361
  %v365 = vrot.slane %v358, 6
  %366 = vrot.lane.b32.xlu0 %v365, 16
  %v367 = vpop.permute.xlu0 %366
  %v369 = vmul.f32 %v362, %v367
  %v370 = vsub.f32 1.0, %v53
  %372 = vset.pattern.permute.xlu0 0
  %373 = vperm.xlu0 %372, %v370
  %v374 = vpop.permute.xlu0 %373
  %v376 = vmul.f32 %v374, 0.0
  %v377 = vadd.f32 %v369, %v376
  %v379 = vrot.slane %v352, 6
  %380 = vrot.lane.b32.xlu0 %v379, 48
  %v381 = vpop.permute.xlu0 %380
  %v383 = vmul.f32 %v362, %v381
  %v384 = vadd.f32 %v383, %v376
  %386 = vrot.lane.b32.xlu0 %v258, 80
  %v387 = vpop.permute.xlu0 %386
  %vm389 = vcmask 123904
  %390 = vst.msk [vmem:[#allocation2] sm:$0x3] %vm389, %v387
  %391 = vst.msk [vmem:[#allocation3 + $0xe] sm:$0x3] %vm389, %v377
  %v392 = vsel %vm160, %v387, 0
  %394 = vmatprep.subr.mxu0 0.0
  %395 = vmatpush1.msra.mxu0 %v41
  %396 = vmatprep.subr.mxu0 0.0
  %397 = vmatpush1.msra.mxu0 %v42
  %398 = vmatprep.subr.mxu0 0.0
  %399 = vmatpush1.msra.mxu0 0.0
  %400 = vmatprep.subr.mxu0 0.0
  %401 = vmatpush1.msra.mxu0 0.0
  %402 = vmatprep.subr.mxu0 0.0
  %403 = vmatpush1.msra.mxu0 0.0
  %404 = vmatprep.subr.mxu0 0.0
  %405 = vmatpush1.msra.mxu0 0.0
  %406 = vmatprep.subr.mxu0 0.0
  %407 = vmatpush1.msra.mxu0 0.0
  %408 = vmatprep.subr.mxu0 0.0
  %409 = vmatpush1.msra.mxu0 0.0
  %410 = vmatprep.subr.mxu0 0.0
  %411 = vmatpush1.msra.mxu0 0.0
  %412 = vmatprep.subr.mxu0 0.0
  %413 = vmatpush1.msra.mxu0 0.0
  %414 = vmatprep.subr.mxu0 0.0
  %415 = vmatpush1.msra.mxu0 0.0
  %416 = vmatprep.subr.mxu0 0.0
  %417 = vmatpush1.msra.mxu0 0.0
  %418 = vmatprep.subr.mxu0 0.0
  %419 = vmatpush1.msra.mxu0 0.0
  %420 = vmatprep.subr.mxu0 0.0
  %421 = vmatpush1.msra.mxu0 0.0
  %422 = vmatprep.subr.mxu0 0.0
  %423 = vmatpush1.msra.mxu0 0.0
  %424 = vmatprep.subr.mxu0 0.0
  %425 = vmatpush1.msra.mxu0 0.0
  %426 = vmatprep.subr.mxu0 0.0
  %427 = vmatpush1.msra.mxu0 0.0
  %428 = vmatprep.subr.mxu0 0.0
  %429 = vmatpush1.msra.mxu0 0.0
  %430 = vmatprep.subr.mxu0 0.0
  %431 = vmatpush1.msra.mxu0 0.0
  %432 = vmatprep.subr.mxu0 0.0
  %433 = vmatpush1.msra.mxu0 0.0
  %434 = vmatprep.subr.mxu0 0.0
  %435 = vmatpush1.msra.mxu0 0.0
  %436 = vmatprep.subr.mxu0 0.0
  %437 = vmatpush1.msra.mxu0 0.0
  %438 = vmatprep.subr.mxu0 0.0
  %439 = vmatpush1.msra.mxu0 0.0
  %440 = vmatprep.subr.mxu0 0.0
  %441 = vmatpush1.msra.mxu0 0.0
  %442 = vmatprep.subr.mxu0 0.0
  %443 = vmatpush1.msra.mxu0 0.0
  %444 = vmatprep.subr.mxu0 0.0
  %445 = vmatpush1.msra.mxu0 0.0
  %446 = vmatprep.subr.mxu0 0.0
  %447 = vmatpush1.msra.mxu0 0.0
  %448 = vmatprep.subr.mxu0 0.0
  %449 = vmatpush1.msra.mxu0 0.0
  %450 = vmatprep.subr.mxu0 0.0
  %451 = vmatpush1.msra.mxu0 0.0
  %452 = vmatprep.subr.mxu0 0.0
  %453 = vmatpush1.msra.mxu0 0.0
  %454 = vmatprep.subr.mxu0 0.0
  %455 = vmatpush1.msra.mxu0 0.0
  %456 = vmatprep.subr.mxu0 0.0
  %457 = vmatpush1.msra.mxu0 0.0
  %458 = vmatprep.mubr.f32.mxu0 0.0
  %459 = vmatmul.mubr.f32.gmra.mrb[0].mxu0 %v392
  %v460 = vpop.f32.mrb[0].mxu0
  %v461 = vadd.f32 0.0, %v460
  %v462 = vpop.f32.mrb[0].mxu0
  %463 = vdwg.mxu0
  %v465 = vrot.slane %v461, 6
  %v467 = vadd.f32 %v152, %v465
  %v468 = vxor.u32 %v467, 2147483648
  %v469 = vmul.f32 %v468, 1.442695
  %v470 = vpow.pop %v469
  %v471 = vadd.f32 %v470, 1.0
  %v472 = vrcp.pop %v471
  %v473 = vmul.f32 1.0, %v472
  %v474 = vtanh.pop %v467
  %v476 = vrot.slane %v252, 6
  %v478 = vmul.f32 %v473, %v476
  %480 = vrot.lane.b32.xlu0 %v474, 96
  %v481 = vpop.permute.xlu0 %480
  %v483 = vmul.f32 %v473, %v481
  %485 = vrot.lane.b32.xlu0 %v483, 16
  %v486 = vpop.permute.xlu0 %485
  %v488 = vadd.f32 %v478, %v486
  %v489 = vtanh.pop %v488
  %491 = vrot.lane.b32.xlu0 %v489, 32
  %v492 = vpop.permute.xlu0 %491
  %v494 = vmul.f32 %v473, %v492
  %v496 = vsel %vm160, %v377, 0
  %498 = vmatprep.subr.mxu0 0.0
  %499 = vmatpush1.msra.mxu0 %v43
  %500 = vmatprep.subr.mxu0 0.0
  %501 = vmatpush1.msra.mxu0 %v44
  %502 = vmatprep.subr.mxu0 0.0
  %503 = vmatpush1.msra.mxu0 0.0
  %504 = vmatprep.subr.mxu0 0.0
  %505 = vmatpush1.msra.mxu0 0.0
  %506 = vmatprep.subr.mxu0 0.0
  %507 = vmatpush1.msra.mxu0 0.0
  %508 = vmatprep.subr.mxu0 0.0
  %509 = vmatpush1.msra.mxu0 0.0
  %510 = vmatprep.subr.mxu0 0.0
  %511 = vmatpush1.msra.mxu0 0.0
  %512 = vmatprep.subr.mxu0 0.0
  %513 = vmatpush1.msra.mxu0 0.0
  %514 = vmatprep.subr.mxu0 0.0
  %515 = vmatpush1.msra.mxu0 0.0
  %516 = vmatprep.subr.mxu0 0.0
  %517 = vmatpush1.msra.mxu0 0.0
  %518 = vmatprep.subr.mxu0 0.0
  %519 = vmatpush1.msra.mxu0 0.0
  %520 = vmatprep.subr.mxu0 0.0
  %521 = vmatpush1.msra.mxu0 0.0
  %522 = vmatprep.subr.mxu0 0.0
  %523 = vmatpush1.msra.mxu0 0.0
  %524 = vmatprep.subr.mxu0 0.0
  %525 = vmatpush1.msra.mxu0 0.0
  %526 = vmatprep.subr.mxu0 0.0
  %527 = vmatpush1.msra.mxu0 0.0
  %528 = vmatprep.subr.mxu0 0.0
  %529 = vmatpush1.msra.mxu0 0.0
  %530 = vmatprep.subr.mxu0 0.0
  %531 = vmatpush1.msra.mxu0 0.0
  %532 = vmatprep.subr.mxu0 0.0
  %533 = vmatpush1.msra.mxu0 0.0
  %534 = vmatprep.subr.mxu0 0.0
  %535 = vmatpush1.msra.mxu0 0.0
  %536 = vmatprep.subr.mxu0 0.0
  %537 = vmatpush1.msra.mxu0 0.0
  %538 = vmatprep.subr.mxu0 0.0
  %539 = vmatpush1.msra.mxu0 0.0
  %540 = vmatprep.subr.mxu0 0.0
  %541 = vmatpush1.msra.mxu0 0.0
  %542 = vmatprep.subr.mxu0 0.0
  %543 = vmatpush1.msra.mxu0 0.0
  %544 = vmatprep.subr.mxu0 0.0
  %545 = vmatpush1.msra.mxu0 0.0
  %546 = vmatprep.subr.mxu0 0.0
  %547 = vmatpush1.msra.mxu0 0.0
  %548 = vmatprep.subr.mxu0 0.0
  %549 = vmatpush1.msra.mxu0 0.0
  %550 = vmatprep.subr.mxu0 0.0
  %551 = vmatpush1.msra.mxu0 0.0
  %552 = vmatprep.subr.mxu0 0.0
  %553 = vmatpush1.msra.mxu0 0.0
  %554 = vmatprep.subr.mxu0 0.0
  %555 = vmatpush1.msra.mxu0 0.0
  %556 = vmatprep.subr.mxu0 0.0
  %557 = vmatpush1.msra.mxu0 0.0
  %558 = vmatprep.subr.mxu0 0.0
  %559 = vmatpush1.msra.mxu0 0.0
  %560 = vmatprep.subr.mxu0 0.0
  %561 = vmatpush1.msra.mxu0 0.0
  %562 = vmatprep.mubr.f32.mxu0 0.0
  %563 = vmatmul.mubr.f32.gmra.mrb[0].mxu0 %v496
  %v564 = vpop.f32.mrb[0].mxu0
  %v565 = vadd.f32 0.0, %v564
  %v566 = vpop.f32.mrb[0].mxu0
  %567 = vdwg.mxu0
  %v569 = vrot.slane %v565, 4
  %570 = vrot.lane.b32.xlu0 %v569, 64
  %v571 = vpop.permute.xlu0 %570
  %v573 = vadd.f32 %v157, %v571
  %v574 = vxor.u32 %v573, 2147483648
  %v575 = vmul.f32 %v574, 1.442695
  %v576 = vpow.pop %v575
  %v577 = vadd.f32 %v576, 1.0
  %v578 = vrcp.pop %v577
  %v579 = vmul.f32 1.0, %v578
  %v580 = vtanh.pop %v573
  %v582 = vrot.slane %v384, 4
  %583 = vrot.lane.b32.xlu0 %v582, 80
  %v584 = vpop.permute.xlu0 %583
  %v586 = vmul.f32 %v579, %v584
  %588 = vrot.lane.b32.xlu0 %v580, 96
  %v589 = vpop.permute.xlu0 %588
  %v591 = vmul.f32 %v579, %v589
  %593 = vrot.lane.b32.xlu0 %v591, 16
  %v594 = vpop.permute.xlu0 %593
  %v596 = vadd.f32 %v586, %v594
  %v597 = vtanh.pop %v596
  %599 = vrot.lane.b32.xlu0 %v597, 32
  %v600 = vpop.permute.xlu0 %599
  %v602 = vmul.f32 %v579, %v600
  %604 = vset.pattern.permute.xlu0 0
  %605 = vperm.xlu0 %604, %v52
  %v606 = vpop.permute.xlu0 %605
  %v609 = vrot.slane %v602, 4
  %610 = vrot.lane.b32.xlu0 %v609, 16
  %v611 = vpop.permute.xlu0 %610
  %v613 = vmul.f32 %v606, %v611
  %v614 = vsub.f32 1.0, %v52
  %616 = vset.pattern.permute.xlu0 0
  %617 = vperm.xlu0 %616, %v614
  %v618 = vpop.permute.xlu0 %617
  %v620 = vmul.f32 %v618, %v377
  %v621 = vadd.f32 %v613, %v620
  %v623 = vrot.slane %v596, 4
  %624 = vrot.lane.b32.xlu0 %v623, 48
  %v625 = vpop.permute.xlu0 %624
  %v627 = vmul.f32 %v606, %v625
  %v628 = vmul.f32 %v618, %v384
  %v629 = vadd.f32 %v627, %v628
  %631 = vrot.lane.b32.xlu0 %v494, 80
  %v632 = vpop.permute.xlu0 %631
  %vm634 = vcmask 125954
  %635 = vst.msk [vmem:[#allocation2] sm:$0xc] %vm634, %v632
  %636 = vst.msk [vmem:[#allocation3 + $0xc] sm:$0x3] %vm389, %v621
  %v637 = vrot.slane %v494, 2
  %638 = vrot.lane.b32.xlu0 %v637, 80
  %v639 = vpop.permute.xlu0 %638
  %v640 = vsel %vm160, %v639, 0
  %642 = vmatprep.subr.mxu0 0.0
  %643 = vmatpush1.msra.mxu0 %v41
  %644 = vmatprep.subr.mxu0 0.0
  %645 = vmatpush1.msra.mxu0 %v42
  %646 = vmatprep.subr.mxu0 0.0
  %647 = vmatpush1.msra.mxu0 0.0
  %648 = vmatprep.subr.mxu0 0.0
  %649 = vmatpush1.msra.mxu0 0.0
  %650 = vmatprep.subr.mxu0 0.0
  %651 = vmatpush1.msra.mxu0 0.0
  %652 = vmatprep.subr.mxu0 0.0
  %653 = vmatpush1.msra.mxu0 0.0
  %654 = vmatprep.subr.mxu0 0.0
  %655 = vmatpush1.msra.mxu0 0.0
  %656 = vmatprep.subr.mxu0 0.0
  %657 = vmatpush1.msra.mxu0 0.0
  %658 = vmatprep.subr.mxu0 0.0
  %659 = vmatpush1.msra.mxu0 0.0
  %660 = vmatprep.subr.mxu0 0.0
  %661 = vmatpush1.msra.mxu0 0.0
  %662 = vmatprep.subr.mxu0 0.0
  %663 = vmatpush1.msra.mxu0 0.0
  %664 = vmatprep.subr.mxu0 0.0
  %665 = vmatpush1.msra.mxu0 0.0
  %666 = vmatprep.subr.mxu0 0.0
  %667 = vmatpush1.msra.mxu0 0.0
  %668 = vmatprep.subr.mxu0 0.0
  %669 = vmatpush1.msra.mxu0 0.0
  %670 = vmatprep.subr.mxu0 0.0
  %671 = vmatpush1.msra.mxu0 0.0
  %672 = vmatprep.subr.mxu0 0.0
  %673 = vmatpush1.msra.mxu0 0.0
  %674 = vmatprep.subr.mxu0 0.0
  %675 = vmatpush1.msra.mxu0 0.0
  %676 = vmatprep.subr.mxu0 0.0
  %677 = vmatpush1.msra.mxu0 0.0
  %678 = vmatprep.subr.mxu0 0.0
  %679 = vmatpush1.msra.mxu0 0.0
  %680 = vmatprep.subr.mxu0 0.0
  %681 = vmatpush1.msra.mxu0 0.0
  %682 = vmatprep.subr.mxu0 0.0
  %683 = vmatpush1.msra.mxu0 0.0
  %684 = vmatprep.subr.mxu0 0.0
  %685 = vmatpush1.msra.mxu0 0.0
  %686 = vmatprep.subr.mxu0 0.0
  %687 = vmatpush1.msra.mxu0 0.0
  %688 = vmatprep.subr.mxu0 0.0
  %689 = vmatpush1.msra.mxu0 0.0
  %690 = vmatprep.subr.mxu0 0.0
  %691 = vmatpush1.msra.mxu0 0.0
  %692 = vmatprep.subr.mxu0 0.0
  %693 = vmatpush1.msra.mxu0 0.0
  %694 = vmatprep.subr.mxu0 0.0
  %695 = vmatpush1.msra.mxu0 0.0
  %696 = vmatprep.subr.mxu0 0.0
  %697 = vmatpush1.msra.mxu0 0.0
  %698 = vmatprep.subr.mxu0 0.0
  %699 = vmatpush1.msra.mxu0 0.0
  %700 = vmatprep.subr.mxu0 0.0
  %701 = vmatpush1.msra.mxu0 0.0
  %702 = vmatprep.subr.mxu0 0.0
  %703 = vmatpush1.msra.mxu0 0.0
  %704 = vmatprep.subr.mxu0 0.0
  %705 = vmatpush1.msra.mxu0 0.0
  %706 = vmatprep.mubr.f32.mxu0 0.0
  %707 = vmatmul.mubr.f32.gmra.mrb[0].mxu0 %v640
  %v708 = vpop.f32.mrb[0].mxu0
  %v709 = vadd.f32 0.0, %v708
  %v710 = vpop.f32.mrb[0].mxu0
  %711 = vdwg.mxu0
  %v713 = vrot.slane %v709, 4
  %v715 = vadd.f32 %v152, %v713
  %v716 = vxor.u32 %v715, 2147483648
  %v717 = vmul.f32 %v716, 1.442695
  %v718 = vpow.pop %v717
  %v719 = vadd.f32 %v718, 1.0
  %v720 = vrcp.pop %v719
  %v721 = vmul.f32 1.0, %v720
  %v722 = vtanh.pop %v715
  %v724 = vrot.slane %v488, 6
  %v726 = vmul.f32 %v721, %v724
  %728 = vrot.lane.b32.xlu0 %v722, 96
  %v729 = vpop.permute.xlu0 %728
  %v731 = vmul.f32 %v721, %v729
  %733 = vrot.lane.b32.xlu0 %v731, 16
  %v734 = vpop.permute.xlu0 %733
  %v736 = vadd.f32 %v726, %v734
  %v737 = vtanh.pop %v736
  %739 = vrot.lane.b32.xlu0 %v737, 32
  %v740 = vpop.permute.xlu0 %739
  %v742 = vmul.f32 %v721, %v740
  %v744 = vsel %vm160, %v621, 0
  %746 = vmatprep.subr.mxu0 0.0
  %747 = vmatpush1.msra.mxu0 %v43
  %748 = vmatprep.subr.mxu0 0.0
  %749 = vmatpush1.msra.mxu0 %v44
  %750 = vmatprep.subr.mxu0 0.0
  %751 = vmatpush1.msra.mxu0 0.0
  %752 = vmatprep.subr.mxu0 0.0
  %753 = vmatpush1.msra.mxu0 0.0
  %754 = vmatprep.subr.mxu0 0.0
  %755 = vmatpush1.msra.mxu0 0.0
  %756 = vmatprep.subr.mxu0 0.0
  %757 = vmatpush1.msra.mxu0 0.0
  %758 = vmatprep.subr.mxu0 0.0
  %759 = vmatpush1.msra.mxu0 0.0
  %760 = vmatprep.subr.mxu0 0.0
  %761 = vmatpush1.msra.mxu0 0.0
  %762 = vmatprep.subr.mxu0 0.0
  %763 = vmatpush1.msra.mxu0 0.0
  %764 = vmatprep.subr.mxu0 0.0
  %765 = vmatpush1.msra.mxu0 0.0
  %766 = vmatprep.subr.mxu0 0.0
  %767 = vmatpush1.msra.mxu0 0.0
  %768 = vmatprep.subr.mxu0 0.0
  %769 = vmatpush1.msra.mxu0 0.0
  %770 = vmatprep.subr.mxu0 0.0
  %771 = vmatpush1.msra.mxu0 0.0
  %772 = vmatprep.subr.mxu0 0.0
  %773 = vmatpush1.msra.mxu0 0.0
  %774 = vmatprep.subr.mxu0 0.0
  %775 = vmatpush1.msra.mxu0 0.0
  %776 = vmatprep.subr.mxu0 0.0
  %777 = vmatpush1.msra.mxu0 0.0
  %778 = vmatprep.subr.mxu0 0.0
  %779 = vmatpush1.msra.mxu0 0.0
  %780 = vmatprep.subr.mxu0 0.0
  %781 = vmatpush1.msra.mxu0 0.0
  %782 = vmatprep.subr.mxu0 0.0
  %783 = vmatpush1.msra.mxu0 0.0
  %784 = vmatprep.subr.mxu0 0.0
  %785 = vmatpush1.msra.mxu0 0.0
  %786 = vmatprep.subr.mxu0 0.0
  %787 = vmatpush1.msra.mxu0 0.0
  %788 = vmatprep.subr.mxu0 0.0
  %789 = vmatpush1.msra.mxu0 0.0
  %790 = vmatprep.subr.mxu0 0.0
  %791 = vmatpush1.msra.mxu0 0.0
  %792 = vmatprep.subr.mxu0 0.0
  %793 = vmatpush1.msra.mxu0 0.0
  %794 = vmatprep.subr.mxu0 0.0
  %795 = vmatpush1.msra.mxu0 0.0
  %796 = vmatprep.subr.mxu0 0.0
  %797 = vmatpush1.msra.mxu0 0.0
  %798 = vmatprep.subr.mxu0 0.0
  %799 = vmatpush1.msra.mxu0 0.0
  %800 = vmatprep.subr.mxu0 0.0
  %801 = vmatpush1.msra.mxu0 0.0
  %802 = vmatprep.subr.mxu0 0.0
  %803 = vmatpush1.msra.mxu0 0.0
  %804 = vmatprep.subr.mxu0 0.0
  %805 = vmatpush1.msra.mxu0 0.0
  %806 = vmatprep.subr.mxu0 0.0
  %807 = vmatpush1.msra.mxu0 0.0
  %808 = vmatprep.subr.mxu0 0.0
  %809 = vmatpush1.msra.mxu0 0.0
  %810 = vmatprep.mubr.f32.mxu0 0.0
  %811 = vmatmul.mubr.f32.gmra.mrb[0].mxu0 %v744
  %v812 = vpop.f32.mrb[0].mxu0
  %v813 = vadd.f32 0.0, %v812
  %v814 = vpop.f32.mrb[0].mxu0
  %815 = vdwg.mxu0
  %v817 = vrot.slane %v813, 6
  %818 = vrot.lane.b32.xlu0 %v817, 64
  %v819 = vpop.permute.xlu0 %818
  %v821 = vadd.f32 %v157, %v819
  %v822 = vxor.u32 %v821, 2147483648
  %v823 = vmul.f32 %v822, 1.442695
  %v824 = vpow.pop %v823
  %v825 = vadd.f32 %v824, 1.0
  %v826 = vrcp.pop %v825
  %v827 = vmul.f32 1.0, %v826
  %v828 = vtanh.pop %v821
  %v830 = vrot.slane %v629, 6
  %831 = vrot.lane.b32.xlu0 %v830, 80
  %v832 = vpop.permute.xlu0 %831
  %v834 = vmul.f32 %v827, %v832
  %836 = vrot.lane.b32.xlu0 %v828, 96
  %v837 = vpop.permute.xlu0 %836
  %v839 = vmul.f32 %v827, %v837
  %841 = vrot.lane.b32.xlu0 %v839, 16
  %v842 = vpop.permute.xlu0 %841
  %v844 = vadd.f32 %v834, %v842
  %v845 = vtanh.pop %v844
  %847 = vrot.lane.b32.xlu0 %v845, 32
  %v848 = vpop.permute.xlu0 %847
  %v850 = vmul.f32 %v827, %v848
  %852 = vset.pattern.permute.xlu0 0
  %853 = vperm.xlu0 %852, %v51
  %v854 = vpop.permute.xlu0 %853
  %v857 = vrot.slane %v850, 2
  %858 = vrot.lane.b32.xlu0 %v857, 16
  %v859 = vpop.permute.xlu0 %858
  %v861 = vmul.f32 %v854, %v859
  %v862 = vsub.f32 1.0, %v51
  %864 = vset.pattern.permute.xlu0 0
  %865 = vperm.xlu0 %864, %v862
  %v866 = vpop.permute.xlu0 %865
  %v868 = vmul.f32 %v866, %v621
  %v869 = vadd.f32 %v861, %v868
  %v871 = vrot.slane %v844, 2
  %872 = vrot.lane.b32.xlu0 %v871, 48
  %v873 = vpop.permute.xlu0 %872
  %v875 = vmul.f32 %v854, %v873
  %v876 = vmul.f32 %v866, %v629
  %v877 = vadd.f32 %v875, %v876
  %879 = vrot.lane.b32.xlu0 %v742, 80
  %v880 = vpop.permute.xlu0 %879
  %vm882 = vcmask 128004
  %883 = vst.msk [vmem:[#allocation2] sm:$0x30] %vm882, %v880
  %884 = vst.msk [vmem:[#allocation3 + $0xa] sm:$0x3] %vm389, %v869
  %v885 = vrot.slane %v742, 4
  %886 = vrot.lane.b32.xlu0 %v885, 80
  %v887 = vpop.permute.xlu0 %886
  %v888 = vsel %vm160, %v887, 0
  %890 = vmatprep.subr.mxu0 0.0
  %891 = vmatpush1.msra.mxu0 %v41
  %892 = vmatprep.subr.mxu0 0.0
  %893 = vmatpush1.msra.mxu0 %v42
  %894 = vmatprep.subr.mxu0 0.0
  %895 = vmatpush1.msra.mxu0 0.0
  %896 = vmatprep.subr.mxu0 0.0
  %897 = vmatpush1.msra.mxu0 0.0
  %898 = vmatprep.subr.mxu0 0.0
  %899 = vmatpush1.msra.mxu0 0.0
  %900 = vmatprep.subr.mxu0 0.0
  %901 = vmatpush1.msra.mxu0 0.0
  %902 = vmatprep.subr.mxu0 0.0
  %903 = vmatpush1.msra.mxu0 0.0
  %904 = vmatprep.subr.mxu0 0.0
  %905 = vmatpush1.msra.mxu0 0.0
  %906 = vmatprep.subr.mxu0 0.0
  %907 = vmatpush1.msra.mxu0 0.0
  %908 = vmatprep.subr.mxu0 0.0
  %909 = vmatpush1.msra.mxu0 0.0
  %910 = vmatprep.subr.mxu0 0.0
  %911 = vmatpush1.msra.mxu0 0.0
  %912 = vmatprep.subr.mxu0 0.0
  %913 = vmatpush1.msra.mxu0 0.0
  %914 = vmatprep.subr.mxu0 0.0
  %915 = vmatpush1.msra.mxu0 0.0
  %916 = vmatprep.subr.mxu0 0.0
  %917 = vmatpush1.msra.mxu0 0.0
  %918 = vmatprep.subr.mxu0 0.0
  %919 = vmatpush1.msra.mxu0 0.0
  %920 = vmatprep.subr.mxu0 0.0
  %921 = vmatpush1.msra.mxu0 0.0
  %922 = vmatprep.subr.mxu0 0.0
  %923 = vmatpush1.msra.mxu0 0.0
  %924 = vmatprep.subr.mxu0 0.0
  %925 = vmatpush1.msra.mxu0 0.0
  %926 = vmatprep.subr.mxu0 0.0
  %927 = vmatpush1.msra.mxu0 0.0
  %928 = vmatprep.subr.mxu0 0.0
  %929 = vmatpush1.msra.mxu0 0.0
  %930 = vmatprep.subr.mxu0 0.0
  %931 = vmatpush1.msra.mxu0 0.0
  %932 = vmatprep.subr.mxu0 0.0
  %933 = vmatpush1.msra.mxu0 0.0
  %934 = vmatprep.subr.mxu0 0.0
  %935 = vmatpush1.msra.mxu0 0.0
  %936 = vmatprep.subr.mxu0 0.0
  %937 = vmatpush1.msra.mxu0 0.0
  %938 = vmatprep.subr.mxu0 0.0
  %939 = vmatpush1.msra.mxu0 0.0
  %940 = vmatprep.subr.mxu0 0.0
  %941 = vmatpush1.msra.mxu0 0.0
  %942 = vmatprep.subr.mxu0 0.0
  %943 = vmatpush1.msra.mxu0 0.0
  %944 = vmatprep.subr.mxu0 0.0
  %945 = vmatpush1.msra.mxu0 0.0
  %946 = vmatprep.subr.mxu0 0.0
  %947 = vmatpush1.msra.mxu0 0.0
  %948 = vmatprep.subr.mxu0 0.0
  %949 = vmatpush1.msra.mxu0 0.0
  %950 = vmatprep.subr.mxu0 0.0
  %951 = vmatpush1.msra.mxu0 0.0
  %952 = vmatprep.subr.mxu0 0.0
  %953 = vmatpush1.msra.mxu0 0.0
  %954 = vmatprep.mubr.f32.mxu0 0.0
  %955 = vmatmul.mubr.f32.gmra.mrb[0].mxu0 %v888
  %v956 = vpop.f32.mrb[0].mxu0
  %v957 = vadd.f32 0.0, %v956
  %v958 = vpop.f32.mrb[0].mxu0
  %959 = vdwg.mxu0
  %v961 = vrot.slane %v957, 2
  %v963 = vadd.f32 %v152, %v961
  %v964 = vxor.u32 %v963, 2147483648
  %v965 = vmul.f32 %v964, 1.442695
  %v966 = vpow.pop %v965
  %v967 = vadd.f32 %v966, 1.0
  %v968 = vrcp.pop %v967
  %v969 = vmul.f32 1.0, %v968
  %v970 = vtanh.pop %v963
  %v972 = vrot.slane %v736, 6
  %v974 = vmul.f32 %v969, %v972
  %976 = vrot.lane.b32.xlu0 %v970, 96
  %v977 = vpop.permute.xlu0 %976
  %v979 = vmul.f32 %v969, %v977
  %981 = vrot.lane.b32.xlu0 %v979, 16
  %v982 = vpop.permute.xlu0 %981
  %v984 = vadd.f32 %v974, %v982
  %v985 = vtanh.pop %v984
  %987 = vrot.lane.b32.xlu0 %v985, 32
  %v988 = vpop.permute.xlu0 %987
  %v990 = vmul.f32 %v969, %v988
  %v992 = vsel %vm160, %v869, 0
  %994 = vmatprep.subr.mxu0 0.0
  %995 = vmatpush1.msra.mxu0 %v43
  %996 = vmatprep.subr.mxu0 0.0
  %997 = vmatpush1.msra.mxu0 %v44
  %998 = vmatprep.subr.mxu0 0.0
  %999 = vmatpush1.msra.mxu0 0.0
  %1000 = vmatprep.subr.mxu0 0.0
  %1001 = vmatpush1.msra.mxu0 0.0
  %1002 = vmatprep.subr.mxu0 0.0
  %1003 = vmatpush1.msra.mxu0 0.0
  %1004 = vmatprep.subr.mxu0 0.0
  %1005 = vmatpush1.msra.mxu0 0.0
  %1006 = vmatprep.subr.mxu0 0.0
  %1007 = vmatpush1.msra.mxu0 0.0
  %1008 = vmatprep.subr.mxu0 0.0
  %1009 = vmatpush1.msra.mxu0 0.0
  %1010 = vmatprep.subr.mxu0 0.0
  %1011 = vmatpush1.msra.mxu0 0.0
  %1012 = vmatprep.subr.mxu0 0.0
  %1013 = vmatpush1.msra.mxu0 0.0
  %1014 = vmatprep.subr.mxu0 0.0
  %1015 = vmatpush1.msra.mxu0 0.0
  %1016 = vmatprep.subr.mxu0 0.0
  %1017 = vmatpush1.msra.mxu0 0.0
  %1018 = vmatprep.subr.mxu0 0.0
  %1019 = vmatpush1.msra.mxu0 0.0
  %1020 = vmatprep.subr.mxu0 0.0
  %1021 = vmatpush1.msra.mxu0 0.0
  %1022 = vmatprep.subr.mxu0 0.0
  %1023 = vmatpush1.msra.mxu0 0.0
  %1024 = vmatprep.subr.mxu0 0.0
  %1025 = vmatpush1.msra.mxu0 0.0
  %1026 = vmatprep.subr.mxu0 0.0
  %1027 = vmatpush1.msra.mxu0 0.0
  %1028 = vmatprep.subr.mxu0 0.0
  %1029 = vmatpush1.msra.mxu0 0.0
  %1030 = vmatprep.subr.mxu0 0.0
  %1031 = vmatpush1.msra.mxu0 0.0
  %1032 = vmatprep.subr.mxu0 0.0
  %1033 = vmatpush1.msra.mxu0 0.0
  %1034 = vmatprep.subr.mxu0 0.0
  %1035 = vmatpush1.msra.mxu0 0.0
  %1036 = vmatprep.subr.mxu0 0.0
  %1037 = vmatpush1.msra.mxu0 0.0
  %1038 = vmatprep.subr.mxu0 0.0
  %1039 = vmatpush1.msra.mxu0 0.0
  %1040 = vmatprep.subr.mxu0 0.0
  %1041 = vmatpush1.msra.mxu0 0.0
  %1042 = vmatprep.subr.mxu0 0.0
  %1043 = vmatpush1.msra.mxu0 0.0
  %1044 = vmatprep.subr.mxu0 0.0
  %1045 = vmatpush1.msra.mxu0 0.0
  %1046 = vmatprep.subr.mxu0 0.0
  %1047 = vmatpush1.msra.mxu0 0.0
  %1048 = vmatprep.subr.mxu0 0.0
  %1049 = vmatpush1.msra.mxu0 0.0
  %1050 = vmatprep.subr.mxu0 0.0
  %1051 = vmatpush1.msra.mxu0 0.0
  %1052 = vmatprep.subr.mxu0 0.0
  %1053 = vmatpush1.msra.mxu0 0.0
  %1054 = vmatprep.subr.mxu0 0.0
  %1055 = vmatpush1.msra.mxu0 0.0
  %1056 = vmatprep.subr.mxu0 0.0
  %1057 = vmatpush1.msra.mxu0 0.0
  %1058 = vmatprep.mubr.f32.mxu0 0.0
  %1059 = vmatmul.mubr.f32.gmra.mrb[0].mxu0 %v992
  %v1060 = vpop.f32.mrb[0].mxu0
  %v1061 = vadd.f32 0.0, %v1060
  %v1062 = vpop.f32.mrb[0].mxu0
  %1063 = vdwg.mxu0
  %1065 = vrot.lane.b32.xlu0 %v1061, 64
  %v1066 = vpop.permute.xlu0 %1065
  %v1068 = vadd.f32 %v157, %v1066
  %v1069 = vxor.u32 %v1068, 2147483648
  %v1070 = vmul.f32 %v1069, 1.442695
  %v1071 = vpow.pop %v1070
  %v1072 = vadd.f32 %v1071, 1.0
  %v1073 = vrcp.pop %v1072
  %v1074 = vmul.f32 1.0, %v1073
  %v1075 = vtanh.pop %v1068
  %1077 = vrot.lane.b32.xlu0 %v877, 80
  %v1078 = vpop.permute.xlu0 %1077
  %v1080 = vmul.f32 %v1074, %v1078
  %1082 = vrot.lane.b32.xlu0 %v1075, 96
  %v1083 = vpop.permute.xlu0 %1082
  %v1085 = vmul.f32 %v1074, %v1083
  %1087 = vrot.lane.b32.xlu0 %v1085, 16
  %v1088 = vpop.permute.xlu0 %1087
  %v1090 = vadd.f32 %v1080, %v1088
  %v1091 = vtanh.pop %v1090
  %1093 = vrot.lane.b32.xlu0 %v1091, 32
  %v1094 = vpop.permute.xlu0 %1093
  %v1096 = vmul.f32 %v1074, %v1094
  %1098 = vset.pattern.permute.xlu0 0
  %1099 = vperm.xlu0 %1098, %v50
  %v1100 = vpop.permute.xlu0 %1099
  %v1102 = vmul.f32 %v1100, %v1096
  %v1103 = vsub.f32 1.0, %v50
  %1105 = vset.pattern.permute.xlu0 0
  %1106 = vperm.xlu0 %1105, %v1103
  %v1107 = vpop.permute.xlu0 %1106
  %v1109 = vmul.f32 %v1107, %v869
  %1111 = vrot.lane.b32.xlu0 %v1109, 112
  %v1112 = vpop.permute.xlu0 %1111
  %v1114 = vadd.f32 %v1102, %v1112
  %v1115 = vmul.f32 %v1100, %v1090
  %v1116 = vmul.f32 %v1107, %v877
  %1118 = vrot.lane.b32.xlu0 %v1116, 80
  %v1119 = vpop.permute.xlu0 %1118
  %v1121 = vadd.f32 %v1115, %v1119
  %1123 = vrot.lane.b32.xlu0 %v990, 80
  %v1124 = vpop.permute.xlu0 %1123
  %vm1126 = vcmask 130054
  %1127 = vst.msk [vmem:[#allocation2] sm:$0xc0] %vm1126, %v1124
  %1129 = vrot.lane.b32.xlu0 %v1114, 16
  %v1130 = vpop.permute.xlu0 %1129
  %1132 = vst.msk [vmem:[#allocation3 + $0x8] sm:$0x3] %vm389, %v1130
  %v1133 = vrot.slane %v990, 6
  %1134 = vrot.lane.b32.xlu0 %v1133, 80
  %v1135 = vpop.permute.xlu0 %1134
  %v1136 = vsel %vm160, %v1135, 0
  %1138 = vmatprep.subr.mxu0 0.0
  %1139 = vmatpush1.msra.mxu0 %v41
  %1140 = vmatprep.subr.mxu0 0.0
  %1141 = vmatpush1.msra.mxu0 %v42
  %1142 = vmatprep.subr.mxu0 0.0
  %1143 = vmatpush1.msra.mxu0 0.0
  %1144 = vmatprep.subr.mxu0 0.0
  %1145 = vmatpush1.msra.mxu0 0.0
  %1146 = vmatprep.subr.mxu0 0.0
  %1147 = vmatpush1.msra.mxu0 0.0
  %1148 = vmatprep.subr.mxu0 0.0
  %1149 = vmatpush1.msra.mxu0 0.0
  %1150 = vmatprep.subr.mxu0 0.0
  %1151 = vmatpush1.msra.mxu0 0.0
  %1152 = vmatprep.subr.mxu0 0.0
  %1153 = vmatpush1.msra.mxu0 0.0
  %1154 = vmatprep.subr.mxu0 0.0
  %1155 = vmatpush1.msra.mxu0 0.0
  %1156 = vmatprep.subr.mxu0 0.0
  %1157 = vmatpush1.msra.mxu0 0.0
  %1158 = vmatprep.subr.mxu0 0.0
  %1159 = vmatpush1.msra.mxu0 0.0
  %1160 = vmatprep.subr.mxu0 0.0
  %1161 = vmatpush1.msra.mxu0 0.0
  %1162 = vmatprep.subr.mxu0 0.0
  %1163 = vmatpush1.msra.mxu0 0.0
  %1164 = vmatprep.subr.mxu0 0.0
  %1165 = vmatpush1.msra.mxu0 0.0
  %1166 = vmatprep.subr.mxu0 0.0
  %1167 = vmatpush1.msra.mxu0 0.0
  %1168 = vmatprep.subr.mxu0 0.0
  %1169 = vmatpush1.msra.mxu0 0.0
  %1170 = vmatprep.subr.mxu0 0.0
  %1171 = vmatpush1.msra.mxu0 0.0
  %1172 = vmatprep.subr.mxu0 0.0
  %1173 = vmatpush1.msra.mxu0 0.0
  %1174 = vmatprep.subr.mxu0 0.0
  %1175 = vmatpush1.msra.mxu0 0.0
  %1176 = vmatprep.subr.mxu0 0.0
  %1177 = vmatpush1.msra.mxu0 0.0
  %1178 = vmatprep.subr.mxu0 0.0
  %1179 = vmatpush1.msra.mxu0 0.0
  %1180 = vmatprep.subr.mxu0 0.0
  %1181 = vmatpush1.msra.mxu0 0.0
  %1182 = vmatprep.subr.mxu0 0.0
  %1183 = vmatpush1.msra.mxu0 0.0
  %1184 = vmatprep.subr.mxu0 0.0
  %1185 = vmatpush1.msra.mxu0 0.0
  %1186 = vmatprep.subr.mxu0 0.0
  %1187 = vmatpush1.msra.mxu0 0.0
  %1188 = vmatprep.subr.mxu0 0.0
  %1189 = vmatpush1.msra.mxu0 0.0
  %1190 = vmatprep.subr.mxu0 0.0
  %1191 = vmatpush1.msra.mxu0 0.0
  %1192 = vmatprep.subr.mxu0 0.0
  %1193 = vmatpush1.msra.mxu0 0.0
  %1194 = vmatprep.subr.mxu0 0.0
  %1195 = vmatpush1.msra.mxu0 0.0
  %1196 = vmatprep.subr.mxu0 0.0
  %1197 = vmatpush1.msra.mxu0 0.0
  %1198 = vmatprep.subr.mxu0 0.0
  %1199 = vmatpush1.msra.mxu0 0.0
  %1200 = vmatprep.subr.mxu0 0.0
  %1201 = vmatpush1.msra.mxu0 0.0
  %1202 = vmatprep.mubr.f32.mxu0 0.0
  %1203 = vmatmul.mubr.f32.gmra.mrb[0].mxu0 %v1136
  %v1204 = vpop.f32.mrb[0].mxu0
  %v1205 = vadd.f32 0.0, %v1204
  %v1206 = vpop.f32.mrb[0].mxu0
  %1207 = vdwg.mxu0
  %v1208 = vadd.f32 %v157, %v1205
  %v1209 = vxor.u32 %v1208, 2147483648
  %v1210 = vmul.f32 %v1209, 1.442695
  %v1211 = vpow.pop %v1210
  %v1212 = vadd.f32 %v1211, 1.0
  %v1213 = vrcp.pop %v1212
  %v1214 = vmul.f32 1.0, %v1213
  %v1215 = vtanh.pop %v1208
  %v1217 = vrot.slane %v984, 6
  %v1219 = vmul.f32 %v1214, %v1217
  %1221 = vrot.lane.b32.xlu0 %v1215, 96
  %v1222 = vpop.permute.xlu0 %1221
  %v1224 = vmul.f32 %v1214, %v1222
  %1226 = vrot.lane.b32.xlu0 %v1224, 16
  %v1227 = vpop.permute.xlu0 %1226
  %v1229 = vadd.f32 %v1219, %v1227
  %v1230 = vtanh.pop %v1229
  %1232 = vrot.lane.b32.xlu0 %v1230, 32
  %v1233 = vpop.permute.xlu0 %1232
  %v1235 = vmul.f32 %v1214, %v1233
  %v1236 = vsel %vm160, %v1130, 0
  %1238 = vmatprep.subr.mxu0 0.0
  %1239 = vmatpush1.msra.mxu0 %v43
  %1240 = vmatprep.subr.mxu0 0.0
  %1241 = vmatpush1.msra.mxu0 %v44
  %1242 = vmatprep.subr.mxu0 0.0
  %1243 = vmatpush1.msra.mxu0 0.0
  %1244 = vmatprep.subr.mxu0 0.0
  %1245 = vmatpush1.msra.mxu0 0.0
  %1246 = vmatprep.subr.mxu0 0.0
  %1247 = vmatpush1.msra.mxu0 0.0
  %1248 = vmatprep.subr.mxu0 0.0
  %1249 = vmatpush1.msra.mxu0 0.0
  %1250 = vmatprep.subr.mxu0 0.0
  %1251 = vmatpush1.msra.mxu0 0.0
  %1252 = vmatprep.subr.mxu0 0.0
  %1253 = vmatpush1.msra.mxu0 0.0
  %1254 = vmatprep.subr.mxu0 0.0
  %1255 = vmatpush1.msra.mxu0 0.0
  %1256 = vmatprep.subr.mxu0 0.0
  %1257 = vmatpush1.msra.mxu0 0.0
  %1258 = vmatprep.subr.mxu0 0.0
  %1259 = vmatpush1.msra.mxu0 0.0
  %1260 = vmatprep.subr.mxu0 0.0
  %1261 = vmatpush1.msra.mxu0 0.0
  %1262 = vmatprep.subr.mxu0 0.0
  %1263 = vmatpush1.msra.mxu0 0.0
  %1264 = vmatprep.subr.mxu0 0.0
  %1265 = vmatpush1.msra.mxu0 0.0
  %1266 = vmatprep.subr.mxu0 0.0
  %1267 = vmatpush1.msra.mxu0 0.0
  %1268 = vmatprep.subr.mxu0 0.0
  %1269 = vmatpush1.msra.mxu0 0.0
  %1270 = vmatprep.subr.mxu0 0.0
  %1271 = vmatpush1.msra.mxu0 0.0
  %1272 = vmatprep.subr.mxu0 0.0
  %1273 = vmatpush1.msra.mxu0 0.0
  %1274 = vmatprep.subr.mxu0 0.0
  %1275 = vmatpush1.msra.mxu0 0.0
  %1276 = vmatprep.subr.mxu0 0.0
  %1277 = vmatpush1.msra.mxu0 0.0
  %1278 = vmatprep.subr.mxu0 0.0
  %1279 = vmatpush1.msra.mxu0 0.0
  %1280 = vmatprep.subr.mxu0 0.0
  %1281 = vmatpush1.msra.mxu0 0.0
  %1282 = vmatprep.subr.mxu0 0.0
  %1283 = vmatpush1.msra.mxu0 0.0
  %1284 = vmatprep.subr.mxu0 0.0
  %1285 = vmatpush1.msra.mxu0 0.0
  %1286 = vmatprep.subr.mxu0 0.0
  %1287 = vmatpush1.msra.mxu0 0.0
  %1288 = vmatprep.subr.mxu0 0.0
  %1289 = vmatpush1.msra.mxu0 0.0
  %1290 = vmatprep.subr.mxu0 0.0
  %1291 = vmatpush1.msra.mxu0 0.0
  %1292 = vmatprep.subr.mxu0 0.0
  %1293 = vmatpush1.msra.mxu0 0.0
  %1294 = vmatprep.subr.mxu0 0.0
  %1295 = vmatpush1.msra.mxu0 0.0
  %1296 = vmatprep.subr.mxu0 0.0
  %1297 = vmatpush1.msra.mxu0 0.0
  %1298 = vmatprep.subr.mxu0 0.0
  %1299 = vmatpush1.msra.mxu0 0.0
  %1300 = vmatprep.subr.mxu0 0.0
  %1301 = vmatpush1.msra.mxu0 0.0
  %1302 = vmatprep.mubr.f32.mxu0 0.0
  %1303 = vmatmul.mubr.f32.gmra.mrb[0].mxu0 %v1236
  %v1304 = vpop.f32.mrb[0].mxu0
  %v1305 = vadd.f32 0.0, %v1304
  %v1306 = vpop.f32.mrb[0].mxu0
  %1307 = vdwg.mxu0
  %v1309 = vrot.slane %v1305, 2
  %1310 = vrot.lane.b32.xlu0 %v1309, 64
  %v1311 = vpop.permute.xlu0 %1310
  %v1313 = vadd.f32 %v152, %v1311
  %v1314 = vxor.u32 %v1313, 2147483648
  %v1315 = vmul.f32 %v1314, 1.442695
  %v1316 = vpow.pop %v1315
  %v1317 = vadd.f32 %v1316, 1.0
  %v1318 = vrcp.pop %v1317
  %v1319 = vmul.f32 1.0, %v1318
  %v1320 = vtanh.pop %v1313
  %v1322 = vrot.slane %v1121, 2
  %v1324 = vmul.f32 %v1319, %v1322
  %1326 = vrot.lane.b32.xlu0 %v1320, 96
  %v1327 = vpop.permute.xlu0 %1326
  %v1329 = vmul.f32 %v1319, %v1327
  %1331 = vrot.lane.b32.xlu0 %v1329, 16
  %v1332 = vpop.permute.xlu0 %1331
  %v1334 = vadd.f32 %v1324, %v1332
  %v1335 = vtanh.pop %v1334
  %1337 = vrot.lane.b32.xlu0 %v1335, 32
  %v1338 = vpop.permute.xlu0 %1337
  %v1340 = vmul.f32 %v1319, %v1338
  %1342 = vset.pattern.permute.xlu0 0
  %1343 = vperm.xlu0 %1342, %v49
  %v1344 = vpop.permute.xlu0 %1343
  %v1347 = vrot.slane %v1340, 6
  %1348 = vrot.lane.b32.xlu0 %v1347, 16
  %v1349 = vpop.permute.xlu0 %1348
  %v1351 = vmul.f32 %v1344, %v1349
  %v1352 = vsub.f32 1.0, %v49
  %1354 = vset.pattern.permute.xlu0 0
  %1355 = vperm.xlu0 %1354, %v1352
  %v1356 = vpop.permute.xlu0 %1355
  %v1358 = vmul.f32 %v1356, %v1114
  %1360 = vrot.lane.b32.xlu0 %v1358, 16
  %v1361 = vpop.permute.xlu0 %1360
  %v1363 = vadd.f32 %v1351, %v1361
  %v1365 = vrot.slane %v1334, 6
  %1366 = vrot.lane.b32.xlu0 %v1365, 48
  %v1367 = vpop.permute.xlu0 %1366
  %v1369 = vmul.f32 %v1344, %v1367
  %v1370 = vmul.f32 %v1356, %v1121
  %1372 = vrot.lane.b32.xlu0 %v1370, 48
  %v1373 = vpop.permute.xlu0 %1372
  %v1375 = vadd.f32 %v1369, %v1373
  %1377 = vrot.lane.b32.xlu0 %v1235, 80
  %v1378 = vpop.permute.xlu0 %1377
  %1380 = vst.msk [vmem:[#allocation2 + $0x8] sm:$0x3] %vm389, %v1378
  %1381 = vst.msk [vmem:[#allocation3 + $0x6] sm:$0x3] %vm389, %v1363
  %v1382 = vsel %vm160, %v1378, 0
  %1384 = vmatprep.subr.mxu0 0.0
  %1385 = vmatpush1.msra.mxu0 %v41
  %1386 = vmatprep.subr.mxu0 0.0
  %1387 = vmatpush1.msra.mxu0 %v42
  %1388 = vmatprep.subr.mxu0 0.0
  %1389 = vmatpush1.msra.mxu0 0.0
  %1390 = vmatprep.subr.mxu0 0.0
  %1391 = vmatpush1.msra.mxu0 0.0
  %1392 = vmatprep.subr.mxu0 0.0
  %1393 = vmatpush1.msra.mxu0 0.0
  %1394 = vmatprep.subr.mxu0 0.0
  %1395 = vmatpush1.msra.mxu0 0.0
  %1396 = vmatprep.subr.mxu0 0.0
  %1397 = vmatpush1.msra.mxu0 0.0
  %1398 = vmatprep.subr.mxu0 0.0
  %1399 = vmatpush1.msra.mxu0 0.0
  %1400 = vmatprep.subr.mxu0 0.0
  %1401 = vmatpush1.msra.mxu0 0.0
  %1402 = vmatprep.subr.mxu0 0.0
  %1403 = vmatpush1.msra.mxu0 0.0
  %1404 = vmatprep.subr.mxu0 0.0
  %1405 = vmatpush1.msra.mxu0 0.0
  %1406 = vmatprep.subr.mxu0 0.0
  %1407 = vmatpush1.msra.mxu0 0.0
  %1408 = vmatprep.subr.mxu0 0.0
  %1409 = vmatpush1.msra.mxu0 0.0
  %1410 = vmatprep.subr.mxu0 0.0
  %1411 = vmatpush1.msra.mxu0 0.0
  %1412 = vmatprep.subr.mxu0 0.0
  %1413 = vmatpush1.msra.mxu0 0.0
  %1414 = vmatprep.subr.mxu0 0.0
  %1415 = vmatpush1.msra.mxu0 0.0
  %1416 = vmatprep.subr.mxu0 0.0
  %1417 = vmatpush1.msra.mxu0 0.0
  %1418 = vmatprep.subr.mxu0 0.0
  %1419 = vmatpush1.msra.mxu0 0.0
  %1420 = vmatprep.subr.mxu0 0.0
  %1421 = vmatpush1.msra.mxu0 0.0
  %1422 = vmatprep.subr.mxu0 0.0
  %1423 = vmatpush1.msra.mxu0 0.0
  %1424 = vmatprep.subr.mxu0 0.0
  %1425 = vmatpush1.msra.mxu0 0.0
  %1426 = vmatprep.subr.mxu0 0.0
  %1427 = vmatpush1.msra.mxu0 0.0
  %1428 = vmatprep.subr.mxu0 0.0
  %1429 = vmatpush1.msra.mxu0 0.0
  %1430 = vmatprep.subr.mxu0 0.0
  %1431 = vmatpush1.msra.mxu0 0.0
  %1432 = vmatprep.subr.mxu0 0.0
  %1433 = vmatpush1.msra.mxu0 0.0
  %1434 = vmatprep.subr.mxu0 0.0
  %1435 = vmatpush1.msra.mxu0 0.0
  %1436 = vmatprep.subr.mxu0 0.0
  %1437 = vmatpush1.msra.mxu0 0.0
  %1438 = vmatprep.subr.mxu0 0.0
  %1439 = vmatpush1.msra.mxu0 0.0
  %1440 = vmatprep.subr.mxu0 0.0
  %1441 = vmatpush1.msra.mxu0 0.0
  %1442 = vmatprep.subr.mxu0 0.0
  %1443 = vmatpush1.msra.mxu0 0.0
  %1444 = vmatprep.subr.mxu0 0.0
  %1445 = vmatpush1.msra.mxu0 0.0
  %1446 = vmatprep.subr.mxu0 0.0
  %1447 = vmatpush1.msra.mxu0 0.0
  %1448 = vmatprep.mubr.f32.mxu0 0.0
  %1449 = vmatmul.mubr.f32.gmra.mrb[0].mxu0 %v1382
  %v1450 = vpop.f32.mrb[0].mxu0
  %v1451 = vadd.f32 0.0, %v1450
  %v1452 = vpop.f32.mrb[0].mxu0
  %1453 = vdwg.mxu0
  %v1455 = vrot.slane %v1451, 6
  %v1457 = vadd.f32 %v157, %v1455
  %v1458 = vxor.u32 %v1457, 2147483648
  %v1459 = vmul.f32 %v1458, 1.442695
  %v1460 = vpow.pop %v1459
  %v1461 = vadd.f32 %v1460, 1.0
  %v1462 = vrcp.pop %v1461
  %v1463 = vmul.f32 1.0, %v1462
  %v1464 = vtanh.pop %v1457
  %v1466 = vrot.slane %v1229, 6
  %v1468 = vmul.f32 %v1463, %v1466
  %1470 = vrot.lane.b32.xlu0 %v1464, 96
  %v1471 = vpop.permute.xlu0 %1470
  %v1473 = vmul.f32 %v1463, %v1471
  %1475 = vrot.lane.b32.xlu0 %v1473, 16
  %v1476 = vpop.permute.xlu0 %1475
  %v1478 = vadd.f32 %v1468, %v1476
  %v1479 = vtanh.pop %v1478
  %1481 = vrot.lane.b32.xlu0 %v1479, 32
  %v1482 = vpop.permute.xlu0 %1481
  %v1484 = vmul.f32 %v1463, %v1482
  %v1486 = vsel %vm160, %v1363, 0
  %1488 = vmatprep.subr.mxu0 0.0
  %1489 = vmatpush1.msra.mxu0 %v43
  %1490 = vmatprep.subr.mxu0 0.0
  %1491 = vmatpush1.msra.mxu0 %v44
  %1492 = vmatprep.subr.mxu0 0.0
  %1493 = vmatpush1.msra.mxu0 0.0
  %1494 = vmatprep.subr.mxu0 0.0
  %1495 = vmatpush1.msra.mxu0 0.0
  %1496 = vmatprep.subr.mxu0 0.0
  %1497 = vmatpush1.msra.mxu0 0.0
  %1498 = vmatprep.subr.mxu0 0.0
  %1499 = vmatpush1.msra.mxu0 0.0
  %1500 = vmatprep.subr.mxu0 0.0
  %1501 = vmatpush1.msra.mxu0 0.0
  %1502 = vmatprep.subr.mxu0 0.0
  %1503 = vmatpush1.msra.mxu0 0.0
  %1504 = vmatprep.subr.mxu0 0.0
  %1505 = vmatpush1.msra.mxu0 0.0
  %1506 = vmatprep.subr.mxu0 0.0
  %1507 = vmatpush1.msra.mxu0 0.0
  %1508 = vmatprep.subr.mxu0 0.0
  %1509 = vmatpush1.msra.mxu0 0.0
  %1510 = vmatprep.subr.mxu0 0.0
  %1511 = vmatpush1.msra.mxu0 0.0
  %1512 = vmatprep.subr.mxu0 0.0
  %1513 = vmatpush1.msra.mxu0 0.0
  %1514 = vmatprep.subr.mxu0 0.0
  %1515 = vmatpush1.msra.mxu0 0.0
  %1516 = vmatprep.subr.mxu0 0.0
  %1517 = vmatpush1.msra.mxu0 0.0
  %1518 = vmatprep.subr.mxu0 0.0
  %1519 = vmatpush1.msra.mxu0 0.0
  %1520 = vmatprep.subr.mxu0 0.0
  %1521 = vmatpush1.msra.mxu0 0.0
  %1522 = vmatprep.subr.mxu0 0.0
  %1523 = vmatpush1.msra.mxu0 0.0
  %1524 = vmatprep.subr.mxu0 0.0
  %1525 = vmatpush1.msra.mxu0 0.0
  %1526 = vmatprep.subr.mxu0 0.0
  %1527 = vmatpush1.msra.mxu0 0.0
  %1528 = vmatprep.subr.mxu0 0.0
  %1529 = vmatpush1.msra.mxu0 0.0
  %1530 = vmatprep.subr.mxu0 0.0
  %1531 = vmatpush1.msra.mxu0 0.0
  %1532 = vmatprep.subr.mxu0 0.0
  %1533 = vmatpush1.msra.mxu0 0.0
  %1534 = vmatprep.subr.mxu0 0.0
  %1535 = vmatpush1.msra.mxu0 0.0
  %1536 = vmatprep.subr.mxu0 0.0
  %1537 = vmatpush1.msra.mxu0 0.0
  %1538 = vmatprep.subr.mxu0 0.0
  %1539 = vmatpush1.msra.mxu0 0.0
  %1540 = vmatprep.subr.mxu0 0.0
  %1541 = vmatpush1.msra.mxu0 0.0
  %1542 = vmatprep.subr.mxu0 0.0
  %1543 = vmatpush1.msra.mxu0 0.0
  %1544 = vmatprep.subr.mxu0 0.0
  %1545 = vmatpush1.msra.mxu0 0.0
  %1546 = vmatprep.subr.mxu0 0.0
  %1547 = vmatpush1.msra.mxu0 0.0
  %1548 = vmatprep.subr.mxu0 0.0
  %1549 = vmatpush1.msra.mxu0 0.0
  %1550 = vmatprep.subr.mxu0 0.0
  %1551 = vmatpush1.msra.mxu0 0.0
  %1552 = vmatprep.mubr.f32.mxu0 0.0
  %1553 = vmatmul.mubr.f32.gmra.mrb[0].mxu0 %v1486
  %v1554 = vpop.f32.mrb[0].mxu0
  %v1555 = vadd.f32 0.0, %v1554
  %v1556 = vpop.f32.mrb[0].mxu0
  %1557 = vdwg.mxu0
  %v1559 = vrot.slane %v1555, 4
  %1560 = vrot.lane.b32.xlu0 %v1559, 64
  %v1561 = vpop.permute.xlu0 %1560
  %v1563 = vadd.f32 %v152, %v1561
  %v1564 = vxor.u32 %v1563, 2147483648
  %v1565 = vmul.f32 %v1564, 1.442695
  %v1566 = vpow.pop %v1565
  %v1567 = vadd.f32 %v1566, 1.0
  %v1568 = vrcp.pop %v1567
  %v1569 = vmul.f32 1.0, %v1568
  %v1570 = vtanh.pop %v1563
  %v1572 = vrot.slane %v1375, 4
  %1573 = vrot.lane.b32.xlu0 %v1572, 80
  %v1574 = vpop.permute.xlu0 %1573
  %v1576 = vmul.f32 %v1569, %v1574
  %1578 = vrot.lane.b32.xlu0 %v1570, 96
  %v1579 = vpop.permute.xlu0 %1578
  %v1581 = vmul.f32 %v1569, %v1579
  %1583 = vrot.lane.b32.xlu0 %v1581, 16
  %v1584 = vpop.permute.xlu0 %1583
  %v1586 = vadd.f32 %v1576, %v1584
  %v1587 = vtanh.pop %v1586
  %1589 = vrot.lane.b32.xlu0 %v1587, 32
  %v1590 = vpop.permute.xlu0 %1589
  %v1592 = vmul.f32 %v1569, %v1590
  %1594 = vset.pattern.permute.xlu0 0
  %1595 = vperm.xlu0 %1594, %v48
  %v1596 = vpop.permute.xlu0 %1595
  %v1599 = vrot.slane %v1592, 4
  %1600 = vrot.lane.b32.xlu0 %v1599, 16
  %v1601 = vpop.permute.xlu0 %1600
  %v1603 = vmul.f32 %v1596, %v1601
  %v1604 = vsub.f32 1.0, %v48
  %1606 = vset.pattern.permute.xlu0 0
  %1607 = vperm.xlu0 %1606, %v1604
  %v1608 = vpop.permute.xlu0 %1607
  %v1610 = vmul.f32 %v1608, %v1363
  %v1611 = vadd.f32 %v1603, %v1610
  %v1613 = vrot.slane %v1586, 4
  %1614 = vrot.lane.b32.xlu0 %v1613, 48
  %v1615 = vpop.permute.xlu0 %1614
  %v1617 = vmul.f32 %v1596, %v1615
  %v1618 = vmul.f32 %v1608, %v1375
  %v1619 = vadd.f32 %v1617, %v1618
  %1621 = vrot.lane.b32.xlu0 %v1484, 80
  %v1622 = vpop.permute.xlu0 %1621
  %1624 = vst.msk [vmem:[#allocation2 + $0x8] sm:$0xc] %vm634, %v1622
  %1625 = vst.msk [vmem:[#allocation3 + $0x4] sm:$0x3] %vm389, %v1611
  %v1626 = vrot.slane %v1484, 2
  %1627 = vrot.lane.b32.xlu0 %v1626, 80
  %v1628 = vpop.permute.xlu0 %1627
  %v1629 = vsel %vm160, %v1628, 0
  %1631 = vmatprep.subr.mxu0 0.0
  %1632 = vmatpush1.msra.mxu0 %v41
  %1633 = vmatprep.subr.mxu0 0.0
  %1634 = vmatpush1.msra.mxu0 %v42
  %1635 = vmatprep.subr.mxu0 0.0
  %1636 = vmatpush1.msra.mxu0 0.0
  %1637 = vmatprep.subr.mxu0 0.0
  %1638 = vmatpush1.msra.mxu0 0.0
  %1639 = vmatprep.subr.mxu0 0.0
  %1640 = vmatpush1.msra.mxu0 0.0
  %1641 = vmatprep.subr.mxu0 0.0
  %1642 = vmatpush1.msra.mxu0 0.0
  %1643 = vmatprep.subr.mxu0 0.0
  %1644 = vmatpush1.msra.mxu0 0.0
  %1645 = vmatprep.subr.mxu0 0.0
  %1646 = vmatpush1.msra.mxu0 0.0
  %1647 = vmatprep.subr.mxu0 0.0
  %1648 = vmatpush1.msra.mxu0 0.0
  %1649 = vmatprep.subr.mxu0 0.0
  %1650 = vmatpush1.msra.mxu0 0.0
  %1651 = vmatprep.subr.mxu0 0.0
  %1652 = vmatpush1.msra.mxu0 0.0
  %1653 = vmatprep.subr.mxu0 0.0
  %1654 = vmatpush1.msra.mxu0 0.0
  %1655 = vmatprep.subr.mxu0 0.0
  %1656 = vmatpush1.msra.mxu0 0.0
  %1657 = vmatprep.subr.mxu0 0.0
  %1658 = vmatpush1.msra.mxu0 0.0
  %1659 = vmatprep.subr.mxu0 0.0
  %1660 = vmatpush1.msra.mxu0 0.0
  %1661 = vmatprep.subr.mxu0 0.0
  %1662 = vmatpush1.msra.mxu0 0.0
  %1663 = vmatprep.subr.mxu0 0.0
  %1664 = vmatpush1.msra.mxu0 0.0
  %1665 = vmatprep.subr.mxu0 0.0
  %1666 = vmatpush1.msra.mxu0 0.0
  %1667 = vmatprep.subr.mxu0 0.0
  %1668 = vmatpush1.msra.mxu0 0.0
  %1669 = vmatprep.subr.mxu0 0.0
  %1670 = vmatpush1.msra.mxu0 0.0
  %1671 = vmatprep.subr.mxu0 0.0
  %1672 = vmatpush1.msra.mxu0 0.0
  %1673 = vmatprep.subr.mxu0 0.0
  %1674 = vmatpush1.msra.mxu0 0.0
  %1675 = vmatprep.subr.mxu0 0.0
  %1676 = vmatpush1.msra.mxu0 0.0
  %1677 = vmatprep.subr.mxu0 0.0
  %1678 = vmatpush1.msra.mxu0 0.0
  %1679 = vmatprep.subr.mxu0 0.0
  %1680 = vmatpush1.msra.mxu0 0.0
  %1681 = vmatprep.subr.mxu0 0.0
  %1682 = vmatpush1.msra.mxu0 0.0
  %1683 = vmatprep.subr.mxu0 0.0
  %1684 = vmatpush1.msra.mxu0 0.0
  %1685 = vmatprep.subr.mxu0 0.0
  %1686 = vmatpush1.msra.mxu0 0.0
  %1687 = vmatprep.subr.mxu0 0.0
  %1688 = vmatpush1.msra.mxu0 0.0
  %1689 = vmatprep.subr.mxu0 0.0
  %1690 = vmatpush1.msra.mxu0 0.0
  %1691 = vmatprep.subr.mxu0 0.0
  %1692 = vmatpush1.msra.mxu0 0.0
  %1693 = vmatprep.subr.mxu0 0.0
  %1694 = vmatpush1.msra.mxu0 0.0
  %1695 = vmatprep.mubr.f32.mxu0 0.0
  %1696 = vmatmul.mubr.f32.gmra.mrb[0].mxu0 %v1629
  %v1697 = vpop.f32.mrb[0].mxu0
  %v1698 = vadd.f32 0.0, %v1697
  %v1699 = vpop.f32.mrb[0].mxu0
  %1700 = vdwg.mxu0
  %v1702 = vrot.slane %v1698, 4
  %v1704 = vadd.f32 %v157, %v1702
  %v1705 = vxor.u32 %v1704, 2147483648
  %v1706 = vmul.f32 %v1705, 1.442695
  %v1707 = vpow.pop %v1706
  %v1708 = vadd.f32 %v1707, 1.0
  %v1709 = vrcp.pop %v1708
  %v1710 = vmul.f32 1.0, %v1709
  %v1711 = vtanh.pop %v1704
  %v1713 = vrot.slane %v1478, 6
  %v1715 = vmul.f32 %v1710, %v1713
  %1717 = vrot.lane.b32.xlu0 %v1711, 96
  %v1718 = vpop.permute.xlu0 %1717
  %v1720 = vmul.f32 %v1710, %v1718
  %1722 = vrot.lane.b32.xlu0 %v1720, 16
  %v1723 = vpop.permute.xlu0 %1722
  %v1725 = vadd.f32 %v1715, %v1723
  %v1726 = vtanh.pop %v1725
  %1728 = vrot.lane.b32.xlu0 %v1726, 32
  %v1729 = vpop.permute.xlu0 %1728
  %v1731 = vmul.f32 %v1710, %v1729
  %v1733 = vsel %vm160, %v1611, 0
  %1735 = vmatprep.subr.mxu0 0.0
  %1736 = vmatpush1.msra.mxu0 %v43
  %1737 = vmatprep.subr.mxu0 0.0
  %1738 = vmatpush1.msra.mxu0 %v44
  %1739 = vmatprep.subr.mxu0 0.0
  %1740 = vmatpush1.msra.mxu0 0.0
  %1741 = vmatprep.subr.mxu0 0.0
  %1742 = vmatpush1.msra.mxu0 0.0
  %1743 = vmatprep.subr.mxu0 0.0
  %1744 = vmatpush1.msra.mxu0 0.0
  %1745 = vmatprep.subr.mxu0 0.0
  %1746 = vmatpush1.msra.mxu0 0.0
  %1747 = vmatprep.subr.mxu0 0.0
  %1748 = vmatpush1.msra.mxu0 0.0
  %1749 = vmatprep.subr.mxu0 0.0
  %1750 = vmatpush1.msra.mxu0 0.0
  %1751 = vmatprep.subr.mxu0 0.0
  %1752 = vmatpush1.msra.mxu0 0.0
  %1753 = vmatprep.subr.mxu0 0.0
  %1754 = vmatpush1.msra.mxu0 0.0
  %1755 = vmatprep.subr.mxu0 0.0
  %1756 = vmatpush1.msra.mxu0 0.0
  %1757 = vmatprep.subr.mxu0 0.0
  %1758 = vmatpush1.msra.mxu0 0.0
  %1759 = vmatprep.subr.mxu0 0.0
  %1760 = vmatpush1.msra.mxu0 0.0
  %1761 = vmatprep.subr.mxu0 0.0
  %1762 = vmatpush1.msra.mxu0 0.0
  %1763 = vmatprep.subr.mxu0 0.0
  %1764 = vmatpush1.msra.mxu0 0.0
  %1765 = vmatprep.subr.mxu0 0.0
  %1766 = vmatpush1.msra.mxu0 0.0
  %1767 = vmatprep.subr.mxu0 0.0
  %1768 = vmatpush1.msra.mxu0 0.0
  %1769 = vmatprep.subr.mxu0 0.0
  %1770 = vmatpush1.msra.mxu0 0.0
  %1771 = vmatprep.subr.mxu0 0.0
  %1772 = vmatpush1.msra.mxu0 0.0
  %1773 = vmatprep.subr.mxu0 0.0
  %1774 = vmatpush1.msra.mxu0 0.0
  %1775 = vmatprep.subr.mxu0 0.0
  %1776 = vmatpush1.msra.mxu0 0.0
  %1777 = vmatprep.subr.mxu0 0.0
  %1778 = vmatpush1.msra.mxu0 0.0
  %1779 = vmatprep.subr.mxu0 0.0
  %1780 = vmatpush1.msra.mxu0 0.0
  %1781 = vmatprep.subr.mxu0 0.0
  %1782 = vmatpush1.msra.mxu0 0.0
  %1783 = vmatprep.subr.mxu0 0.0
  %1784 = vmatpush1.msra.mxu0 0.0
  %1785 = vmatprep.subr.mxu0 0.0
  %1786 = vmatpush1.msra.mxu0 0.0
  %1787 = vmatprep.subr.mxu0 0.0
  %1788 = vmatpush1.msra.mxu0 0.0
  %1789 = vmatprep.subr.mxu0 0.0
  %1790 = vmatpush1.msra.mxu0 0.0
  %1791 = vmatprep.subr.mxu0 0.0
  %1792 = vmatpush1.msra.mxu0 0.0
  %1793 = vmatprep.subr.mxu0 0.0
  %1794 = vmatpush1.msra.mxu0 0.0
  %1795 = vmatprep.subr.mxu0 0.0
  %1796 = vmatpush1.msra.mxu0 0.0
  %1797 = vmatprep.subr.mxu0 0.0
  %1798 = vmatpush1.msra.mxu0 0.0
  %1799 = vmatprep.mubr.f32.mxu0 0.0
  %1800 = vmatmul.mubr.f32.gmra.mrb[0].mxu0 %v1733
  %v1801 = vpop.f32.mrb[0].mxu0
  %v1802 = vadd.f32 0.0, %v1801
  %v1803 = vpop.f32.mrb[0].mxu0
  %1804 = vdwg.mxu0
  %v1806 = vrot.slane %v1802, 6
  %1807 = vrot.lane.b32.xlu0 %v1806, 64
  %v1808 = vpop.permute.xlu0 %1807
  %v1810 = vadd.f32 %v152, %v1808
  %v1811 = vxor.u32 %v1810, 2147483648
  %v1812 = vmul.f32 %v1811, 1.442695
  %v1813 = vpow.pop %v1812
  %v1814 = vadd.f32 %v1813, 1.0
  %v1815 = vrcp.pop %v1814
  %v1816 = vmul.f32 1.0, %v1815
  %v1817 = vtanh.pop %v1810
  %v1819 = vrot.slane %v1619, 6
  %1820 = vrot.lane.b32.xlu0 %v1819, 80
  %v1821 = vpop.permute.xlu0 %1820
  %v1823 = vmul.f32 %v1816, %v1821
  %1825 = vrot.lane.b32.xlu0 %v1817, 96
  %v1826 = vpop.permute.xlu0 %1825
  %v1828 = vmul.f32 %v1816, %v1826
  %1830 = vrot.lane.b32.xlu0 %v1828, 16
  %v1831 = vpop.permute.xlu0 %1830
  %v1833 = vadd.f32 %v1823, %v1831
  %v1834 = vtanh.pop %v1833
  %1836 = vrot.lane.b32.xlu0 %v1834, 32
  %v1837 = vpop.permute.xlu0 %1836
  %v1839 = vmul.f32 %v1816, %v1837
  %1841 = vset.pattern.permute.xlu0 0
  %1842 = vperm.xlu0 %1841, %v47
  %v1843 = vpop.permute.xlu0 %1842
  %v1846 = vrot.slane %v1839, 2
  %1847 = vrot.lane.b32.xlu0 %v1846, 16
  %v1848 = vpop.permute.xlu0 %1847
  %v1850 = vmul.f32 %v1843, %v1848
  %v1851 = vsub.f32 1.0, %v47
  %1853 = vset.pattern.permute.xlu0 0
  %1854 = vperm.xlu0 %1853, %v1851
  %v1855 = vpop.permute.xlu0 %1854
  %v1857 = vmul.f32 %v1855, %v1611
  %v1858 = vadd.f32 %v1850, %v1857
  %v1860 = vrot.slane %v1833, 2
  %1861 = vrot.lane.b32.xlu0 %v1860, 48
  %v1862 = vpop.permute.xlu0 %1861
  %v1864 = vmul.f32 %v1843, %v1862
  %v1865 = vmul.f32 %v1855, %v1619
  %v1866 = vadd.f32 %v1864, %v1865
  %1868 = vrot.lane.b32.xlu0 %v1731, 80
  %v1869 = vpop.permute.xlu0 %1868
  %1871 = vst.msk [vmem:[#allocation2 + $0x8] sm:$0x30] %vm882, %v1869
  %1872 = vst.msk [vmem:[#allocation3 + $0x2] sm:$0x3] %vm389, %v1858
  %v1873 = vrot.slane %v1731, 4
  %1874 = vrot.lane.b32.xlu0 %v1873, 80
  %v1875 = vpop.permute.xlu0 %1874
  %v1876 = vsel %vm160, %v1875, 0
  %1878 = vmatprep.subr.mxu0 0.0
  %1879 = vmatpush1.msra.mxu0 %v41
  %1880 = vmatprep.subr.mxu0 0.0
  %1881 = vmatpush1.msra.mxu0 %v42
  %1882 = vmatprep.subr.mxu0 0.0
  %1883 = vmatpush1.msra.mxu0 0.0
  %1884 = vmatprep.subr.mxu0 0.0
  %1885 = vmatpush1.msra.mxu0 0.0
  %1886 = vmatprep.subr.mxu0 0.0
  %1887 = vmatpush1.msra.mxu0 0.0
  %1888 = vmatprep.subr.mxu0 0.0
  %1889 = vmatpush1.msra.mxu0 0.0
  %1890 = vmatprep.subr.mxu0 0.0
  %1891 = vmatpush1.msra.mxu0 0.0
  %1892 = vmatprep.subr.mxu0 0.0
  %1893 = vmatpush1.msra.mxu0 0.0
  %1894 = vmatprep.subr.mxu0 0.0
  %1895 = vmatpush1.msra.mxu0 0.0
  %1896 = vmatprep.subr.mxu0 0.0
  %1897 = vmatpush1.msra.mxu0 0.0
  %1898 = vmatprep.subr.mxu0 0.0
  %1899 = vmatpush1.msra.mxu0 0.0
  %1900 = vmatprep.subr.mxu0 0.0
  %1901 = vmatpush1.msra.mxu0 0.0
  %1902 = vmatprep.subr.mxu0 0.0
  %1903 = vmatpush1.msra.mxu0 0.0
  %1904 = vmatprep.subr.mxu0 0.0
  %1905 = vmatpush1.msra.mxu0 0.0
  %1906 = vmatprep.subr.mxu0 0.0
  %1907 = vmatpush1.msra.mxu0 0.0
  %1908 = vmatprep.subr.mxu0 0.0
  %1909 = vmatpush1.msra.mxu0 0.0
  %1910 = vmatprep.subr.mxu0 0.0
  %1911 = vmatpush1.msra.mxu0 0.0
  %1912 = vmatprep.subr.mxu0 0.0
  %1913 = vmatpush1.msra.mxu0 0.0
  %1914 = vmatprep.subr.mxu0 0.0
  %1915 = vmatpush1.msra.mxu0 0.0
  %1916 = vmatprep.subr.mxu0 0.0
  %1917 = vmatpush1.msra.mxu0 0.0
  %1918 = vmatprep.subr.mxu0 0.0
  %1919 = vmatpush1.msra.mxu0 0.0
  %1920 = vmatprep.subr.mxu0 0.0
  %1921 = vmatpush1.msra.mxu0 0.0
  %1922 = vmatprep.subr.mxu0 0.0
  %1923 = vmatpush1.msra.mxu0 0.0
  %1924 = vmatprep.subr.mxu0 0.0
  %1925 = vmatpush1.msra.mxu0 0.0
  %1926 = vmatprep.subr.mxu0 0.0
  %1927 = vmatpush1.msra.mxu0 0.0
  %1928 = vmatprep.subr.mxu0 0.0
  %1929 = vmatpush1.msra.mxu0 0.0
  %1930 = vmatprep.subr.mxu0 0.0
  %1931 = vmatpush1.msra.mxu0 0.0
  %1932 = vmatprep.subr.mxu0 0.0
  %1933 = vmatpush1.msra.mxu0 0.0
  %1934 = vmatprep.subr.mxu0 0.0
  %1935 = vmatpush1.msra.mxu0 0.0
  %1936 = vmatprep.subr.mxu0 0.0
  %1937 = vmatpush1.msra.mxu0 0.0
  %1938 = vmatprep.subr.mxu0 0.0
  %1939 = vmatpush1.msra.mxu0 0.0
  %1940 = vmatprep.subr.mxu0 0.0
  %1941 = vmatpush1.msra.mxu0 0.0
  %1942 = vmatprep.mubr.f32.mxu0 0.0
  %1943 = vmatmul.mubr.f32.gmra.mrb[0].mxu0 %v1876
  %v1944 = vpop.f32.mrb[0].mxu0
  %v1945 = vadd.f32 0.0, %v1944
  %v1946 = vpop.f32.mrb[0].mxu0
  %1947 = vdwg.mxu0
  %v1949 = vrot.slane %v1945, 2
  %v1951 = vadd.f32 %v157, %v1949
  %v1952 = vxor.u32 %v1951, 2147483648
  %v1953 = vmul.f32 %v1952, 1.442695
  %v1954 = vpow.pop %v1953
  %v1955 = vadd.f32 %v1954, 1.0
  %v1956 = vrcp.pop %v1955
  %v1957 = vmul.f32 1.0, %v1956
  %v1958 = vtanh.pop %v1951
  %v1960 = vrot.slane %v1725, 6
  %v1962 = vmul.f32 %v1957, %v1960
  %1964 = vrot.lane.b32.xlu0 %v1958, 96
  %v1965 = vpop.permute.xlu0 %1964
  %v1967 = vmul.f32 %v1957, %v1965
  %1969 = vrot.lane.b32.xlu0 %v1967, 16
  %v1970 = vpop.permute.xlu0 %1969
  %v1972 = vadd.f32 %v1962, %v1970
  %v1973 = vtanh.pop %v1972
  %1975 = vrot.lane.b32.xlu0 %v1973, 32
  %v1976 = vpop.permute.xlu0 %1975
  %v1978 = vmul.f32 %v1957, %v1976
  %v1980 = vsel %vm160, %v1858, 0
  %1982 = vmatprep.subr.mxu0 0.0
  %1983 = vmatpush1.msra.mxu0 %v43
  %1984 = vmatprep.subr.mxu0 0.0
  %1985 = vmatpush1.msra.mxu0 %v44
  %1986 = vmatprep.subr.mxu0 0.0
  %1987 = vmatpush1.msra.mxu0 0.0
  %1988 = vmatprep.subr.mxu0 0.0
  %1989 = vmatpush1.msra.mxu0 0.0
  %1990 = vmatprep.subr.mxu0 0.0
  %1991 = vmatpush1.msra.mxu0 0.0
  %1992 = vmatprep.subr.mxu0 0.0
  %1993 = vmatpush1.msra.mxu0 0.0
  %1994 = vmatprep.subr.mxu0 0.0
  %1995 = vmatpush1.msra.mxu0 0.0
  %1996 = vmatprep.subr.mxu0 0.0
  %1997 = vmatpush1.msra.mxu0 0.0
  %1998 = vmatprep.subr.mxu0 0.0
  %1999 = vmatpush1.msra.mxu0 0.0
  %2000 = vmatprep.subr.mxu0 0.0
  %2001 = vmatpush1.msra.mxu0 0.0
  %2002 = vmatprep.subr.mxu0 0.0
  %2003 = vmatpush1.msra.mxu0 0.0
  %2004 = vmatprep.subr.mxu0 0.0
  %2005 = vmatpush1.msra.mxu0 0.0
  %2006 = vmatprep.subr.mxu0 0.0
  %2007 = vmatpush1.msra.mxu0 0.0
  %2008 = vmatprep.subr.mxu0 0.0
  %2009 = vmatpush1.msra.mxu0 0.0
  %2010 = vmatprep.subr.mxu0 0.0
  %2011 = vmatpush1.msra.mxu0 0.0
  %2012 = vmatprep.subr.mxu0 0.0
  %2013 = vmatpush1.msra.mxu0 0.0
  %2014 = vmatprep.subr.mxu0 0.0
  %2015 = vmatpush1.msra.mxu0 0.0
  %2016 = vmatprep.subr.mxu0 0.0
  %2017 = vmatpush1.msra.mxu0 0.0
  %2018 = vmatprep.subr.mxu0 0.0
  %2019 = vmatpush1.msra.mxu0 0.0
  %2020 = vmatprep.subr.mxu0 0.0
  %2021 = vmatpush1.msra.mxu0 0.0
  %2022 = vmatprep.subr.mxu0 0.0
  %2023 = vmatpush1.msra.mxu0 0.0
  %2024 = vmatprep.subr.mxu0 0.0
  %2025 = vmatpush1.msra.mxu0 0.0
  %2026 = vmatprep.subr.mxu0 0.0
  %2027 = vmatpush1.msra.mxu0 0.0
  %2028 = vmatprep.subr.mxu0 0.0
  %2029 = vmatpush1.msra.mxu0 0.0
  %2030 = vmatprep.subr.mxu0 0.0
  %2031 = vmatpush1.msra.mxu0 0.0
  %2032 = vmatprep.subr.mxu0 0.0
  %2033 = vmatpush1.msra.mxu0 0.0
  %2034 = vmatprep.subr.mxu0 0.0
  %2035 = vmatpush1.msra.mxu0 0.0
  %2036 = vmatprep.subr.mxu0 0.0
  %2037 = vmatpush1.msra.mxu0 0.0
  %2038 = vmatprep.subr.mxu0 0.0
  %2039 = vmatpush1.msra.mxu0 0.0
  %2040 = vmatprep.subr.mxu0 0.0
  %2041 = vmatpush1.msra.mxu0 0.0
  %2042 = vmatprep.subr.mxu0 0.0
  %2043 = vmatpush1.msra.mxu0 0.0
  %2044 = vmatprep.subr.mxu0 0.0
  %2045 = vmatpush1.msra.mxu0 0.0
  %2046 = vmatprep.mubr.f32.mxu0 0.0
  %2047 = vmatmul.mubr.f32.gmra.mrb[0].mxu0 %v1980
  %v2048 = vpop.f32.mrb[0].mxu0
  %v2049 = vadd.f32 0.0, %v2048
  %v2050 = vpop.f32.mrb[0].mxu0
  %2051 = vdwg.mxu0
  %2053 = vrot.lane.b32.xlu0 %v2049, 64
  %v2054 = vpop.permute.xlu0 %2053
  %v2056 = vadd.f32 %v152, %v2054
  %v2057 = vxor.u32 %v2056, 2147483648
  %v2058 = vmul.f32 %v2057, 1.442695
  %v2059 = vpow.pop %v2058
  %v2060 = vadd.f32 %v2059, 1.0
  %v2061 = vrcp.pop %v2060
  %v2062 = vmul.f32 1.0, %v2061
  %v2063 = vtanh.pop %v2056
  %2065 = vrot.lane.b32.xlu0 %v1866, 80
  %v2066 = vpop.permute.xlu0 %2065
  %v2068 = vmul.f32 %v2062, %v2066
  %2070 = vrot.lane.b32.xlu0 %v2063, 96
  %v2071 = vpop.permute.xlu0 %2070
  %v2073 = vmul.f32 %v2062, %v2071
  %2075 = vrot.lane.b32.xlu0 %v2073, 16
  %v2076 = vpop.permute.xlu0 %2075
  %v2078 = vadd.f32 %v2068, %v2076
  %v2079 = vtanh.pop %v2078
  %2081 = vrot.lane.b32.xlu0 %v2079, 32
  %v2082 = vpop.permute.xlu0 %2081
  %v2084 = vmul.f32 %v2062, %v2082
  %2086 = vset.pattern.permute.xlu0 0
  %2087 = vperm.xlu0 %2086, %v46
  %v2088 = vpop.permute.xlu0 %2087
  %v2090 = vmul.f32 %v2088, %v2084
  %v2091 = vsub.f32 1.0, %v46
  %2093 = vset.pattern.permute.xlu0 0
  %2094 = vperm.xlu0 %2093, %v2091
  %v2095 = vpop.permute.xlu0 %2094
  %v2097 = vmul.f32 %v2095, %v1858
  %2099 = vrot.lane.b32.xlu0 %v2097, 112
  %v2100 = vpop.permute.xlu0 %2099
  %v2102 = vadd.f32 %v2090, %v2100
  %2104 = vrot.lane.b32.xlu0 %v1978, 80
  %v2105 = vpop.permute.xlu0 %2104
  %2107 = vst.msk [vmem:[#allocation2 + $0x8] sm:$0xc0] %vm1126, %v2105
  %2109 = vrot.lane.b32.xlu0 %v2102, 16
  %v2110 = vpop.permute.xlu0 %2109
  %2112 = vst.msk [vmem:[#allocation3] sm:$0x3] %vm389, %v2110
  %v2113 = vld [vmem:[#allocation2] sm:$0xff]
  %v2114 = vld [vmem:[#allocation2 + $0x8] sm:$0xff]
  %v2115 = vld [vmem:[%s6] sm:$0xff]
  %v2116 = vld [vmem:[%s6 + $0x8] sm:$0xff]
  %v2117 = vld [vmem:[#allocation3] sm:$0xff]
  %v2118 = vld [vmem:[#allocation3 + $0x8] sm:$0xff]
  %v2119 = vld [vmem:[%s7] sm:$0xff]
  %v2120 = vld [vmem:[%s7 + $0x8] sm:$0xff]
  %v2122 = vsel %vm160, %v2117, 0
  %v2125 = vsel %vm160, %v2118, 0
  %2127 = vmatprep.subr.mxu0 0.0
  %2128 = vmatpush1.msra.mxu0 %v2119
  %2129 = vmatprep.subr.mxu0 0.0
  %2130 = vmatpush1.msra.mxu0 %v2120
  %2131 = vmatprep.subr.mxu0 0.0
  %2132 = vmatpush1.msra.mxu0 0.0
  %2133 = vmatprep.subr.mxu0 0.0
  %2134 = vmatpush1.msra.mxu0 0.0
  %2135 = vmatprep.subr.mxu0 0.0
  %2136 = vmatpush1.msra.mxu0 0.0
  %2137 = vmatprep.subr.mxu0 0.0
  %2138 = vmatpush1.msra.mxu0 0.0
  %2139 = vmatprep.subr.mxu0 0.0
  %2140 = vmatpush1.msra.mxu0 0.0
  %2141 = vmatprep.subr.mxu0 0.0
  %2142 = vmatpush1.msra.mxu0 0.0
  %2143 = vmatprep.subr.mxu0 0.0
  %2144 = vmatpush1.msra.mxu0 0.0
  %2145 = vmatprep.subr.mxu0 0.0
  %2146 = vmatpush1.msra.mxu0 0.0
  %2147 = vmatprep.subr.mxu0 0.0
  %2148 = vmatpush1.msra.mxu0 0.0
  %2149 = vmatprep.subr.mxu0 0.0
  %2150 = vmatpush1.msra.mxu0 0.0
  %2151 = vmatprep.subr.mxu0 0.0
  %2152 = vmatpush1.msra.mxu0 0.0
  %2153 = vmatprep.subr.mxu0 0.0
  %2154 = vmatpush1.msra.mxu0 0.0
  %2155 = vmatprep.subr.mxu0 0.0
  %2156 = vmatpush1.msra.mxu0 0.0
  %2157 = vmatprep.subr.mxu0 0.0
  %2158 = vmatpush1.msra.mxu0 0.0
  %2159 = vmatprep.subr.mxu0 0.0
  %2160 = vmatpush1.msra.mxu0 0.0
  %2161 = vmatprep.subr.mxu0 0.0
  %2162 = vmatpush1.msra.mxu0 0.0
  %2163 = vmatprep.subr.mxu0 0.0
  %2164 = vmatpush1.msra.mxu0 0.0
  %2165 = vmatprep.subr.mxu0 0.0
  %2166 = vmatpush1.msra.mxu0 0.0
  %2167 = vmatprep.subr.mxu0 0.0
  %2168 = vmatpush1.msra.mxu0 0.0
  %2169 = vmatprep.subr.mxu0 0.0
  %2170 = vmatpush1.msra.mxu0 0.0
  %2171 = vmatprep.subr.mxu0 0.0
  %2172 = vmatpush1.msra.mxu0 0.0
  %2173 = vmatprep.subr.mxu0 0.0
  %2174 = vmatpush1.msra.mxu0 0.0
  %2175 = vmatprep.subr.mxu0 0.0
  %2176 = vmatpush1.msra.mxu0 0.0
  %2177 = vmatprep.subr.mxu0 0.0
  %2178 = vmatpush1.msra.mxu0 0.0
  %2179 = vmatprep.subr.mxu0 0.0
  %2180 = vmatpush1.msra.mxu0 0.0
  %2181 = vmatprep.subr.mxu0 0.0
  %2182 = vmatpush1.msra.mxu0 0.0
  %2183 = vmatprep.subr.mxu0 0.0
  %2184 = vmatpush1.msra.mxu0 0.0
  %2185 = vmatprep.subr.mxu0 0.0
  %2186 = vmatpush1.msra.mxu0 0.0
  %2187 = vmatprep.subr.mxu0 0.0
  %2188 = vmatpush1.msra.mxu0 0.0
  %2189 = vmatprep.subr.mxu0 0.0
  %2190 = vmatpush1.msra.mxu0 0.0
  %2191 = vmatprep.mubr.f32.mxu0 0.0
  %2192 = vmatmul.mubr.f32.gmra.mrb[0].mxu0 %v2122
  %v2193 = vpop.f32.mrb[0].mxu0
  %v2194 = vadd.f32 0.0, %v2193
  %v2195 = vpop.f32.mrb[0].mxu0
  %2196 = vmatprep.mubr.f32.mxu0 0.0
  %2197 = vmatmul.mubr.f32.gmra.mrb[0].mxu0 %v2125
  %v2198 = vpop.f32.mrb[0].mxu0
  %v2199 = vadd.f32 0.0, %v2198
  %v2200 = vpop.f32.mrb[0].mxu0
  %2201 = vdwg.mxu0
  %v2203 = vsel %vm160, %v2113, 0
  %v2206 = vsel %vm160, %v2114, 0
  %2208 = vmatprep.subr.mxu0 0.0
  %2209 = vmatpush1.msra.mxu0 %v2115
  %2210 = vmatprep.subr.mxu0 0.0
  %2211 = vmatpush1.msra.mxu0 %v2116
  %2212 = vmatprep.subr.mxu0 0.0
  %2213 = vmatpush1.msra.mxu0 0.0
  %2214 = vmatprep.subr.mxu0 0.0
  %2215 = vmatpush1.msra.mxu0 0.0
  %2216 = vmatprep.subr.mxu0 0.0
  %2217 = vmatpush1.msra.mxu0 0.0
  %2218 = vmatprep.subr.mxu0 0.0
  %2219 = vmatpush1.msra.mxu0 0.0
  %2220 = vmatprep.subr.mxu0 0.0
  %2221 = vmatpush1.msra.mxu0 0.0
  %2222 = vmatprep.subr.mxu0 0.0
  %2223 = vmatpush1.msra.mxu0 0.0
  %2224 = vmatprep.subr.mxu0 0.0
  %2225 = vmatpush1.msra.mxu0 0.0
  %2226 = vmatprep.subr.mxu0 0.0
  %2227 = vmatpush1.msra.mxu0 0.0
  %2228 = vmatprep.subr.mxu0 0.0
  %2229 = vmatpush1.msra.mxu0 0.0
  %2230 = vmatprep.subr.mxu0 0.0
  %2231 = vmatpush1.msra.mxu0 0.0
  %2232 = vmatprep.subr.mxu0 0.0
  %2233 = vmatpush1.msra.mxu0 0.0
  %2234 = vmatprep.subr.mxu0 0.0
  %2235 = vmatpush1.msra.mxu0 0.0
  %2236 = vmatprep.subr.mxu0 0.0
  %2237 = vmatpush1.msra.mxu0 0.0
  %2238 = vmatprep.subr.mxu0 0.0
  %2239 = vmatpush1.msra.mxu0 0.0
  %2240 = vmatprep.subr.mxu0 0.0
  %2241 = vmatpush1.msra.mxu0 0.0
  %2242 = vmatprep.subr.mxu0 0.0
  %2243 = vmatpush1.msra.mxu0 0.0
  %2244 = vmatprep.subr.mxu0 0.0
  %2245 = vmatpush1.msra.mxu0 0.0
  %2246 = vmatprep.subr.mxu0 0.0
  %2247 = vmatpush1.msra.mxu0 0.0
  %2248 = vmatprep.subr.mxu0 0.0
  %2249 = vmatpush1.msra.mxu0 0.0
  %2250 = vmatprep.subr.mxu0 0.0
  %2251 = vmatpush1.msra.mxu0 0.0
  %2252 = vmatprep.subr.mxu0 0.0
  %2253 = vmatpush1.msra.mxu0 0.0
  %2254 = vmatprep.subr.mxu0 0.0
  %2255 = vmatpush1.msra.mxu0 0.0
  %2256 = vmatprep.subr.mxu0 0.0
  %2257 = vmatpush1.msra.mxu0 0.0
  %2258 = vmatprep.subr.mxu0 0.0
  %2259 = vmatpush1.msra.mxu0 0.0
  %2260 = vmatprep.subr.mxu0 0.0
  %2261 = vmatpush1.msra.mxu0 0.0
  %2262 = vmatprep.subr.mxu0 0.0
  %2263 = vmatpush1.msra.mxu0 0.0
  %2264 = vmatprep.subr.mxu0 0.0
  %2265 = vmatpush1.msra.mxu0 0.0
  %2266 = vmatprep.subr.mxu0 0.0
  %2267 = vmatpush1.msra.mxu0 0.0
  %2268 = vmatprep.subr.mxu0 0.0
  %2269 = vmatpush1.msra.mxu0 0.0
  %2270 = vmatprep.subr.mxu0 0.0
  %2271 = vmatpush1.msra.mxu0 0.0
  %2272 = vmatprep.mubr.f32.mxu0 0.0
  %2273 = vmatmul.mubr.f32.gmra.mrb[0].mxu0 %v2203
  %v2274 = vpop.f32.mrb[0].mxu0
  %v2275 = vadd.f32 %v2194, %v2274
  %v2276 = vpop.f32.mrb[0].mxu0
  %2277 = vmatprep.mubr.f32.mxu0 0.0
  %2278 = vmatmul.mubr.f32.gmra.mrb[0].mxu0 %v2206
  %v2279 = vpop.f32.mrb[0].mxu0
  %v2280 = vadd.f32 %v2199, %v2279
  %v2281 = vpop.f32.mrb[0].mxu0
  %2282 = vdwg.mxu0
  %v2283 = vld [vmem:[%s8] sm:$0x1]
  %v2285 = vlaneseq
  %v2286 = vshrl.u32 %v2285, 7
  %v2287 = vsub.s32 0, %v2286
  %v2288 = vrot.slane %v2283, %v2287
  %v2290 = vadd.f32 %v2275, %v2288
  %v2291 = vadd.f32 %v2280, %v2288
  %v2292 = vlaneseq
  %v2293 = vand.u32 %v2292, 127
  %vm2294 = vcmp.eq.s32.totalorder %v2293, 2
  %v2295 = vsel %vm2294, 0.0, -10000.0
  %v2296 = vmul.f32 %v2290, %v2088
  %v2299 = vunpack.c.l.s4 1966171168
  %v2300 = vunpack.c.0.s8 %v2299
  %v2301 = vlaneseq
  %v2302 = vshrl.u32 %v2301, 7
  %v2303 = vsub.s32 %v2300, %v2302
  %v2304 = vrot.slane %v2295, %v2303
  %v2305 = vcombine.high %v2304, %v2304
  %v2307 = vunpack.c.l.s4 1966171168
  %v2308 = vunpack.c.0.s8 %v2307
  %v2309 = vlaneseq
  %v2310 = vshrl.u32 %v2309, 7
  %v2311 = vsub.s32 %v2308, %v2310
  %v2312 = vrot.slane %v2304, %v2311
  %v2314 = vunpack.c.l.s4 1966171168
  %v2315 = vunpack.c.0.s8 %v2314
  %v2316 = vlaneseq
  %v2317 = vshrl.u32 %v2316, 7
  %v2318 = vsub.s32 %v2315, %v2317
  %v2319 = vrot.slane %v2305, %v2318
  %v2320 = vlaneseq
  %v2321 = vshrl.u32 %v2320, 7
  %v2322 = vsub.s32 0, %v2321
  %v2323 = vrot.slane %v2312, %v2322
  %v2324 = vlaneseq
  %v2325 = vshrl.u32 %v2324, 7
  %v2326 = vsub.s32 0, %v2325
  %v2327 = vrot.slane %v2319, %v2326
  %v2330 = vadd.f32 %v2323, %v45
  %v2331 = vadd.f32 %v2327, %v45
  %vm2332 = vcmask 64512
  %v2333 = vsel %vm2332, %v2330, -inf
  %2334 = vmax.xlane.f32.xlu0 %v2333
  %v2335 = vpop.xlane.xlu0 %2334
  %v2336 = vsel %vm2332, %v2331, -inf
  %2337 = vmax.xlane.f32.xlu0 %v2336
  %v2338 = vpop.xlane.xlu0 %2337
  %v2339 = vsub.f32 %v2330, %v2335
  %v2340 = vsub.f32 %v2331, %v2338
  %v2341 = vmul.f32 %v2339, 1.442695
  %v2342 = vpow.pop %v2341
  %v2343 = vmul.f32 %v2340, 1.442695
  %v2344 = vpow.pop %v2343
  %v2345 = vsel %vm2332, %v2342, 0.0
  %2346 = vadd.xlane.f32.xlu0 %v2345
  %v2347 = vpop.xlane.xlu0 %2346
  %v2348 = vsel %vm2332, %v2344, 0.0
  %2349 = vadd.xlane.f32.xlu0 %v2348
  %v2350 = vpop.xlane.xlu0 %2349
  %v2351 = vlog2.pop %v2347
  %v2352 = vmul.f32 %v2351, 0.6931472
  %v2353 = vlog2.pop %v2350
  %v2354 = vmul.f32 %v2353, 0.6931472
  %v2355 = vadd.f32 %v2335, %v2352
  %v2356 = vadd.f32 %v2338, %v2354
  %v2359 = vlaneseq
  %v2360 = vshrl.u32 %v2359, 7
  %v2361 = vsub.s32 %v2293, %v2360
  %v2362 = vrot.slane %v2355, %v2361
  %v2363 = vlaneseq
  %v2364 = vshrl.u32 %v2363, 7
  %v2365 = vsub.s32 %v2293, %v2364
  %v2366 = vrot.slane %v2356, %v2365
  %vm2367 = vcmask 1041409
  %v2368 = vsel %vm2367, %v2366, %v2362
  %v2370 = vadd.f32 %v2296, %v2368
  %v2371 = vmul.f32 %v2370, %v2088
  %v2372 = vmul.f32 %v2295, %v2095
  %v2373 = vadd.f32 %v2371, %v2372
  %v2374 = vmul.f32 %v2296, %v54
  %vm2375 = vcmask 58368
  %v2376 = vsel %vm2375, %v2374, 0.0
  %2377 = vadd.xlane.f32.xlu0 %v2376
  %v2378 = vpop.xlane.xlu0 %2377
  %v2379 = vadd.f32 %v2378, 0.0
  %v2380 = vrot.slane %v1843, 6
  %v2382 = vmul.f32 %v2290, %v2380
  %v2385 = vunpack.c.l.s4 1966171168
  %v2386 = vunpack.c.0.s8 %v2385
  %v2387 = vlaneseq
  %v2388 = vshrl.u32 %v2387, 7
  %v2389 = vsub.s32 %v2386, %v2388
  %v2390 = vrot.slane %v2373, %v2389
  %v2391 = vcombine.high %v2390, %v2390
  %v2393 = vunpack.c.l.s4 1966171168
  %v2394 = vunpack.c.0.s8 %v2393
  %v2395 = vlaneseq
  %v2396 = vshrl.u32 %v2395, 7
  %v2397 = vsub.s32 %v2394, %v2396
  %v2398 = vrot.slane %v2390, %v2397
  %v2400 = vunpack.c.l.s4 1966171168
  %v2401 = vunpack.c.0.s8 %v2400
  %v2402 = vlaneseq
  %v2403 = vshrl.u32 %v2402, 7
  %v2404 = vsub.s32 %v2401, %v2403
  %v2405 = vrot.slane %v2391, %v2404
  %v2406 = vlaneseq
  %v2407 = vshrl.u32 %v2406, 7
  %v2408 = vsub.s32 0, %v2407
  %v2409 = vrot.slane %v2398, %v2408
  %v2410 = vlaneseq
  %v2411 = vshrl.u32 %v2410, 7
  %v2412 = vsub.s32 0, %v2411
  %v2413 = vrot.slane %v2405, %v2412
  %v2416 = vadd.f32 %v2409, %v45
  %v2417 = vadd.f32 %v2413, %v45
  %v2418 = vsel %vm2332, %v2416, -inf
  %2419 = vmax.xlane.f32.xlu0 %v2418
  %v2420 = vpop.xlane.xlu0 %2419
  %v2421 = vsel %vm2332, %v2417, -inf
  %2422 = vmax.xlane.f32.xlu0 %v2421
  %v2423 = vpop.xlane.xlu0 %2422
  %v2424 = vsub.f32 %v2416, %v2420
  %v2425 = vsub.f32 %v2417, %v2423
  %v2426 = vmul.f32 %v2424, 1.442695
  %v2427 = vpow.pop %v2426
  %v2428 = vmul.f32 %v2425, 1.442695
  %v2429 = vpow.pop %v2428
  %v2430 = vsel %vm2332, %v2427, 0.0
  %2431 = vadd.xlane.f32.xlu0 %v2430
  %v2432 = vpop.xlane.xlu0 %2431
  %v2433 = vsel %vm2332, %v2429, 0.0
  %2434 = vadd.xlane.f32.xlu0 %v2433
  %v2435 = vpop.xlane.xlu0 %2434
  %v2436 = vlog2.pop %v2432
  %v2437 = vmul.f32 %v2436, 0.6931472
  %v2438 = vlog2.pop %v2435
  %v2439 = vmul.f32 %v2438, 0.6931472
  %v2440 = vadd.f32 %v2420, %v2437
  %v2441 = vadd.f32 %v2423, %v2439
  %v2444 = vlaneseq
  %v2445 = vshrl.u32 %v2444, 7
  %v2446 = vsub.s32 %v2293, %v2445
  %v2447 = vrot.slane %v2440, %v2446
  %v2448 = vlaneseq
  %v2449 = vshrl.u32 %v2448, 7
  %v2450 = vsub.s32 %v2293, %v2449
  %v2451 = vrot.slane %v2441, %v2450
  %vm2452 = vcmask 1043459
  %v2453 = vsel %vm2452, %v2451, %v2447
  %v2455 = vadd.f32 %v2382, %v2453
  %v2456 = vmul.f32 %v2455, %v2380
  %v2457 = vmul.f32 %v2373, %v1855
  %v2459 = vrot.slane %v2457, 6
  %v2461 = vadd.f32 %v2456, %v2459
  %v2463 = vrot.slane %v55, 6
  %v2465 = vmul.f32 %v2382, %v2463
  %vm2466 = vcmask 60418
  %v2467 = vsel %vm2466, %v2465, 0.0
  %2468 = vadd.xlane.f32.xlu0 %v2467
  %v2469 = vpop.xlane.xlu0 %2468
  %v2471 = vrot.slane %v2469, 2
  %v2473 = vadd.f32 %v2379, %v2471
  %v2474 = vrot.slane %v1596, 4
  %v2476 = vmul.f32 %v2290, %v2474
  %v2479 = vunpack.c.l.s4 1966171168
  %v2480 = vunpack.c.0.s8 %v2479
  %v2481 = vlaneseq
  %v2482 = vshrl.u32 %v2481, 7
  %v2483 = vsub.s32 %v2480, %v2482
  %v2484 = vrot.slane %v2461, %v2483
  %v2485 = vcombine.high %v2484, %v2484
  %v2487 = vunpack.c.l.s4 1966171168
  %v2488 = vunpack.c.0.s8 %v2487
  %v2489 = vlaneseq
  %v2490 = vshrl.u32 %v2489, 7
  %v2491 = vsub.s32 %v2488, %v2490
  %v2492 = vrot.slane %v2484, %v2491
  %v2494 = vunpack.c.l.s4 1966171168
  %v2495 = vunpack.c.0.s8 %v2494
  %v2496 = vlaneseq
  %v2497 = vshrl.u32 %v2496, 7
  %v2498 = vsub.s32 %v2495, %v2497
  %v2499 = vrot.slane %v2485, %v2498
  %v2500 = vcombine.high %v2492, %v2492
  %v2501 = vcombine.high %v2499, %v2499
  %v2502 = vlaneseq
  %v2503 = vshrl.u32 %v2502, 7
  %v2504 = vsub.s32 0, %v2503
  %v2505 = vrot.slane %v2500, %v2504
  %v2506 = vlaneseq
  %v2507 = vshrl.u32 %v2506, 7
  %v2508 = vsub.s32 0, %v2507
  %v2509 = vrot.slane %v2501, %v2508
  %v2512 = vadd.f32 %v2505, %v45
  %v2513 = vadd.f32 %v2509, %v45
  %v2514 = vsel %vm2332, %v2512, -inf
  %2515 = vmax.xlane.f32.xlu0 %v2514
  %v2516 = vpop.xlane.xlu0 %2515
  %v2517 = vsel %vm2332, %v2513, -inf
  %2518 = vmax.xlane.f32.xlu0 %v2517
  %v2519 = vpop.xlane.xlu0 %2518
  %v2520 = vsub.f32 %v2512, %v2516
  %v2521 = vsub.f32 %v2513, %v2519
  %v2522 = vmul.f32 %v2520, 1.442695
  %v2523 = vpow.pop %v2522
  %v2524 = vmul.f32 %v2521, 1.442695
  %v2525 = vpow.pop %v2524
  %v2526 = vsel %vm2332, %v2523, 0.0
  %2527 = vadd.xlane.f32.xlu0 %v2526
  %v2528 = vpop.xlane.xlu0 %2527
  %v2529 = vsel %vm2332, %v2525, 0.0
  %2530 = vadd.xlane.f32.xlu0 %v2529
  %v2531 = vpop.xlane.xlu0 %2530
  %v2532 = vlog2.pop %v2528
  %v2533 = vmul.f32 %v2532, 0.6931472
  %v2534 = vlog2.pop %v2531
  %v2535 = vmul.f32 %v2534, 0.6931472
  %v2536 = vadd.f32 %v2516, %v2533
  %v2537 = vadd.f32 %v2519, %v2535
  %v2540 = vlaneseq
  %v2541 = vshrl.u32 %v2540, 7
  %v2542 = vsub.s32 %v2293, %v2541
  %v2543 = vrot.slane %v2536, %v2542
  %v2544 = vlaneseq
  %v2545 = vshrl.u32 %v2544, 7
  %v2546 = vsub.s32 %v2293, %v2545
  %v2547 = vrot.slane %v2537, %v2546
  %vm2548 = vcmask 1045509
  %v2549 = vsel %vm2548, %v2547, %v2543
  %v2551 = vadd.f32 %v2476, %v2549
  %v2552 = vmul.f32 %v2551, %v2474
  %v2553 = vrot.slane %v1608, 6
  %v2555 = vmul.f32 %v2461, %v2553
  %v2557 = vrot.slane %v2555, 6
  %v2559 = vadd.f32 %v2552, %v2557
  %v2561 = vrot.slane %v56, 4
  %v2563 = vmul.f32 %v2476, %v2561
  %vm2564 = vcmask 62468
  %v2565 = vsel %vm2564, %v2563, 0.0
  %2566 = vadd.xlane.f32.xlu0 %v2565
  %v2567 = vpop.xlane.xlu0 %2566
  %v2569 = vrot.slane %v2567, 4
  %v2571 = vadd.f32 %v2473, %v2569
  %v2572 = vrot.slane %v1344, 2
  %v2574 = vmul.f32 %v2290, %v2572
  %v2576 = vcombine.high %v2559, %v2559
  %v2578 = vunpack.c.l.s4 1966171168
  %v2579 = vunpack.c.0.s8 %v2578
  %v2580 = vlaneseq
  %v2581 = vshrl.u32 %v2580, 7
  %v2582 = vsub.s32 %v2579, %v2581
  %v2583 = vrot.slane %v2576, %v2582
  %v2584 = vcombine.high %v2583, %v2583
  %v2586 = vunpack.c.l.s4 1966171168
  %v2587 = vunpack.c.0.s8 %v2586
  %v2588 = vlaneseq
  %v2589 = vshrl.u32 %v2588, 7
  %v2590 = vsub.s32 %v2587, %v2589
  %v2591 = vrot.slane %v2583, %v2590
  %v2593 = vunpack.c.l.s4 1966171168
  %v2594 = vunpack.c.0.s8 %v2593
  %v2595 = vlaneseq
  %v2596 = vshrl.u32 %v2595, 7
  %v2597 = vsub.s32 %v2594, %v2596
  %v2598 = vrot.slane %v2584, %v2597
  %v2599 = vlaneseq
  %v2600 = vshrl.u32 %v2599, 7
  %v2601 = vsub.s32 0, %v2600
  %v2602 = vrot.slane %v2591, %v2601
  %v2603 = vlaneseq
  %v2604 = vshrl.u32 %v2603, 7
  %v2605 = vsub.s32 0, %v2604
  %v2606 = vrot.slane %v2598, %v2605
  %v2609 = vadd.f32 %v2602, %v45
  %v2610 = vadd.f32 %v2606, %v45
  %v2611 = vsel %vm2332, %v2609, -inf
  %2612 = vmax.xlane.f32.xlu0 %v2611
  %v2613 = vpop.xlane.xlu0 %2612
  %v2614 = vsel %vm2332, %v2610, -inf
  %2615 = vmax.xlane.f32.xlu0 %v2614
  %v2616 = vpop.xlane.xlu0 %2615
  %v2617 = vsub.f32 %v2609, %v2613
  %v2618 = vsub.f32 %v2610, %v2616
  %v2619 = vmul.f32 %v2617, 1.442695
  %v2620 = vpow.pop %v2619
  %v2621 = vmul.f32 %v2618, 1.442695
  %v2622 = vpow.pop %v2621
  %v2623 = vsel %vm2332, %v2620, 0.0
  %2624 = vadd.xlane.f32.xlu0 %v2623
  %v2625 = vpop.xlane.xlu0 %2624
  %v2626 = vsel %vm2332, %v2622, 0.0
  %2627 = vadd.xlane.f32.xlu0 %v2626
  %v2628 = vpop.xlane.xlu0 %2627
  %v2629 = vlog2.pop %v2625
  %v2630 = vmul.f32 %v2629, 0.6931472
  %v2631 = vlog2.pop %v2628
  %v2632 = vmul.f32 %v2631, 0.6931472
  %v2633 = vadd.f32 %v2613, %v2630
  %v2634 = vadd.f32 %v2616, %v2632
  %v2637 = vlaneseq
  %v2638 = vshrl.u32 %v2637, 7
  %v2639 = vsub.s32 %v2293, %v2638
  %v2640 = vrot.slane %v2633, %v2639
  %v2641 = vlaneseq
  %v2642 = vshrl.u32 %v2641, 7
  %v2643 = vsub.s32 %v2293, %v2642
  %v2644 = vrot.slane %v2634, %v2643
  %vm2645 = vcmask 1047559
  %v2646 = vsel %vm2645, %v2644, %v2640
  %v2648 = vadd.f32 %v2574, %v2646
  %v2649 = vmul.f32 %v2648, %v2572
  %v2650 = vrot.slane %v1356, 4
  %v2652 = vmul.f32 %v2559, %v2650
  %v2654 = vrot.slane %v2652, 6
  %v2656 = vadd.f32 %v2649, %v2654
  %v2658 = vrot.slane %v57, 2
  %v2660 = vmul.f32 %v2574, %v2658
  %vm2661 = vcmask 64518
  %v2662 = vsel %vm2661, %v2660, 0.0
  %2663 = vadd.xlane.f32.xlu0 %v2662
  %v2664 = vpop.xlane.xlu0 %2663
  %v2666 = vrot.slane %v2664, 6
  %v2668 = vadd.f32 %v2571, %v2666
  %v2669 = vmul.f32 %v2291, %v1100
  %v2671 = vcombine.high %v2656, %v2656
  %v2673 = vunpack.c.l.s4 1966171168
  %v2674 = vunpack.c.0.s8 %v2673
  %v2675 = vlaneseq
  %v2676 = vshrl.u32 %v2675, 7
  %v2677 = vsub.s32 %v2674, %v2676
  %v2678 = vrot.slane %v2671, %v2677
  %v2679 = vcombine.high %v2678, %v2678
  %v2681 = vunpack.c.l.s4 1966171168
  %v2682 = vunpack.c.0.s8 %v2681
  %v2683 = vlaneseq
  %v2684 = vshrl.u32 %v2683, 7
  %v2685 = vsub.s32 %v2682, %v2684
  %v2686 = vrot.slane %v2678, %v2685
  %v2688 = vunpack.c.l.s4 1966171168
  %v2689 = vunpack.c.0.s8 %v2688
  %v2690 = vlaneseq
  %v2691 = vshrl.u32 %v2690, 7
  %v2692 = vsub.s32 %v2689, %v2691
  %v2693 = vrot.slane %v2679, %v2692
  %v2694 = vcombine.high %v2686, %v2686
  %v2695 = vcombine.high %v2693, %v2693
  %v2696 = vlaneseq
  %v2697 = vshrl.u32 %v2696, 7
  %v2698 = vsub.s32 0, %v2697
  %v2699 = vrot.slane %v2694, %v2698
  %v2700 = vlaneseq
  %v2701 = vshrl.u32 %v2700, 7
  %v2702 = vsub.s32 0, %v2701
  %v2703 = vrot.slane %v2695, %v2702
  %v2706 = vadd.f32 %v2699, %v45
  %v2707 = vadd.f32 %v2703, %v45
  %v2708 = vsel %vm2332, %v2706, -inf
  %2709 = vmax.xlane.f32.xlu0 %v2708
  %v2710 = vpop.xlane.xlu0 %2709
  %v2711 = vsel %vm2332, %v2707, -inf
  %2712 = vmax.xlane.f32.xlu0 %v2711
  %v2713 = vpop.xlane.xlu0 %2712
  %v2714 = vsub.f32 %v2706, %v2710
  %v2715 = vsub.f32 %v2707, %v2713
  %v2716 = vmul.f32 %v2714, 1.442695
  %v2717 = vpow.pop %v2716
  %v2718 = vmul.f32 %v2715, 1.442695
  %v2719 = vpow.pop %v2718
  %v2720 = vsel %vm2332, %v2717, 0.0
  %2721 = vadd.xlane.f32.xlu0 %v2720
  %v2722 = vpop.xlane.xlu0 %2721
  %v2723 = vsel %vm2332, %v2719, 0.0
  %2724 = vadd.xlane.f32.xlu0 %v2723
  %v2725 = vpop.xlane.xlu0 %2724
  %v2726 = vlog2.pop %v2722
  %v2727 = vmul.f32 %v2726, 0.6931472
  %v2728 = vlog2.pop %v2725
  %v2729 = vmul.f32 %v2728, 0.6931472
  %v2730 = vadd.f32 %v2710, %v2727
  %v2731 = vadd.f32 %v2713, %v2729
  %v2734 = vlaneseq
  %v2735 = vshrl.u32 %v2734, 7
  %v2736 = vsub.s32 %v2293, %v2735
  %v2737 = vrot.slane %v2730, %v2736
  %v2738 = vlaneseq
  %v2739 = vshrl.u32 %v2738, 7
  %v2740 = vsub.s32 %v2293, %v2739
  %v2741 = vrot.slane %v2731, %v2740
  %v2742 = vsel %vm2367, %v2741, %v2737
  %v2744 = vadd.f32 %v2669, %v2742
  %v2745 = vmul.f32 %v2744, %v1100
  %v2746 = vrot.slane %v1107, 2
  %v2748 = vmul.f32 %v2656, %v2746
  %v2750 = vrot.slane %v2748, 6
  %v2752 = vadd.f32 %v2745, %v2750
  %v2753 = vmul.f32 %v2669, %v58
  %v2754 = vsel %vm2375, %v2753, 0.0
  %2755 = vadd.xlane.f32.xlu0 %v2754
  %v2756 = vpop.xlane.xlu0 %2755
  %v2757 = vadd.f32 %v2668, %v2756
  %v2758 = vrot.slane %v854, 6
  %v2760 = vmul.f32 %v2291, %v2758
  %v2763 = vunpack.c.l.s4 1966171168
  %v2764 = vunpack.c.0.s8 %v2763
  %v2765 = vlaneseq
  %v2766 = vshrl.u32 %v2765, 7
  %v2767 = vsub.s32 %v2764, %v2766
  %v2768 = vrot.slane %v2752, %v2767
  %v2769 = vcombine.high %v2768, %v2768
  %v2771 = vunpack.c.l.s4 1966171168
  %v2772 = vunpack.c.0.s8 %v2771
  %v2773 = vlaneseq
  %v2774 = vshrl.u32 %v2773, 7
  %v2775 = vsub.s32 %v2772, %v2774
  %v2776 = vrot.slane %v2768, %v2775
  %v2778 = vunpack.c.l.s4 1966171168
  %v2779 = vunpack.c.0.s8 %v2778
  %v2780 = vlaneseq
  %v2781 = vshrl.u32 %v2780, 7
  %v2782 = vsub.s32 %v2779, %v2781
  %v2783 = vrot.slane %v2769, %v2782
  %v2784 = vlaneseq
  %v2785 = vshrl.u32 %v2784, 7
  %v2786 = vsub.s32 0, %v2785
  %v2787 = vrot.slane %v2776, %v2786
  %v2788 = vlaneseq
  %v2789 = vshrl.u32 %v2788, 7
  %v2790 = vsub.s32 0, %v2789
  %v2791 = vrot.slane %v2783, %v2790
  %v2794 = vadd.f32 %v2787, %v45
  %v2795 = vadd.f32 %v2791, %v45
  %v2796 = vsel %vm2332, %v2794, -inf
  %2797 = vmax.xlane.f32.xlu0 %v2796
  %v2798 = vpop.xlane.xlu0 %2797
  %v2799 = vsel %vm2332, %v2795, -inf
  %2800 = vmax.xlane.f32.xlu0 %v2799
  %v2801 = vpop.xlane.xlu0 %2800
  %v2802 = vsub.f32 %v2794, %v2798
  %v2803 = vsub.f32 %v2795, %v2801
  %v2804 = vmul.f32 %v2802, 1.442695
  %v2805 = vpow.pop %v2804
  %v2806 = vmul.f32 %v2803, 1.442695
  %v2807 = vpow.pop %v2806
  %v2808 = vsel %vm2332, %v2805, 0.0
  %2809 = vadd.xlane.f32.xlu0 %v2808
  %v2810 = vpop.xlane.xlu0 %2809
  %v2811 = vsel %vm2332, %v2807, 0.0
  %2812 = vadd.xlane.f32.xlu0 %v2811
  %v2813 = vpop.xlane.xlu0 %2812
  %v2814 = vlog2.pop %v2810
  %v2815 = vmul.f32 %v2814, 0.6931472
  %v2816 = vlog2.pop %v2813
  %v2817 = vmul.f32 %v2816, 0.6931472
  %v2818 = vadd.f32 %v2798, %v2815
  %v2819 = vadd.f32 %v2801, %v2817
  %v2822 = vlaneseq
  %v2823 = vshrl.u32 %v2822, 7
  %v2824 = vsub.s32 %v2293, %v2823
  %v2825 = vrot.slane %v2818, %v2824
  %v2826 = vlaneseq
  %v2827 = vshrl.u32 %v2826, 7
  %v2828 = vsub.s32 %v2293, %v2827
  %v2829 = vrot.slane %v2819, %v2828
  %v2830 = vsel %vm2452, %v2829, %v2825
  %v2832 = vadd.f32 %v2760, %v2830
  %v2833 = vmul.f32 %v2832, %v2758
  %v2834 = vmul.f32 %v2752, %v866
  %v2836 = vrot.slane %v2834, 6
  %v2838 = vadd.f32 %v2833, %v2836
  %v2840 = vrot.slane %v59, 6
  %v2842 = vmul.f32 %v2760, %v2840
  %v2843 = vsel %vm2466, %v2842, 0.0
  %2844 = vadd.xlane.f32.xlu0 %v2843
  %v2845 = vpop.xlane.xlu0 %2844
  %v2847 = vrot.slane %v2845, 2
  %v2849 = vadd.f32 %v2757, %v2847
  %v2850 = vrot.slane %v606, 4
  %v2852 = vmul.f32 %v2291, %v2850
  %v2855 = vunpack.c.l.s4 1966171168
  %v2856 = vunpack.c.0.s8 %v2855
  %v2857 = vlaneseq
  %v2858 = vshrl.u32 %v2857, 7
  %v2859 = vsub.s32 %v2856, %v2858
  %v2860 = vrot.slane %v2838, %v2859
  %v2861 = vcombine.high %v2860, %v2860
  %v2863 = vunpack.c.l.s4 1966171168
  %v2864 = vunpack.c.0.s8 %v2863
  %v2865 = vlaneseq
  %v2866 = vshrl.u32 %v2865, 7
  %v2867 = vsub.s32 %v2864, %v2866
  %v2868 = vrot.slane %v2860, %v2867
  %v2870 = vunpack.c.l.s4 1966171168
  %v2871 = vunpack.c.0.s8 %v2870
  %v2872 = vlaneseq
  %v2873 = vshrl.u32 %v2872, 7
  %v2874 = vsub.s32 %v2871, %v2873
  %v2875 = vrot.slane %v2861, %v2874
  %v2876 = vcombine.high %v2868, %v2868
  %v2877 = vcombine.high %v2875, %v2875
  %v2878 = vlaneseq
  %v2879 = vshrl.u32 %v2878, 7
  %v2880 = vsub.s32 0, %v2879
  %v2881 = vrot.slane %v2876, %v2880
  %v2882 = vlaneseq
  %v2883 = vshrl.u32 %v2882, 7
  %v2884 = vsub.s32 0, %v2883
  %v2885 = vrot.slane %v2877, %v2884
  %v2888 = vadd.f32 %v2881, %v45
  %v2889 = vadd.f32 %v2885, %v45
  %v2890 = vsel %vm2332, %v2888, -inf
  %2891 = vmax.xlane.f32.xlu0 %v2890
  %v2892 = vpop.xlane.xlu0 %2891
  %v2893 = vsel %vm2332, %v2889, -inf
  %2894 = vmax.xlane.f32.xlu0 %v2893
  %v2895 = vpop.xlane.xlu0 %2894
  %v2896 = vsub.f32 %v2888, %v2892
  %v2897 = vsub.f32 %v2889, %v2895
  %v2898 = vmul.f32 %v2896, 1.442695
  %v2899 = vpow.pop %v2898
  %v2900 = vmul.f32 %v2897, 1.442695
  %v2901 = vpow.pop %v2900
  %v2902 = vsel %vm2332, %v2899, 0.0
  %2903 = vadd.xlane.f32.xlu0 %v2902
  %v2904 = vpop.xlane.xlu0 %2903
  %v2905 = vsel %vm2332, %v2901, 0.0
  %2906 = vadd.xlane.f32.xlu0 %v2905
  %v2907 = vpop.xlane.xlu0 %2906
  %v2908 = vlog2.pop %v2904
  %v2909 = vmul.f32 %v2908, 0.6931472
  %v2910 = vlog2.pop %v2907
  %v2911 = vmul.f32 %v2910, 0.6931472
  %v2912 = vadd.f32 %v2892, %v2909
  %v2913 = vadd.f32 %v2895, %v2911
  %v2916 = vlaneseq
  %v2917 = vshrl.u32 %v2916, 7
  %v2918 = vsub.s32 %v2293, %v2917
  %v2919 = vrot.slane %v2912, %v2918
  %v2920 = vlaneseq
  %v2921 = vshrl.u32 %v2920, 7
  %v2922 = vsub.s32 %v2293, %v2921
  %v2923 = vrot.slane %v2913, %v2922
  %v2924 = vsel %vm2548, %v2923, %v2919
  %v2926 = vadd.f32 %v2852, %v2924
  %v2927 = vmul.f32 %v2926, %v2850
  %v2928 = vrot.slane %v618, 6
  %v2930 = vmul.f32 %v2838, %v2928
  %v2932 = vrot.slane %v2930, 6
  %v2934 = vadd.f32 %v2927, %v2932
  %v2936 = vrot.slane %v60, 4
  %v2938 = vmul.f32 %v2852, %v2936
  %v2939 = vsel %vm2564, %v2938, 0.0
  %2940 = vadd.xlane.f32.xlu0 %v2939
  %v2941 = vpop.xlane.xlu0 %2940
  %v2943 = vrot.slane %v2941, 4
  %v2945 = vadd.f32 %v2849, %v2943
  %v2946 = vrot.slane %v362, 2
  %v2948 = vmul.f32 %v2291, %v2946
  %v2950 = vcombine.high %v2934, %v2934
  %v2952 = vunpack.c.l.s4 1966171168
  %v2953 = vunpack.c.0.s8 %v2952
  %v2954 = vlaneseq
  %v2955 = vshrl.u32 %v2954, 7
  %v2956 = vsub.s32 %v2953, %v2955
  %v2957 = vrot.slane %v2950, %v2956
  %v2958 = vcombine.high %v2957, %v2957
  %v2960 = vunpack.c.l.s4 1966171168
  %v2961 = vunpack.c.0.s8 %v2960
  %v2962 = vlaneseq
  %v2963 = vshrl.u32 %v2962, 7
  %v2964 = vsub.s32 %v2961, %v2963
  %v2965 = vrot.slane %v2957, %v2964
  %v2967 = vunpack.c.l.s4 1966171168
  %v2968 = vunpack.c.0.s8 %v2967
  %v2969 = vlaneseq
  %v2970 = vshrl.u32 %v2969, 7
  %v2971 = vsub.s32 %v2968, %v2970
  %v2972 = vrot.slane %v2958, %v2971
  %v2973 = vlaneseq
  %v2974 = vshrl.u32 %v2973, 7
  %v2975 = vsub.s32 0, %v2974
  %v2976 = vrot.slane %v2965, %v2975
  %v2977 = vlaneseq
  %v2978 = vshrl.u32 %v2977, 7
  %v2979 = vsub.s32 0, %v2978
  %v2980 = vrot.slane %v2972, %v2979
  %v2983 = vadd.f32 %v2976, %v45
  %v2984 = vadd.f32 %v2980, %v45
  %v2985 = vsel %vm2332, %v2983, -inf
  %2986 = vmax.xlane.f32.xlu0 %v2985
  %v2987 = vpop.xlane.xlu0 %2986
  %v2988 = vsel %vm2332, %v2984, -inf
  %2989 = vmax.xlane.f32.xlu0 %v2988
  %v2990 = vpop.xlane.xlu0 %2989
  %v2991 = vsub.f32 %v2983, %v2987
  %v2992 = vsub.f32 %v2984, %v2990
  %v2993 = vmul.f32 %v2991, 1.442695
  %v2994 = vpow.pop %v2993
  %v2995 = vmul.f32 %v2992, 1.442695
  %v2996 = vpow.pop %v2995
  %v2997 = vsel %vm2332, %v2994, 0.0
  %2998 = vadd.xlane.f32.xlu0 %v2997
  %v2999 = vpop.xlane.xlu0 %2998
  %v3000 = vsel %vm2332, %v2996, 0.0
  %3001 = vadd.xlane.f32.xlu0 %v3000
  %v3002 = vpop.xlane.xlu0 %3001
  %v3003 = vlog2.pop %v2999
  %v3004 = vmul.f32 %v3003, 0.6931472
  %v3005 = vlog2.pop %v3002
  %v3006 = vmul.f32 %v3005, 0.6931472
  %v3007 = vadd.f32 %v2987, %v3004
  %v3008 = vadd.f32 %v2990, %v3006
  %v3011 = vlaneseq
  %v3012 = vshrl.u32 %v3011, 7
  %v3013 = vsub.s32 %v2293, %v3012
  %v3014 = vrot.slane %v3007, %v3013
  %v3015 = vlaneseq
  %v3016 = vshrl.u32 %v3015, 7
  %v3017 = vsub.s32 %v2293, %v3016
  %v3018 = vrot.slane %v3008, %v3017
  %v3019 = vsel %vm2645, %v3018, %v3014
  %v3021 = vadd.f32 %v2948, %v3019
  %v3022 = vmul.f32 %v3021, %v2946
  %v3023 = vrot.slane %v374, 4
  %v3025 = vmul.f32 %v2934, %v3023
  %v3027 = vrot.slane %v3025, 6
  %v3029 = vadd.f32 %v3022, %v3027
  %v3031 = vrot.slane %v61, 2
  %v3033 = vmul.f32 %v2948, %v3031
  %v3034 = vsel %vm2661, %v3033, 0.0
  %3035 = vadd.xlane.f32.xlu0 %v3034
  %v3036 = vpop.xlane.xlu0 %3035
  %v3038 = vrot.slane %v3036, 6
  %v3040 = vadd.f32 %v2945, %v3038
  %v3041 = vsel %vm2661, %v3029, -inf
  %3042 = vmax.xlane.f32.xlu0 %v3041
  %v3043 = vpop.xlane.xlu0 %3042
  %v3044 = vsub.f32 %v3029, %v3043
  %v3045 = vmul.f32 %v3044, 1.442695
  %v3046 = vpow.pop %v3045
  %v3047 = vsel %vm2661, %v3046, 0.0
  %3048 = vadd.xlane.f32.xlu0 %v3047
  %v3049 = vpop.xlane.xlu0 %3048
  %v3050 = vlog2.pop %v3049
  %v3051 = vmul.f32 %v3050, 0.6931472
  %v3052 = vadd.f32 %v3043, %v3051
  %v3054 = vrot.slane %v3040, 2
  %v3056 = vsub.f32 %v3052, %v3054
  %v3057 = vld [vmem:[%s11] sm:$0x3]
  %v3059 = vrot.slane %v3057, 2
  %v3061 = vsub.f32 %v3056, %v3059
  %vm3062 = vcmask 7174
  %3063 = vst.msk [vmem:[%s12 - $0x6] sm:$0xc0] %vm3062, %v3061
  // Predicated region
  $region50: #{lstm_crf_forward.1} parent=0 // pred_check
    _
  $region51: #{lstm_crf_forward.1} parent=0 // pred_check_branch
    %3065 = sbr.rel (0) target = $region53
  $region52: #{lstm_crf_forward.1} parent=0 // pred_region
    _
  $region53: #{lstm_crf_forward.1} parent=0 // pred_fallthru
    _
  // Predicated region
  $region54: #{lstm_crf_forward.1} parent=0 // pred_check
    _
  $region55: #{lstm_crf_forward.1} parent=0 // pred_check_branch
    %3067 = sbr.rel (0) target = $region57
  $region56: #{lstm_crf_forward.1} parent=0 // pred_region
    _
  $region57: #{lstm_crf_forward.1} parent=0 // pred_fallthru
    _

</llo_original>
